<compile_context>
chip_gen: v5e
topology: v5e:2x2
jax: 0.10.0
libtpu: 0.0.40
codegen_flags: <defaults>
</compile_context>

<pallas_src>
import numpy as np
import jax
import jax.numpy as jnp
from jax import lax
from jax.experimental import pallas as pl
from jax.experimental.pallas import tpu as pltpu

PS = 3          # patch_size
RATE = 1        # rate (only rate == 1 implemented; it is the module default)
FS = 3          # fuse_kernel_size
SS = 10.0       # softmax_scale
FUSE = True
EPS = 1e-4


def calc_padding(k, d=1):
    # "same" padding, mirrors tl.calc_padding(ps, 1)
    return ((k - 1) * d) // 2


def _round_up(x, m):
    return (x + m - 1) // m * m


# ---------------------------------------------------------------------------
# Pallas kernel (one batch element per grid step)
# ---------------------------------------------------------------------------
def _make_kernel(hr, wr, fs, fuse, ss, eps):
    n = hr * wr
    fuse_pad = calc_padding(fs)

    def _pull(x, d, axis):
        """out[.., i, ..] = x[.., i + d, ..] along `axis`, zero-filled OOB (static d)."""
        if d == 0:
            return x
        size = x.shape[axis]
        if abs(d) >= size:
            return jnp.zeros_like(x)
        zshape = list(x.shape)
        zshape[axis] = abs(d)
        zeros = jnp.zeros(zshape, x.dtype)
        if d > 0:
            body = lax.slice_in_dim(x, d, size, axis=axis)
            return lax.concatenate([body, zeros], dimension=axis)
        body = lax.slice_in_dim(x, 0, size + d, axis=axis)
        return lax.concatenate([zeros, body], dimension=axis)

    def _diag_fuse(x):
        """conv2d(x, eye(fs), padding=fuse_pad) on the (n, n) score "image" as shift-adds."""
        acc = None
        for e in range(fs):
            d = e - fuse_pad
            t = _pull(_pull(x, d, 0), d, 1)
            acc = t if acc is None else acc + t
        return acc

    def _sigma_shift(x, sign, axis, idx):
        """Pull from sigma-index +/- 1 along `axis`, sigma: (py*wr+px) -> (px*hr+py).

        This is the flat-index +/-1 shift of the permuted (x-major) score image,
        expressed directly on the y-major data (no permutation matmul needed)."""
        if sign > 0:
            main = _pull(x, wr, axis)                      # py < hr-1  -> i + wr
            wrap = _pull(x, -((hr - 1) * wr - 1), axis)    # py == hr-1 -> i - (hr-1)*wr + 1
            return jnp.where(idx < (hr - 1) * wr, main,
                             jnp.where(idx == n - 1, 0.0, wrap))
        main = _pull(x, -wr, axis)                         # py > 0 -> i - wr
        wrap = _pull(x, (hr - 1) * wr - 1, axis)           # py == 0 -> i + (hr-1)*wr - 1
        return jnp.where(idx >= wr, main,
                         jnp.where(idx == 0, 0.0, wrap))

    def _sigma_fuse(x, row_idx, col_idx):
        """The same eye(3) fuse applied in the hr/wr-transposed index space.

        Replaces  Pm^T @ diag_fuse(Pm @ x @ Pm^T) @ Pm  (4 N^3 matmuls)."""
        plus = _sigma_shift(_sigma_shift(x, +1, 1, col_idx), +1, 0, row_idx)
        minus = _sigma_shift(_sigma_shift(x, -1, 1, col_idx), -1, 0, row_idx)
        return x + plus + minus

    def kernel(fp_ref, bs_ref, biT_ref, mi_ref, v_ref):
        f32 = jnp.float32
        fp = fp_ref[0]        # (N, CKP)  foreground patches, rows = positions
        bsr = bs_ref[0]       # (N, CKP)  background patches, rows = patches
        mi = mi_ref[0]        # (1, N)    per-patch validity (lane-dense)

        # L2-normalize background patches: rsqrt on the clamped sum of squares (EUP).
        # max(sqrt(s), eps) == sqrt(max(s, eps^2)) for s >= 0.
        inv = lax.rsqrt(jnp.maximum(jnp.sum(bsr * bsr, axis=1, keepdims=True), eps * eps))
        bsn = bsr * inv

        # Cosine-similarity scores, transposed layout: S[pos, patch]
        # (thin-K matmul; kept in f32 since it feeds exp(10*x)).
        s = lax.dot_general(fp, bsn, (((1,), (1,)), ((), ())),
                            preferred_element_type=f32)

        if fuse:
            row_idx = lax.broadcasted_iota(jnp.int32, (n, n), 0)
            col_idx = lax.broadcasted_iota(jnp.int32, (n, n), 1)
            s = _diag_fuse(s)                    # fuse conv in the original index space
            s = _sigma_fuse(s, row_idx, col_idx) # fuse conv in the permuted index space

        # mask (patches are lanes) with the softmax scale folded in,
        # softmax over the patch (lane) axis, mask again.
        s = s * (mi * ss)
        m = jnp.max(s, axis=-1, keepdims=True)
        e = jnp.exp(s - m)
        denom = jnp.sum(e, axis=-1, keepdims=True)
        a = e * pl.reciprocal(denom, approx=True)
        a = a * mi

        # Reconstruction: V[ck, pos] = biT @ A^T  (lane-dense output, bf16 MXU operands;
        # A is a probability matrix so bf16 operands are numerically safe).
        v_ref[0] = lax.dot_general(
            biT_ref[0].astype(jnp.bfloat16), a.astype(jnp.bfloat16),
            (((1,), (1,)), ((), ())), preferred_element_type=f32)

    return kernel


# ---------------------------------------------------------------------------
# JAX glue
# ---------------------------------------------------------------------------
def _extract_patches(x, ps, mode):
    """x: (B, C, H, W) -> (B, C*ps*ps, H*W); channel-major, then (ky, kx),
    positions row-major -- identical ordering to F.unfold."""
    B, C, H, W = x.shape
    pad = calc_padding(ps)
    pad_mode = "edge" if mode == "replicate" else "constant"
    xp = jnp.pad(x, ((0, 0), (0, 0), (pad, pad), (pad, pad)), mode=pad_mode)
    cols = []
    for ky in range(ps):
        for kx in range(ps):
            cols.append(xp[:, :, ky:ky + H, kx:kx + W])
    p = jnp.stack(cols, axis=2)                       # (B, C, ps*ps, H, W)
    return p.reshape(B, C * ps * ps, H * W)


def _prepare(f_o, b_o, mask_o):
    B, c, h, w = f_o.shape
    hr, wr = h, w                                     # rate == 1
    bg = _extract_patches(b_o.astype(jnp.float32), PS, "replicate")   # (B, CK, N)
    fg = _extract_patches(f_o.astype(jnp.float32), PS, "zero")        # (B, CK, N)
    if mask_o is None:
        mask = jnp.zeros((B, 1, hr, wr), jnp.float32)
    else:
        mask = mask_o.astype(jnp.float32)
    mp = _extract_patches(mask, PS, "zero")           # (B, ps*ps, N)
    mi = (jnp.mean(mp, axis=1) == 0.0).astype(jnp.float32)            # (B, N)
    return fg, bg, mi, (B, c, hr, wr)


def _fold(V, B, c, hr, wr):
    """Overlap-add fold == conv_transpose2d(score, bi, stride=1, padding=pad) / 4."""
    pad = calc_padding(PS)
    V5 = V.reshape(B, c, PS, PS, hr, wr)
    acc = jnp.zeros((B, c, hr + 2 * pad, wr + 2 * pad), jnp.float32)
    for ky in range(PS):
        for kx in range(PS):
            acc = acc.at[:, :, ky:ky + hr, kx:kx + wr].add(V5[:, :, ky, kx])
    out = acc[:, :, pad:pad + hr, pad:pad + wr] / 4.0
    if out.shape[2] % 2 == 1:
        out = jnp.pad(out, ((0, 0), (0, 0), (0, 1), (0, 1)), mode="edge")
    return out


def _reference_v(fg, bg, mi, hr, wr):
    """Pure-JAX reference for the kernel math (explicit Pm / D matmuls)."""
    N = hr * wr
    fuse_pad = calc_padding(FS)
    px, py = np.meshgrid(np.arange(wr), np.arange(hr), indexing="ij")
    a_idx = (px * hr + py).reshape(-1)
    b_idx = (py * wr + px).reshape(-1)
    Pm_np = np.zeros((N, N), np.float32)
    Pm_np[a_idx, b_idx] = 1.0
    Pm = jnp.asarray(Pm_np)
    D = jnp.stack([jnp.eye(N, N, k=e - fuse_pad, dtype=jnp.float32) for e in range(FS)])

    def one(fpT_b, bg_b, mi_b):
        bs_b = bg_b.T                                  # (N, CK)
        norm = jnp.maximum(jnp.sqrt(jnp.sum(bs_b * bs_b, axis=1, keepdims=True)), EPS)
        bsn = bs_b / norm
        S = bsn @ fpT_b                                # (N_patch, N_pos)
        if FUSE:
            def dfuse(X):
                acc = jnp.zeros_like(X)
                for e in range(FS):
                    acc = acc + D[e] @ X @ D[e].T
                return acc
            S = dfuse(S)
            S = Pm @ S @ Pm.T
            S = dfuse(S)
            S = Pm.T @ S @ Pm
        S = S * mi_b
        A = jax.nn.softmax(S * SS, axis=0)
        A = A * mi_b
        return bg_b @ A                                # (CK, N)
    return jax.vmap(one)(fg, bg, mi[..., None])


def contextual_attention(f_o, b_o, mask_o=None, use_pallas=True):
    assert RATE == 1   # TODO(synk): rate != 1 (nearest resize + strided unfold) not implemented
    assert (not FUSE) or FS == 3  # TODO(synk): sigma-space fuse only derived for fuse_kernel_size == 3
    fg, bg, mi, (B, c, hr, wr) = _prepare(f_o, b_o, mask_o)
    N = hr * wr
    CK = c * PS * PS

    if not use_pallas:
        with jax.default_matmul_precision("float32"):
            V = _reference_v(fg, bg, mi, hr, wr)
        return _fold(V, B, c, hr, wr)

    # Pad CK to a multiple of 8 for a clean sublane layout (zeros don't affect results).
    CKP = _round_up(CK, 8)
    pad_ck = CKP - CK
    fp = jnp.pad(jnp.transpose(fg, (0, 2, 1)), ((0, 0), (0, 0), (0, pad_ck)))   # (B, N, CKP)
    bs = jnp.pad(jnp.transpose(bg, (0, 2, 1)), ((0, 0), (0, 0), (0, pad_ck)))   # (B, N, CKP)
    biT = jnp.pad(bg, ((0, 0), (0, pad_ck), (0, 0)))                            # (B, CKP, N)
    mi_row = mi[:, None, :]                                                     # (B, 1, N)

    kernel = _make_kernel(hr, wr, FS, FUSE, SS, EPS)
    # TODO(synk): for very large feature maps (N > ~2k) add a second grid axis tiling the
    #             position (row) dimension of the score/softmax/recon stage (needs a halo
    #             for the fuse shifts) so both v7x TensorCores are busy at small B.
    V = pl.pallas_call(
        kernel,
        out_shape=jax.ShapeDtypeStruct((B, CKP, N), jnp.float32),
        grid_spec=pltpu.PrefetchScalarGridSpec(
            num_scalar_prefetch=0,
            grid=(B,),
            in_specs=[
                pl.BlockSpec((1, N, CKP), lambda b: (b, 0, 0)),   # fp
                pl.BlockSpec((1, N, CKP), lambda b: (b, 0, 0)),   # bs
                pl.BlockSpec((1, CKP, N), lambda b: (b, 0, 0)),   # biT
                pl.BlockSpec((1, 1, N), lambda b: (b, 0, 0)),     # mi (lane-dense)
            ],
            out_specs=pl.BlockSpec((1, CKP, N), lambda b: (b, 0, 0)),
        ),
        compiler_params=pltpu.CompilerParams(
            dimension_semantics=("parallel",),
            vmem_limit_bytes=64 * 1024 * 1024),
    )(fp, bs, biT, mi_row)

    return _fold(V[:, :CK, :], B, c, hr, wr)


if __name__ == "__main__":
    key = jax.random.PRNGKey(0)
    k1, k2 = jax.random.split(key)
    B, c, h, w = 2, 4, 16, 16
    f_o = jax.random.normal(k1, (B, c, h, w), jnp.float32)
    b_o = jax.random.normal(k2, (B, c, h, w), jnp.float32)

    # unmasked
    out = jax.block_until_ready(contextual_attention(f_o, b_o, None, use_pallas=True))
    ref = jax.block_until_ready(contextual_attention(f_o, b_o, None, use_pallas=False))
    np.testing.assert_allclose(np.asarray(out), np.asarray(ref), rtol=2e-2, atol=2e-2)
    assert out.shape == (B, c, h, w)

    # masked (exercises the per-patch validity mask path)
    mask = jnp.zeros((B, 1, h, w), jnp.float32).at[:, :, 4:10, 5:12].set(1.0)
    out_m = jax.block_until_ready(contextual_attention(f_o, b_o, mask, use_pallas=True))
    ref_m = jax.block_until_ready(contextual_attention(f_o, b_o, mask, use_pallas=False))
    np.testing.assert_allclose(np.asarray(out_m), np.asarray(ref_m), rtol=2e-2, atol=2e-2)

    print("KERNEL_OK")
</pallas_src>

<mosaic_0001>
module attributes {stable_mosaic.version = 11 : i64} {
  func.func @kernel(%arg0: i32, %arg1: memref<1x256x40xf32, #tpu.memory_space<vmem>>, %arg2: memref<1x256x40xf32, #tpu.memory_space<vmem>>, %arg3: memref<1x40x256xf32, #tpu.memory_space<vmem>>, %arg4: memref<1x1x256xf32, #tpu.memory_space<vmem>>, %arg5: memref<1x40x256xf32, #tpu.memory_space<vmem>>) attributes {dimension_semantics = [#tpu.dimension_semantics<parallel>], iteration_bounds = array<i64: 2>, scalar_prefetch = 0 : i64, scratch_operands = 0 : i64, tpu.core_type = #tpu.core_type<tc>, window_params = [{transform_indices = @transform_0, window_bounds = array<i64: 1, 256, 40>}, {transform_indices = @transform_1, window_bounds = array<i64: 1, 256, 40>}, {transform_indices = @transform_2, window_bounds = array<i64: 1, 40, 256>}, {transform_indices = @transform_3, window_bounds = array<i64: 1, 1, 256>}, {transform_indices = @transform_4, window_bounds = array<i64: 1, 40, 256>}]} {
    %c0 = arith.constant 0 : index
    %c0_0 = arith.constant 0 : index
    %c0_1 = arith.constant 0 : index
    %0 = vector.load %arg1[%c0, %c0_0, %c0_1] : memref<1x256x40xf32, #tpu.memory_space<vmem>>, vector<1x256x40xf32>
    %1 = vector.shape_cast %0 : vector<1x256x40xf32> to vector<256x40xf32>
    %c0_2 = arith.constant 0 : index
    %c0_3 = arith.constant 0 : index
    %c0_4 = arith.constant 0 : index
    %2 = vector.load %arg2[%c0_2, %c0_3, %c0_4] : memref<1x256x40xf32, #tpu.memory_space<vmem>>, vector<1x256x40xf32>
    %3 = vector.shape_cast %2 : vector<1x256x40xf32> to vector<256x40xf32>
    %c0_5 = arith.constant 0 : index
    %c0_6 = arith.constant 0 : index
    %c0_7 = arith.constant 0 : index
    %4 = vector.load %arg4[%c0_5, %c0_6, %c0_7] : memref<1x1x256xf32, #tpu.memory_space<vmem>>, vector<1x1x256xf32>
    %5 = vector.shape_cast %4 : vector<1x1x256xf32> to vector<1x256xf32>
    %6 = arith.mulf %3, %3 : vector<256x40xf32>
    %cst = arith.constant dense<0.000000e+00> : vector<256xf32>
    %7 = vector.multi_reduction <add>, %6, %cst [1] : vector<256x40xf32> to vector<256xf32>
    %8 = vector.shape_cast %7 : vector<256xf32> to vector<256x1xf32>
    %cst_8 = arith.constant 9.99999993E-9 : f32
    %9 = vector.broadcast %cst_8 : f32 to vector<256x1xf32>
    %10 = arith.maximumf %8, %9 : vector<256x1xf32>
    %11 = math.rsqrt %10 : vector<256x1xf32>
    %12 = vector.broadcast %11 : vector<256x1xf32> to vector<256x40xf32>
    %13 = arith.mulf %3, %12 : vector<256x40xf32>
    %cst_9 = arith.constant dense<0.000000e+00> : vector<256x256xf32>
    %14 = tpu.matmul %1, %13, %cst_9 {dimension_numbers = #tpu.dot_dimension_numbers<[1], [1], [0], [0], [0, 0, 1, 0], [], []>} : vector<256x40xf32>, vector<256x40xf32>, vector<256x256xf32> -> vector<256x256xf32>
    %15 = tpu.iota {dimensions = array<i32: 0>} : vector<256x256xi32>
    %16 = tpu.iota {dimensions = array<i32: 1>} : vector<256x256xi32>
    %cst_10 = arith.constant 0.000000e+00 : f32
    %17 = vector.broadcast %cst_10 : f32 to vector<1x256xf32>
    %18 = vector.extract_strided_slice %14 {offsets = [0, 0], sizes = [255, 256], strides = [1, 1]} : vector<256x256xf32> to vector<255x256xf32>
    %19 = tpu.concatenate %17, %18 in 0 : vector<1x256xf32>, vector<255x256xf32> -> vector<256x256xf32>
    %cst_11 = arith.constant 0.000000e+00 : f32
    %20 = vector.broadcast %cst_11 : f32 to vector<256x1xf32>
    %21 = vector.extract_strided_slice %19 {offsets = [0, 0], sizes = [256, 255], strides = [1, 1]} : vector<256x256xf32> to vector<256x255xf32>
    %22 = tpu.concatenate %20, %21 in 1 : vector<256x1xf32>, vector<256x255xf32> -> vector<256x256xf32>
    %23 = arith.addf %22, %14 : vector<256x256xf32>
    %cst_12 = arith.constant 0.000000e+00 : f32
    %24 = vector.broadcast %cst_12 : f32 to vector<1x256xf32>
    %25 = vector.extract_strided_slice %14 {offsets = [1, 0], sizes = [255, 256], strides = [1, 1]} : vector<256x256xf32> to vector<255x256xf32>
    %26 = tpu.concatenate %25, %24 in 0 : vector<255x256xf32>, vector<1x256xf32> -> vector<256x256xf32>
    %cst_13 = arith.constant 0.000000e+00 : f32
    %27 = vector.broadcast %cst_13 : f32 to vector<256x1xf32>
    %28 = vector.extract_strided_slice %26 {offsets = [0, 1], sizes = [256, 255], strides = [1, 1]} : vector<256x256xf32> to vector<256x255xf32>
    %29 = tpu.concatenate %28, %27 in 1 : vector<256x255xf32>, vector<256x1xf32> -> vector<256x256xf32>
    %30 = arith.addf %23, %29 : vector<256x256xf32>
    %cst_14 = arith.constant 0.000000e+00 : f32
    %31 = vector.broadcast %cst_14 : f32 to vector<256x16xf32>
    %32 = vector.extract_strided_slice %30 {offsets = [0, 16], sizes = [256, 240], strides = [1, 1]} : vector<256x256xf32> to vector<256x240xf32>
    %33 = tpu.concatenate %32, %31 in 1 : vector<256x240xf32>, vector<256x16xf32> -> vector<256x256xf32>
    %cst_15 = arith.constant 0.000000e+00 : f32
    %34 = vector.broadcast %cst_15 : f32 to vector<256x239xf32>
    %35 = vector.extract_strided_slice %30 {offsets = [0, 0], sizes = [256, 17], strides = [1, 1]} : vector<256x256xf32> to vector<256x17xf32>
    %36 = tpu.concatenate %34, %35 in 1 : vector<256x239xf32>, vector<256x17xf32> -> vector<256x256xf32>
    %c240_i32 = arith.constant 240 : i32
    %37 = vector.broadcast %c240_i32 : i32 to vector<256x256xi32>
    %38 = arith.cmpi slt, %16, %37 : vector<256x256xi32>
    %c255_i32 = arith.constant 255 : i32
    %39 = vector.broadcast %c255_i32 : i32 to vector<256x256xi32>
    %40 = arith.cmpi eq, %16, %39 : vector<256x256xi32>
    %cst_16 = arith.constant 0.000000e+00 : f32
    %41 = vector.broadcast %cst_16 : f32 to vector<256x256xf32>
    %42 = arith.select %40, %41, %36 : vector<256x256xi1>, vector<256x256xf32>
    %43 = arith.select %38, %33, %42 : vector<256x256xi1>, vector<256x256xf32>
    %cst_17 = arith.constant 0.000000e+00 : f32
    %44 = vector.broadcast %cst_17 : f32 to vector<16x256xf32>
    %45 = vector.extract_strided_slice %43 {offsets = [16, 0], sizes = [240, 256], strides = [1, 1]} : vector<256x256xf32> to vector<240x256xf32>
    %46 = tpu.concatenate %45, %44 in 0 : vector<240x256xf32>, vector<16x256xf32> -> vector<256x256xf32>
    %cst_18 = arith.constant 0.000000e+00 : f32
    %47 = vector.broadcast %cst_18 : f32 to vector<239x256xf32>
    %48 = vector.extract_strided_slice %43 {offsets = [0, 0], sizes = [17, 256], strides = [1, 1]} : vector<256x256xf32> to vector<17x256xf32>
    %49 = tpu.concatenate %47, %48 in 0 : vector<239x256xf32>, vector<17x256xf32> -> vector<256x256xf32>
    %c240_i32_19 = arith.constant 240 : i32
    %50 = vector.broadcast %c240_i32_19 : i32 to vector<256x256xi32>
    %51 = arith.cmpi slt, %15, %50 : vector<256x256xi32>
    %c255_i32_20 = arith.constant 255 : i32
    %52 = vector.broadcast %c255_i32_20 : i32 to vector<256x256xi32>
    %53 = arith.cmpi eq, %15, %52 : vector<256x256xi32>
    %cst_21 = arith.constant 0.000000e+00 : f32
    %54 = vector.broadcast %cst_21 : f32 to vector<256x256xf32>
    %55 = arith.select %53, %54, %49 : vector<256x256xi1>, vector<256x256xf32>
    %56 = arith.select %51, %46, %55 : vector<256x256xi1>, vector<256x256xf32>
    %cst_22 = arith.constant 0.000000e+00 : f32
    %57 = vector.broadcast %cst_22 : f32 to vector<256x16xf32>
    %58 = vector.extract_strided_slice %30 {offsets = [0, 0], sizes = [256, 240], strides = [1, 1]} : vector<256x256xf32> to vector<256x240xf32>
    %59 = tpu.concatenate %57, %58 in 1 : vector<256x16xf32>, vector<256x240xf32> -> vector<256x256xf32>
    %cst_23 = arith.constant 0.000000e+00 : f32
    %60 = vector.broadcast %cst_23 : f32 to vector<256x239xf32>
    %61 = vector.extract_strided_slice %30 {offsets = [0, 239], sizes = [256, 17], strides = [1, 1]} : vector<256x256xf32> to vector<256x17xf32>
    %62 = tpu.concatenate %61, %60 in 1 : vector<256x17xf32>, vector<256x239xf32> -> vector<256x256xf32>
    %c16_i32 = arith.constant 16 : i32
    %63 = vector.broadcast %c16_i32 : i32 to vector<256x256xi32>
    %64 = arith.cmpi sge, %16, %63 : vector<256x256xi32>
    %c0_i32 = arith.constant 0 : i32
    %65 = vector.broadcast %c0_i32 : i32 to vector<256x256xi32>
    %66 = arith.cmpi eq, %16, %65 : vector<256x256xi32>
    %cst_24 = arith.constant 0.000000e+00 : f32
    %67 = vector.broadcast %cst_24 : f32 to vector<256x256xf32>
    %68 = arith.select %66, %67, %62 : vector<256x256xi1>, vector<256x256xf32>
    %69 = arith.select %64, %59, %68 : vector<256x256xi1>, vector<256x256xf32>
    %cst_25 = arith.constant 0.000000e+00 : f32
    %70 = vector.broadcast %cst_25 : f32 to vector<16x256xf32>
    %71 = vector.extract_strided_slice %69 {offsets = [0, 0], sizes = [240, 256], strides = [1, 1]} : vector<256x256xf32> to vector<240x256xf32>
    %72 = tpu.concatenate %70, %71 in 0 : vector<16x256xf32>, vector<240x256xf32> -> vector<256x256xf32>
    %cst_26 = arith.constant 0.000000e+00 : f32
    %73 = vector.broadcast %cst_26 : f32 to vector<239x256xf32>
    %74 = vector.extract_strided_slice %69 {offsets = [239, 0], sizes = [17, 256], strides = [1, 1]} : vector<256x256xf32> to vector<17x256xf32>
    %75 = tpu.concatenate %74, %73 in 0 : vector<17x256xf32>, vector<239x256xf32> -> vector<256x256xf32>
    %c16_i32_27 = arith.constant 16 : i32
    %76 = vector.broadcast %c16_i32_27 : i32 to vector<256x256xi32>
    %77 = arith.cmpi sge, %15, %76 : vector<256x256xi32>
    %c0_i32_28 = arith.constant 0 : i32
    %78 = vector.broadcast %c0_i32_28 : i32 to vector<256x256xi32>
    %79 = arith.cmpi eq, %15, %78 : vector<256x256xi32>
    %cst_29 = arith.constant 0.000000e+00 : f32
    %80 = vector.broadcast %cst_29 : f32 to vector<256x256xf32>
    %81 = arith.select %79, %80, %75 : vector<256x256xi1>, vector<256x256xf32>
    %82 = arith.select %77, %72, %81 : vector<256x256xi1>, vector<256x256xf32>
    %83 = arith.addf %30, %56 : vector<256x256xf32>
    %84 = arith.addf %83, %82 : vector<256x256xf32>
    %cst_30 = arith.constant 1.000000e+01 : f32
    %85 = vector.broadcast %cst_30 : f32 to vector<1x256xf32>
    %86 = arith.mulf %5, %85 : vector<1x256xf32>
    %87 = vector.broadcast %86 : vector<1x256xf32> to vector<256x256xf32>
    %88 = arith.mulf %84, %87 : vector<256x256xf32>
    %cst_31 = arith.constant dense<0xFF800000> : vector<256xf32>
    %89 = vector.multi_reduction <maximumf>, %88, %cst_31 [1] : vector<256x256xf32> to vector<256xf32>
    %90 = vector.shape_cast %89 : vector<256xf32> to vector<256x1xf32>
    %91 = vector.broadcast %90 : vector<256x1xf32> to vector<256x256xf32>
    %92 = arith.subf %88, %91 : vector<256x256xf32>
    %93 = math.exp %92 : vector<256x256xf32>
    %cst_32 = arith.constant dense<0.000000e+00> : vector<256xf32>
    %94 = vector.multi_reduction <add>, %93, %cst_32 [1] : vector<256x256xf32> to vector<256xf32>
    %95 = vector.shape_cast %94 : vector<256xf32> to vector<256x1xf32>
    %96 = tpu.reciprocal %95 {approx = true} : vector<256x1xf32> -> vector<256x1xf32>
    %97 = vector.broadcast %96 : vector<256x1xf32> to vector<256x256xf32>
    %98 = arith.mulf %93, %97 : vector<256x256xf32>
    %99 = vector.broadcast %5 : vector<1x256xf32> to vector<256x256xf32>
    %100 = arith.mulf %98, %99 : vector<256x256xf32>
    %c0_33 = arith.constant 0 : index
    %c0_34 = arith.constant 0 : index
    %c0_35 = arith.constant 0 : index
    %101 = vector.load %arg3[%c0_33, %c0_34, %c0_35] : memref<1x40x256xf32, #tpu.memory_space<vmem>>, vector<1x40x256xf32>
    %102 = vector.shape_cast %101 : vector<1x40x256xf32> to vector<40x256xf32>
    %103 = arith.truncf %102 : vector<40x256xf32> to vector<40x256xbf16>
    %104 = arith.truncf %100 : vector<256x256xf32> to vector<256x256xbf16>
    %cst_36 = arith.constant dense<0.000000e+00> : vector<40x256xf32>
    %105 = tpu.matmul %103, %104, %cst_36 {dimension_numbers = #tpu.dot_dimension_numbers<[1], [1], [0], [0], [0, 0, 1, 0], [], []>} : vector<40x256xbf16>, vector<256x256xbf16>, vector<40x256xf32> -> vector<40x256xf32>
    %c0_37 = arith.constant 0 : index
    %c0_38 = arith.constant 0 : index
    %c0_39 = arith.constant 0 : index
    %106 = vector.load %arg5[%c0_37, %c0_38, %c0_39] : memref<1x40x256xf32, #tpu.memory_space<vmem>>, vector<1x40x256xf32>
    %107 = vector.shape_cast %106 : vector<1x40x256xf32> to vector<40x256xf32>
    %108 = vector.shape_cast %105 : vector<40x256xf32> to vector<1x40x256xf32>
    tpu.vector_store %arg5[%c0_37, %c0_38, %c0_39], %108 {strides = array<i32>} : memref<1x40x256xf32, #tpu.memory_space<vmem>>, vector<1x40x256xf32>,
    return
  }
  func.func @transform_0(%arg0: i32) -> (i32, i32, i32) {
    %c0_i32 = arith.constant 0 : i32
    %c0_i32_0 = arith.constant 0 : i32
    %c0_i32_1 = arith.constant 0 : i32
    return %arg0, %c0_i32, %c0_i32_0 : i32, i32, i32
  }
  func.func @transform_1(%arg0: i32) -> (i32, i32, i32) {
    %c0_i32 = arith.constant 0 : i32
    %c0_i32_0 = arith.constant 0 : i32
    %c0_i32_1 = arith.constant 0 : i32
    return %arg0, %c0_i32, %c0_i32_0 : i32, i32, i32
  }
  func.func @transform_2(%arg0: i32) -> (i32, i32, i32) {
    %c0_i32 = arith.constant 0 : i32
    %c0_i32_0 = arith.constant 0 : i32
    %c0_i32_1 = arith.constant 0 : i32
    return %arg0, %c0_i32, %c0_i32_0 : i32, i32, i32
  }
  func.func @transform_3(%arg0: i32) -> (i32, i32, i32) {
    %c0_i32 = arith.constant 0 : i32
    %c0_i32_0 = arith.constant 0 : i32
    %c0_i32_1 = arith.constant 0 : i32
    return %arg0, %c0_i32, %c0_i32_0 : i32, i32, i32
  }
  func.func @transform_4(%arg0: i32) -> (i32, i32, i32) {
    %c0_i32 = arith.constant 0 : i32
    %c0_i32_0 = arith.constant 0 : i32
    %c0_i32_1 = arith.constant 0 : i32
    return %arg0, %c0_i32, %c0_i32_0 : i32, i32, i32
  }
}

</mosaic_0001>

<llo_original>
// kernel: tpu_custom_call.1
$region0: #{tpu_custom_call.1}
  #allocation0 [shape = 'u32[]', space=smem, size = 0x4, offset = 0x4, fixed_abs, tag = 'smem constant byte address 0x4 - core index']
  #allocation1 [shape = 'u32[72,128]{1,0:T(1,128)}', space=vmem, size = 0x9000, scoped, tag = 'internal scratch']
  %s0 = inlined_call_operand.vmem [shape: f32[2,256,40], index: 0, kind: input, shape index: {}]
  %s1 = inlined_call_operand.vmem [shape: f32[2,256,40], index: 1, kind: input, shape index: {}]
  %s2 = inlined_call_operand.vmem [shape: f32[2,40,256], index: 2, kind: input, shape index: {}]
  %s3 = inlined_call_operand.vmem [shape: f32[2,1,256], index: 3, kind: input, shape index: {}]
  %s4 = inlined_call_operand.hbm [shape: f32[2,40,256], index: 4, kind: output, shape index: {}]
  %s5 = sld [smem:[#allocation0]]
  $region49: #{tpu_custom_call.1} parent=0
    _
  %s7 = ssub.s32 1, %s5
  %s8 = scalar_select 0, %s7, %s5
  $region1: #{tpu_custom_call.1} parent=0
    #allocation2 [shape = 'u8[81920]{0}', space=vmem, size = 0x14000, scoped, tag = 'output window, operand 0']
    #allocation3 [shape = 's32[2]{0}', space=sflag, size = 0x8, scoped, tag = 'scoped memory for tpu_custom_call.1']
    %9 = vsyncpa [#allocation3], 0
    %s10 = scalar_lea.sflag [#allocation3], 1
    %11 = vsyncpa %s10, 0
    loop: start=0, step=1, limit=4
    $region2: #{tpu_custom_call.1} parent=1 // loop_pre_header
      _
    $region3: #{tpu_custom_call.1} parent=1 // loop_header
      %s13 = sphi 0, %s17
      %p14 = scmp.ge.s32.totalorder %s13, 4
      %s23 = sphi 0, %s25
      %s26 = sphi 0, %s23
      %s27 = sphi 0, %s26
      %s43 = sphi 0, %s27
      %s49 = sphi 0, %s51
      %s52 = sphi 0, %s49
      %s53 = sphi 0, %s52
      %s69 = sphi 0, %s53
      %s75 = sphi 0, %s77
      %s78 = sphi 0, %s75
      %s79 = sphi 0, %s78
      %s95 = sphi 0, %s79
      %s101 = sphi 0, %s103
      %s104 = sphi 0, %s101
      %s105 = sphi 0, %s104
      %s121 = sphi 0, %s105
      %s127 = sphi 0, %s129
      %s130 = sphi 0, %s127
      %s131 = sphi 0, %s130
      %s147 = sphi 0, %s131
    $region4: #{tpu_custom_call.1} parent=1 // loop_header_branch
      %16 = sbr.rel (%p14) target = $region8
    $region5: #{tpu_custom_call.1} parent=1 // loop_body
      %s18 = ssub.s32 %s13, 1
      %s19 = ssub.s32 %s13, 2
      %s20 = sadd.s32 %s13, 1
      %s21 = ssub.s32 %s13, %s20
      %p22 = scmp.eq.s32.totalorder %s21, 0
      %s24 = sadd.s32 %s23, 1
      %s25 = scalar_select %p22, %s23, %s24
      %p28 = pneg %p22
      %p29 = scmp.eq.s32.totalorder %s13, 1
      %p30 = por %p28, %p29
      %p31 = scmp.ne.s32.totalorder %s23, %s26
      %p32 = scmp.eq.s32.totalorder %s13, 0
      %p33 = por %p31, %p32
      %p34 = scmp.ne.s32.totalorder %s23, %s26
      %p35 = scmp.eq.s32.totalorder %s18, 1
      %p36 = por %p34, %p35
      %p37 = scmp.ne.s32.totalorder %s26, %s27
      %p38 = scmp.eq.s32.totalorder %s18, 0
      %p39 = por %p37, %p38
      %p40 = scmp.ne.s32.totalorder %s26, %s27
      %p41 = scmp.eq.s32.totalorder %s19, 1
      %p42 = por %p40, %p41
      %p44 = scmp.ne.s32.totalorder %s27, %s43
      %p45 = scmp.eq.s32.totalorder %s19, 0
      %p46 = por %p44, %p45
      %s47 = ssub.s32 %s13, %s20
      %p48 = scmp.eq.s32.totalorder %s47, 0
      %s50 = sadd.s32 %s49, 1
      %s51 = scalar_select %p48, %s49, %s50
      %p54 = pneg %p48
      %p55 = scmp.eq.s32.totalorder %s13, 1
      %p56 = por %p54, %p55
      %p57 = scmp.ne.s32.totalorder %s49, %s52
      %p58 = scmp.eq.s32.totalorder %s13, 0
      %p59 = por %p57, %p58
      %p60 = scmp.ne.s32.totalorder %s49, %s52
      %p61 = scmp.eq.s32.totalorder %s18, 1
      %p62 = por %p60, %p61
      %p63 = scmp.ne.s32.totalorder %s52, %s53
      %p64 = scmp.eq.s32.totalorder %s18, 0
      %p65 = por %p63, %p64
      %p66 = scmp.ne.s32.totalorder %s52, %s53
      %p67 = scmp.eq.s32.totalorder %s19, 1
      %p68 = por %p66, %p67
      %p70 = scmp.ne.s32.totalorder %s53, %s69
      %p71 = scmp.eq.s32.totalorder %s19, 0
      %p72 = por %p70, %p71
      %s73 = ssub.s32 %s13, %s20
      %p74 = scmp.eq.s32.totalorder %s73, 0
      %s76 = sadd.s32 %s75, 1
      %s77 = scalar_select %p74, %s75, %s76
      %p80 = pneg %p74
      %p81 = scmp.eq.s32.totalorder %s13, 1
      %p82 = por %p80, %p81
      %p83 = scmp.ne.s32.totalorder %s75, %s78
      %p84 = scmp.eq.s32.totalorder %s13, 0
      %p85 = por %p83, %p84
      %p86 = scmp.ne.s32.totalorder %s75, %s78
      %p87 = scmp.eq.s32.totalorder %s18, 1
      %p88 = por %p86, %p87
      %p89 = scmp.ne.s32.totalorder %s78, %s79
      %p90 = scmp.eq.s32.totalorder %s18, 0
      %p91 = por %p89, %p90
      %p92 = scmp.ne.s32.totalorder %s78, %s79
      %p93 = scmp.eq.s32.totalorder %s19, 1
      %p94 = por %p92, %p93
      %p96 = scmp.ne.s32.totalorder %s79, %s95
      %p97 = scmp.eq.s32.totalorder %s19, 0
      %p98 = por %p96, %p97
      %s99 = ssub.s32 %s13, %s20
      %p100 = scmp.eq.s32.totalorder %s99, 0
      %s102 = sadd.s32 %s101, 1
      %s103 = scalar_select %p100, %s101, %s102
      %p106 = pneg %p100
      %p107 = scmp.eq.s32.totalorder %s13, 1
      %p108 = por %p106, %p107
      %p109 = scmp.ne.s32.totalorder %s101, %s104
      %p110 = scmp.eq.s32.totalorder %s13, 0
      %p111 = por %p109, %p110
      %p112 = scmp.ne.s32.totalorder %s101, %s104
      %p113 = scmp.eq.s32.totalorder %s18, 1
      %p114 = por %p112, %p113
      %p115 = scmp.ne.s32.totalorder %s104, %s105
      %p116 = scmp.eq.s32.totalorder %s18, 0
      %p117 = por %p115, %p116
      %p118 = scmp.ne.s32.totalorder %s104, %s105
      %p119 = scmp.eq.s32.totalorder %s19, 1
      %p120 = por %p118, %p119
      %p122 = scmp.ne.s32.totalorder %s105, %s121
      %p123 = scmp.eq.s32.totalorder %s19, 0
      %p124 = por %p122, %p123
      %s125 = ssub.s32 %s13, %s20
      %p126 = scmp.eq.s32.totalorder %s125, 0
      %s128 = sadd.s32 %s127, 1
      %s129 = scalar_select %p126, %s127, %s128
      %p132 = pneg %p126
      %p133 = scmp.eq.s32.totalorder %s13, 1
      %p134 = por %p132, %p133
      %p135 = scmp.ne.s32.totalorder %s127, %s130
      %p136 = scmp.eq.s32.totalorder %s13, 0
      %p137 = por %p135, %p136
      %p138 = scmp.ne.s32.totalorder %s127, %s130
      %p139 = scmp.eq.s32.totalorder %s18, 1
      %p140 = por %p138, %p139
      %p141 = scmp.ne.s32.totalorder %s130, %s131
      %p142 = scmp.eq.s32.totalorder %s18, 0
      %p143 = por %p141, %p142
      %p144 = scmp.ne.s32.totalorder %s130, %s131
      %p145 = scmp.eq.s32.totalorder %s19, 1
      %p146 = por %p144, %p145
      %p148 = scmp.ne.s32.totalorder %s131, %s147
      %p149 = scmp.eq.s32.totalorder %s19, 0
      %p150 = por %p148, %p149
      %p151 = scmp.le.s32.totalorder 1, %s13
      %p152 = scmp.lt.s32.totalorder %s13, 3
      %p153 = pnand %p151, %p152
      %p154 = pneg %p153
      // Predicated region
      $region9: #{tpu_custom_call.1} parent=5 // pred_check
        _
      $region10: #{tpu_custom_call.1} parent=5 // pred_check_branch
        %156 = sbr.rel (%p153) target = $region12
      $region11: #{tpu_custom_call.1} parent=5 // pred_region
        %s157 = ssub.s32 %s13, 1
      $region12: #{tpu_custom_call.1} parent=5 // pred_fallthru
        _
      %p158 = scmp.lt.s32.totalorder %s13, 2
      // Predicated region
      $region13: #{tpu_custom_call.1} parent=5 // pred_check
        %p159 = pneg %p158
      $region14: #{tpu_custom_call.1} parent=5 // pred_check_branch
        %161 = sbr.rel (%p159) target = $region16
      $region15: #{tpu_custom_call.1} parent=5 // pred_region
        // Predicated region
        $region17: #{tpu_custom_call.1} parent=15 // pred_check
          %p162 = pneg %p33
        $region18: #{tpu_custom_call.1} parent=15 // pred_check_branch
          %164 = sbr.rel (%p162) target = $region20
        $region19: #{tpu_custom_call.1} parent=15 // pred_region
          %p165 = scmp.lt.s32.totalorder %s13, 1
          %s166 = scalar_select %p165, %s13, 1
          %s167 = smul.addr %s166, 32
          %s168 = smul.addr %s167, 8
          %s169 = scalar_lea.vmem %s0, %s168
        $region20: #{tpu_custom_call.1} parent=15 // pred_fallthru
          _
        // Predicated region
        $region21: #{tpu_custom_call.1} parent=15 // pred_check
          %p170 = pneg %p59
        $region22: #{tpu_custom_call.1} parent=15 // pred_check_branch
          %172 = sbr.rel (%p170) target = $region24
        $region23: #{tpu_custom_call.1} parent=15 // pred_region
          %p173 = scmp.lt.s32.totalorder %s13, 1
          %s174 = scalar_select %p173, %s13, 1
          %s175 = smul.addr %s174, 32
          %s176 = smul.addr %s175, 8
          %s177 = scalar_lea.vmem %s1, %s176
        $region24: #{tpu_custom_call.1} parent=15 // pred_fallthru
          _
        // Predicated region
        $region25: #{tpu_custom_call.1} parent=15 // pred_check
          %p178 = pneg %p85
        $region26: #{tpu_custom_call.1} parent=15 // pred_check_branch
          %180 = sbr.rel (%p178) target = $region28
        $region27: #{tpu_custom_call.1} parent=15 // pred_region
          %p181 = scmp.lt.s32.totalorder %s13, 1
          %s182 = scalar_select %p181, %s13, 1
          %s183 = smul.addr %s182, 10
          %s184 = smul.addr %s183, 8
          %s185 = scalar_lea.vmem %s2, %s184
        $region28: #{tpu_custom_call.1} parent=15 // pred_fallthru
          _
        // Predicated region
        $region29: #{tpu_custom_call.1} parent=15 // pred_check
          %p186 = pneg %p111
        $region30: #{tpu_custom_call.1} parent=15 // pred_check_branch
          %188 = sbr.rel (%p186) target = $region32
        $region31: #{tpu_custom_call.1} parent=15 // pred_region
          %p189 = scmp.lt.s32.totalorder %s13, 1
          %s190 = scalar_select %p189, %s13, 1
          %s191 = smul.addr %s190, 2
          %s192 = scalar_lea.vmem %s3, %s191
        $region32: #{tpu_custom_call.1} parent=15 // pred_fallthru
          _
      $region16: #{tpu_custom_call.1} parent=5 // pred_fallthru
        _
      %p193 = scmp.le.s32.totalorder 1, %s13
      %p194 = scmp.lt.s32.totalorder %s13, 3
      %p195 = pnand %p193, %p194
      %p196 = pneg %p195
      // Predicated region
      $region33: #{tpu_custom_call.1} parent=5 // pred_check
        _
      $region34: #{tpu_custom_call.1} parent=5 // pred_check_branch
        %198 = sbr.rel (%p195) target = $region36
      $region35: #{tpu_custom_call.1} parent=5 // pred_region
        %s199 = ssub.s32 %s13, 1
        %p200 = scmp.lt.s32.totalorder %s18, 1
        %s201 = scalar_select %p200, %s18, 1
        %s202 = smul.addr %s201, 32
        %s203 = smul.addr %s202, 8
        %s204 = scalar_lea.vmem %s0, %s203
        %p205 = pneg %p39
        %p206 = pneg %p36
        %p207 = scmp.lt.s32.totalorder %s18, 1
        %s208 = scalar_select %p207, %s18, 1
        %s209 = smul.addr %s208, 32
        %s210 = smul.addr %s209, 8
        %s211 = scalar_lea.vmem %s1, %s210
        %p212 = pneg %p65
        %p213 = pneg %p62
        %p214 = scmp.lt.s32.totalorder %s18, 1
        %s215 = scalar_select %p214, %s18, 1
        %s216 = smul.addr %s215, 10
        %s217 = smul.addr %s216, 8
        %s218 = scalar_lea.vmem %s2, %s217
        %p219 = pneg %p91
        %p220 = pneg %p88
        %p221 = scmp.lt.s32.totalorder %s18, 1
        %s222 = scalar_select %p221, %s18, 1
        %s223 = smul.addr %s222, 2
        %s224 = scalar_lea.vmem %s3, %s223
        %p225 = pneg %p117
        %p226 = pneg %p114
        %p227 = pneg %p143
        %p228 = pneg %p140
        %s229 = sand.u32 %s130, 1
        %s230 = scalar_lea.sflag [#allocation3], %s229
        %s231 = sand.u32 %s130, 1
        %s232 = smul.addr %s231, 80
        %s233 = scalar_lea.vmem [#allocation2], %s232
        %p234 = scmp.lt.s32.totalorder %s18, 1
        %s235 = scalar_select %p234, %s18, 1
        %s236 = smul.addr %s235, 32
        %s237 = smul.addr %s236, 8
        %s238 = scalar_lea.vmem %s0, %s237
        %p239 = scmp.lt.s32.totalorder %s18, 1
        %s240 = scalar_select %p239, %s18, 1
        %s241 = smul.addr %s240, 32
        %s242 = smul.addr %s241, 8
        %s243 = scalar_lea.vmem %s1, %s242
        %p244 = scmp.lt.s32.totalorder %s18, 1
        %s245 = scalar_select %p244, %s18, 1
        %s246 = smul.addr %s245, 10
        %s247 = smul.addr %s246, 8
        %s248 = scalar_lea.vmem %s2, %s247
        %p249 = scmp.lt.s32.totalorder %s18, 1
        %s250 = scalar_select %p249, %s18, 1
        %s251 = smul.addr %s250, 2
        %s252 = scalar_lea.vmem %s3, %s251
        %v253 = vld [vmem:[%s238] sm:$0xff]
        %v254 = vld [vmem:[%s238 + $0x8] sm:$0xff]
        %v255 = vld [vmem:[%s238 + $0x10] sm:$0xff]
        %v256 = vld [vmem:[%s238 + $0x18] sm:$0xff]
        %v257 = vld [vmem:[%s238 + $0x20] sm:$0xff]
        %v258 = vld [vmem:[%s238 + $0x28] sm:$0xff]
        %v259 = vld [vmem:[%s238 + $0x30] sm:$0xff]
        %v260 = vld [vmem:[%s238 + $0x38] sm:$0xff]
        %v261 = vld [vmem:[%s238 + $0x40] sm:$0xff]
        %v262 = vld [vmem:[%s238 + $0x48] sm:$0xff]
        %v263 = vld [vmem:[%s238 + $0x50] sm:$0xff]
        %v264 = vld [vmem:[%s238 + $0x58] sm:$0xff]
        %v265 = vld [vmem:[%s238 + $0x60] sm:$0xff]
        %v266 = vld [vmem:[%s238 + $0x68] sm:$0xff]
        %v267 = vld [vmem:[%s238 + $0x70] sm:$0xff]
        %v268 = vld [vmem:[%s238 + $0x78] sm:$0xff]
        %v269 = vld [vmem:[%s238 + $0x80] sm:$0xff]
        %v270 = vld [vmem:[%s238 + $0x88] sm:$0xff]
        %v271 = vld [vmem:[%s238 + $0x90] sm:$0xff]
        %v272 = vld [vmem:[%s238 + $0x98] sm:$0xff]
        %v273 = vld [vmem:[%s238 + $0xa0] sm:$0xff]
        %v274 = vld [vmem:[%s238 + $0xa8] sm:$0xff]
        %v275 = vld [vmem:[%s238 + $0xb0] sm:$0xff]
        %v276 = vld [vmem:[%s238 + $0xb8] sm:$0xff]
        %v277 = vld [vmem:[%s238 + $0xc0] sm:$0xff]
        %v278 = vld [vmem:[%s238 + $0xc8] sm:$0xff]
        %v279 = vld [vmem:[%s238 + $0xd0] sm:$0xff]
        %v280 = vld [vmem:[%s238 + $0xd8] sm:$0xff]
        %v281 = vld [vmem:[%s238 + $0xe0] sm:$0xff]
        %v282 = vld [vmem:[%s238 + $0xe8] sm:$0xff]
        %v283 = vld [vmem:[%s238 + $0xf0] sm:$0xff]
        %v284 = vld [vmem:[%s238 + $0xf8] sm:$0xff]
        %v285 = vld [vmem:[%s243] sm:$0xff]
        %v286 = vld [vmem:[%s243 + $0x8] sm:$0xff]
        %v287 = vld [vmem:[%s243 + $0x10] sm:$0xff]
        %v288 = vld [vmem:[%s243 + $0x18] sm:$0xff]
        %v289 = vld [vmem:[%s243 + $0x20] sm:$0xff]
        %v290 = vld [vmem:[%s243 + $0x28] sm:$0xff]
        %v291 = vld [vmem:[%s243 + $0x30] sm:$0xff]
        %v292 = vld [vmem:[%s243 + $0x38] sm:$0xff]
        %v293 = vld [vmem:[%s243 + $0x40] sm:$0xff]
        %v294 = vld [vmem:[%s243 + $0x48] sm:$0xff]
        %v295 = vld [vmem:[%s243 + $0x50] sm:$0xff]
        %v296 = vld [vmem:[%s243 + $0x58] sm:$0xff]
        %v297 = vld [vmem:[%s243 + $0x60] sm:$0xff]
        %v298 = vld [vmem:[%s243 + $0x68] sm:$0xff]
        %v299 = vld [vmem:[%s243 + $0x70] sm:$0xff]
        %v300 = vld [vmem:[%s243 + $0x78] sm:$0xff]
        %v301 = vld [vmem:[%s243 + $0x80] sm:$0xff]
        %v302 = vld [vmem:[%s243 + $0x88] sm:$0xff]
        %v303 = vld [vmem:[%s243 + $0x90] sm:$0xff]
        %v304 = vld [vmem:[%s243 + $0x98] sm:$0xff]
        %v305 = vld [vmem:[%s243 + $0xa0] sm:$0xff]
        %v306 = vld [vmem:[%s243 + $0xa8] sm:$0xff]
        %v307 = vld [vmem:[%s243 + $0xb0] sm:$0xff]
        %v308 = vld [vmem:[%s243 + $0xb8] sm:$0xff]
        %v309 = vld [vmem:[%s243 + $0xc0] sm:$0xff]
        %v310 = vld [vmem:[%s243 + $0xc8] sm:$0xff]
        %v311 = vld [vmem:[%s243 + $0xd0] sm:$0xff]
        %v312 = vld [vmem:[%s243 + $0xd8] sm:$0xff]
        %v313 = vld [vmem:[%s243 + $0xe0] sm:$0xff]
        %v314 = vld [vmem:[%s243 + $0xe8] sm:$0xff]
        %v315 = vld [vmem:[%s243 + $0xf0] sm:$0xff]
        %v316 = vld [vmem:[%s243 + $0xf8] sm:$0xff]
        %v317 = vld [vmem:[%s252] sm:$0x3]
        %v318 = vmul.f32 %v285, %v285
        %v319 = vmul.f32 %v286, %v286
        %v320 = vmul.f32 %v287, %v287
        %v321 = vmul.f32 %v288, %v288
        %v322 = vmul.f32 %v289, %v289
        %v323 = vmul.f32 %v290, %v290
        %v324 = vmul.f32 %v291, %v291
        %v325 = vmul.f32 %v292, %v292
        %v326 = vmul.f32 %v293, %v293
        %v327 = vmul.f32 %v294, %v294
        %v328 = vmul.f32 %v295, %v295
        %v329 = vmul.f32 %v296, %v296
        %v330 = vmul.f32 %v297, %v297
        %v331 = vmul.f32 %v298, %v298
        %v332 = vmul.f32 %v299, %v299
        %v333 = vmul.f32 %v300, %v300
        %v334 = vmul.f32 %v301, %v301
        %v335 = vmul.f32 %v302, %v302
        %v336 = vmul.f32 %v303, %v303
        %v337 = vmul.f32 %v304, %v304
        %v338 = vmul.f32 %v305, %v305
        %v339 = vmul.f32 %v306, %v306
        %v340 = vmul.f32 %v307, %v307
        %v341 = vmul.f32 %v308, %v308
        %v342 = vmul.f32 %v309, %v309
        %v343 = vmul.f32 %v310, %v310
        %v344 = vmul.f32 %v311, %v311
        %v345 = vmul.f32 %v312, %v312
        %v346 = vmul.f32 %v313, %v313
        %v347 = vmul.f32 %v314, %v314
        %v348 = vmul.f32 %v315, %v315
        %v349 = vmul.f32 %v316, %v316
        %vm350 = vcmask 326656
        %v351 = vsel %vm350, %v318, 0.0
        %352 = vadd.xlane.f32.xlu0 %v351
        %v353 = vpop.xlane.xlu0 %352
        %v354 = vsel %vm350, %v319, 0.0
        %355 = vadd.xlane.f32.xlu0 %v354
        %v356 = vpop.xlane.xlu0 %355
        %v357 = vsel %vm350, %v320, 0.0
        %358 = vadd.xlane.f32.xlu0 %v357
        %v359 = vpop.xlane.xlu0 %358
        %v360 = vsel %vm350, %v321, 0.0
        %361 = vadd.xlane.f32.xlu0 %v360
        %v362 = vpop.xlane.xlu0 %361
        %v363 = vsel %vm350, %v322, 0.0
        %364 = vadd.xlane.f32.xlu0 %v363
        %v365 = vpop.xlane.xlu0 %364
        %v366 = vsel %vm350, %v323, 0.0
        %367 = vadd.xlane.f32.xlu0 %v366
        %v368 = vpop.xlane.xlu0 %367
        %v369 = vsel %vm350, %v324, 0.0
        %370 = vadd.xlane.f32.xlu0 %v369
        %v371 = vpop.xlane.xlu0 %370
        %v372 = vsel %vm350, %v325, 0.0
        %373 = vadd.xlane.f32.xlu0 %v372
        %v374 = vpop.xlane.xlu0 %373
        %v375 = vsel %vm350, %v326, 0.0
        %376 = vadd.xlane.f32.xlu0 %v375
        %v377 = vpop.xlane.xlu0 %376
        %v378 = vsel %vm350, %v327, 0.0
        %379 = vadd.xlane.f32.xlu0 %v378
        %v380 = vpop.xlane.xlu0 %379
        %v381 = vsel %vm350, %v328, 0.0
        %382 = vadd.xlane.f32.xlu0 %v381
        %v383 = vpop.xlane.xlu0 %382
        %v384 = vsel %vm350, %v329, 0.0
        %385 = vadd.xlane.f32.xlu0 %v384
        %v386 = vpop.xlane.xlu0 %385
        %v387 = vsel %vm350, %v330, 0.0
        %388 = vadd.xlane.f32.xlu0 %v387
        %v389 = vpop.xlane.xlu0 %388
        %v390 = vsel %vm350, %v331, 0.0
        %391 = vadd.xlane.f32.xlu0 %v390
        %v392 = vpop.xlane.xlu0 %391
        %v393 = vsel %vm350, %v332, 0.0
        %394 = vadd.xlane.f32.xlu0 %v393
        %v395 = vpop.xlane.xlu0 %394
        %v396 = vsel %vm350, %v333, 0.0
        %397 = vadd.xlane.f32.xlu0 %v396
        %v398 = vpop.xlane.xlu0 %397
        %v399 = vsel %vm350, %v334, 0.0
        %400 = vadd.xlane.f32.xlu0 %v399
        %v401 = vpop.xlane.xlu0 %400
        %v402 = vsel %vm350, %v335, 0.0
        %403 = vadd.xlane.f32.xlu0 %v402
        %v404 = vpop.xlane.xlu0 %403
        %v405 = vsel %vm350, %v336, 0.0
        %406 = vadd.xlane.f32.xlu0 %v405
        %v407 = vpop.xlane.xlu0 %406
        %v408 = vsel %vm350, %v337, 0.0
        %409 = vadd.xlane.f32.xlu0 %v408
        %v410 = vpop.xlane.xlu0 %409
        %v411 = vsel %vm350, %v338, 0.0
        %412 = vadd.xlane.f32.xlu0 %v411
        %v413 = vpop.xlane.xlu0 %412
        %v414 = vsel %vm350, %v339, 0.0
        %415 = vadd.xlane.f32.xlu0 %v414
        %v416 = vpop.xlane.xlu0 %415
        %v417 = vsel %vm350, %v340, 0.0
        %418 = vadd.xlane.f32.xlu0 %v417
        %v419 = vpop.xlane.xlu0 %418
        %v420 = vsel %vm350, %v341, 0.0
        %421 = vadd.xlane.f32.xlu0 %v420
        %v422 = vpop.xlane.xlu0 %421
        %v423 = vsel %vm350, %v342, 0.0
        %424 = vadd.xlane.f32.xlu0 %v423
        %v425 = vpop.xlane.xlu0 %424
        %v426 = vsel %vm350, %v343, 0.0
        %427 = vadd.xlane.f32.xlu0 %v426
        %v428 = vpop.xlane.xlu0 %427
        %v429 = vsel %vm350, %v344, 0.0
        %430 = vadd.xlane.f32.xlu0 %v429
        %v431 = vpop.xlane.xlu0 %430
        %v432 = vsel %vm350, %v345, 0.0
        %433 = vadd.xlane.f32.xlu0 %v432
        %v434 = vpop.xlane.xlu0 %433
        %v435 = vsel %vm350, %v346, 0.0
        %436 = vadd.xlane.f32.xlu0 %v435
        %v437 = vpop.xlane.xlu0 %436
        %v438 = vsel %vm350, %v347, 0.0
        %439 = vadd.xlane.f32.xlu0 %v438
        %v440 = vpop.xlane.xlu0 %439
        %v441 = vsel %vm350, %v348, 0.0
        %442 = vadd.xlane.f32.xlu0 %v441
        %v443 = vpop.xlane.xlu0 %442
        %v444 = vsel %vm350, %v349, 0.0
        %445 = vadd.xlane.f32.xlu0 %v444
        %v446 = vpop.xlane.xlu0 %445
        %v447 = vmax.f32 %v353, 1e-08
        %v448 = vmax.f32 %v356, 1e-08
        %v449 = vmax.f32 %v359, 1e-08
        %v450 = vmax.f32 %v362, 1e-08
        %v451 = vmax.f32 %v365, 1e-08
        %v452 = vmax.f32 %v368, 1e-08
        %v453 = vmax.f32 %v371, 1e-08
        %v454 = vmax.f32 %v374, 1e-08
        %v455 = vmax.f32 %v377, 1e-08
        %v456 = vmax.f32 %v380, 1e-08
        %v457 = vmax.f32 %v383, 1e-08
        %v458 = vmax.f32 %v386, 1e-08
        %v459 = vmax.f32 %v389, 1e-08
        %v460 = vmax.f32 %v392, 1e-08
        %v461 = vmax.f32 %v395, 1e-08
        %v462 = vmax.f32 %v398, 1e-08
        %v463 = vmax.f32 %v401, 1e-08
        %v464 = vmax.f32 %v404, 1e-08
        %v465 = vmax.f32 %v407, 1e-08
        %v466 = vmax.f32 %v410, 1e-08
        %v467 = vmax.f32 %v413, 1e-08
        %v468 = vmax.f32 %v416, 1e-08
        %v469 = vmax.f32 %v419, 1e-08
        %v470 = vmax.f32 %v422, 1e-08
        %v471 = vmax.f32 %v425, 1e-08
        %v472 = vmax.f32 %v428, 1e-08
        %v473 = vmax.f32 %v431, 1e-08
        %v474 = vmax.f32 %v434, 1e-08
        %v475 = vmax.f32 %v437, 1e-08
        %v476 = vmax.f32 %v440, 1e-08
        %v477 = vmax.f32 %v443, 1e-08
        %v478 = vmax.f32 %v446, 1e-08
        %v479 = vrsqrt.pop %v447
        %v480 = vmul.f32 %v479, %v447
        %v481 = vmul.f32 %v480, %v479
        %v482 = vmul.f32 0.5, %v481
        %v483 = vsub.f32 1.5, %v482
        %v484 = vmul.f32 %v479, %v483
        %vm485 = vweird.f32 %v447
        %vm486 = vweird.f32 %v479
        %vm487 = vmor %vm485, %vm486
        %v488 = vsel %vm487, %v479, %v484
        %v489 = vrsqrt.pop %v448
        %v490 = vmul.f32 %v489, %v448
        %v491 = vmul.f32 %v490, %v489
        %v492 = vmul.f32 0.5, %v491
        %v493 = vsub.f32 1.5, %v492
        %v494 = vmul.f32 %v489, %v493
        %vm495 = vweird.f32 %v448
        %vm496 = vweird.f32 %v489
        %vm497 = vmor %vm495, %vm496
        %v498 = vsel %vm497, %v489, %v494
        %v499 = vrsqrt.pop %v449
        %v500 = vmul.f32 %v499, %v449
        %v501 = vmul.f32 %v500, %v499
        %v502 = vmul.f32 0.5, %v501
        %v503 = vsub.f32 1.5, %v502
        %v504 = vmul.f32 %v499, %v503
        %vm505 = vweird.f32 %v449
        %vm506 = vweird.f32 %v499
        %vm507 = vmor %vm505, %vm506
        %v508 = vsel %vm507, %v499, %v504
        %v509 = vrsqrt.pop %v450
        %v510 = vmul.f32 %v509, %v450
        %v511 = vmul.f32 %v510, %v509
        %v512 = vmul.f32 0.5, %v511
        %v513 = vsub.f32 1.5, %v512
        %v514 = vmul.f32 %v509, %v513
        %vm515 = vweird.f32 %v450
        %vm516 = vweird.f32 %v509
        %vm517 = vmor %vm515, %vm516
        %v518 = vsel %vm517, %v509, %v514
        %v519 = vrsqrt.pop %v451
        %v520 = vmul.f32 %v519, %v451
        %v521 = vmul.f32 %v520, %v519
        %v522 = vmul.f32 0.5, %v521
        %v523 = vsub.f32 1.5, %v522
        %v524 = vmul.f32 %v519, %v523
        %vm525 = vweird.f32 %v451
        %vm526 = vweird.f32 %v519
        %vm527 = vmor %vm525, %vm526
        %v528 = vsel %vm527, %v519, %v524
        %v529 = vrsqrt.pop %v452
        %v530 = vmul.f32 %v529, %v452
        %v531 = vmul.f32 %v530, %v529
        %v532 = vmul.f32 0.5, %v531
        %v533 = vsub.f32 1.5, %v532
        %v534 = vmul.f32 %v529, %v533
        %vm535 = vweird.f32 %v452
        %vm536 = vweird.f32 %v529
        %vm537 = vmor %vm535, %vm536
        %v538 = vsel %vm537, %v529, %v534
        %v539 = vrsqrt.pop %v453
        %v540 = vmul.f32 %v539, %v453
        %v541 = vmul.f32 %v540, %v539
        %v542 = vmul.f32 0.5, %v541
        %v543 = vsub.f32 1.5, %v542
        %v544 = vmul.f32 %v539, %v543
        %vm545 = vweird.f32 %v453
        %vm546 = vweird.f32 %v539
        %vm547 = vmor %vm545, %vm546
        %v548 = vsel %vm547, %v539, %v544
        %v549 = vrsqrt.pop %v454
        %v550 = vmul.f32 %v549, %v454
        %v551 = vmul.f32 %v550, %v549
        %v552 = vmul.f32 0.5, %v551
        %v553 = vsub.f32 1.5, %v552
        %v554 = vmul.f32 %v549, %v553
        %vm555 = vweird.f32 %v454
        %vm556 = vweird.f32 %v549
        %vm557 = vmor %vm555, %vm556
        %v558 = vsel %vm557, %v549, %v554
        %v559 = vrsqrt.pop %v455
        %v560 = vmul.f32 %v559, %v455
        %v561 = vmul.f32 %v560, %v559
        %v562 = vmul.f32 0.5, %v561
        %v563 = vsub.f32 1.5, %v562
        %v564 = vmul.f32 %v559, %v563
        %vm565 = vweird.f32 %v455
        %vm566 = vweird.f32 %v559
        %vm567 = vmor %vm565, %vm566
        %v568 = vsel %vm567, %v559, %v564
        %v569 = vrsqrt.pop %v456
        %v570 = vmul.f32 %v569, %v456
        %v571 = vmul.f32 %v570, %v569
        %v572 = vmul.f32 0.5, %v571
        %v573 = vsub.f32 1.5, %v572
        %v574 = vmul.f32 %v569, %v573
        %vm575 = vweird.f32 %v456
        %vm576 = vweird.f32 %v569
        %vm577 = vmor %vm575, %vm576
        %v578 = vsel %vm577, %v569, %v574
        %v579 = vrsqrt.pop %v457
        %v580 = vmul.f32 %v579, %v457
        %v581 = vmul.f32 %v580, %v579
        %v582 = vmul.f32 0.5, %v581
        %v583 = vsub.f32 1.5, %v582
        %v584 = vmul.f32 %v579, %v583
        %vm585 = vweird.f32 %v457
        %vm586 = vweird.f32 %v579
        %vm587 = vmor %vm585, %vm586
        %v588 = vsel %vm587, %v579, %v584
        %v589 = vrsqrt.pop %v458
        %v590 = vmul.f32 %v589, %v458
        %v591 = vmul.f32 %v590, %v589
        %v592 = vmul.f32 0.5, %v591
        %v593 = vsub.f32 1.5, %v592
        %v594 = vmul.f32 %v589, %v593
        %vm595 = vweird.f32 %v458
        %vm596 = vweird.f32 %v589
        %vm597 = vmor %vm595, %vm596
        %v598 = vsel %vm597, %v589, %v594
        %v599 = vrsqrt.pop %v459
        %v600 = vmul.f32 %v599, %v459
        %v601 = vmul.f32 %v600, %v599
        %v602 = vmul.f32 0.5, %v601
        %v603 = vsub.f32 1.5, %v602
        %v604 = vmul.f32 %v599, %v603
        %vm605 = vweird.f32 %v459
        %vm606 = vweird.f32 %v599
        %vm607 = vmor %vm605, %vm606
        %v608 = vsel %vm607, %v599, %v604
        %v609 = vrsqrt.pop %v460
        %v610 = vmul.f32 %v609, %v460
        %v611 = vmul.f32 %v610, %v609
        %v612 = vmul.f32 0.5, %v611
        %v613 = vsub.f32 1.5, %v612
        %v614 = vmul.f32 %v609, %v613
        %vm615 = vweird.f32 %v460
        %vm616 = vweird.f32 %v609
        %vm617 = vmor %vm615, %vm616
        %v618 = vsel %vm617, %v609, %v614
        %v619 = vrsqrt.pop %v461
        %v620 = vmul.f32 %v619, %v461
        %v621 = vmul.f32 %v620, %v619
        %v622 = vmul.f32 0.5, %v621
        %v623 = vsub.f32 1.5, %v622
        %v624 = vmul.f32 %v619, %v623
        %vm625 = vweird.f32 %v461
        %vm626 = vweird.f32 %v619
        %vm627 = vmor %vm625, %vm626
        %v628 = vsel %vm627, %v619, %v624
        %v629 = vrsqrt.pop %v462
        %v630 = vmul.f32 %v629, %v462
        %v631 = vmul.f32 %v630, %v629
        %v632 = vmul.f32 0.5, %v631
        %v633 = vsub.f32 1.5, %v632
        %v634 = vmul.f32 %v629, %v633
        %vm635 = vweird.f32 %v462
        %vm636 = vweird.f32 %v629
        %vm637 = vmor %vm635, %vm636
        %v638 = vsel %vm637, %v629, %v634
        %v639 = vrsqrt.pop %v463
        %v640 = vmul.f32 %v639, %v463
        %v641 = vmul.f32 %v640, %v639
        %v642 = vmul.f32 0.5, %v641
        %v643 = vsub.f32 1.5, %v642
        %v644 = vmul.f32 %v639, %v643
        %vm645 = vweird.f32 %v463
        %vm646 = vweird.f32 %v639
        %vm647 = vmor %vm645, %vm646
        %v648 = vsel %vm647, %v639, %v644
        %v649 = vrsqrt.pop %v464
        %v650 = vmul.f32 %v649, %v464
        %v651 = vmul.f32 %v650, %v649
        %v652 = vmul.f32 0.5, %v651
        %v653 = vsub.f32 1.5, %v652
        %v654 = vmul.f32 %v649, %v653
        %vm655 = vweird.f32 %v464
        %vm656 = vweird.f32 %v649
        %vm657 = vmor %vm655, %vm656
        %v658 = vsel %vm657, %v649, %v654
        %v659 = vrsqrt.pop %v465
        %v660 = vmul.f32 %v659, %v465
        %v661 = vmul.f32 %v660, %v659
        %v662 = vmul.f32 0.5, %v661
        %v663 = vsub.f32 1.5, %v662
        %v664 = vmul.f32 %v659, %v663
        %vm665 = vweird.f32 %v465
        %vm666 = vweird.f32 %v659
        %vm667 = vmor %vm665, %vm666
        %v668 = vsel %vm667, %v659, %v664
        %v669 = vrsqrt.pop %v466
        %v670 = vmul.f32 %v669, %v466
        %v671 = vmul.f32 %v670, %v669
        %v672 = vmul.f32 0.5, %v671
        %v673 = vsub.f32 1.5, %v672
        %v674 = vmul.f32 %v669, %v673
        %vm675 = vweird.f32 %v466
        %vm676 = vweird.f32 %v669
        %vm677 = vmor %vm675, %vm676
        %v678 = vsel %vm677, %v669, %v674
        %v679 = vrsqrt.pop %v467
        %v680 = vmul.f32 %v679, %v467
        %v681 = vmul.f32 %v680, %v679
        %v682 = vmul.f32 0.5, %v681
        %v683 = vsub.f32 1.5, %v682
        %v684 = vmul.f32 %v679, %v683
        %vm685 = vweird.f32 %v467
        %vm686 = vweird.f32 %v679
        %vm687 = vmor %vm685, %vm686
        %v688 = vsel %vm687, %v679, %v684
        %v689 = vrsqrt.pop %v468
        %v690 = vmul.f32 %v689, %v468
        %v691 = vmul.f32 %v690, %v689
        %v692 = vmul.f32 0.5, %v691
        %v693 = vsub.f32 1.5, %v692
        %v694 = vmul.f32 %v689, %v693
        %vm695 = vweird.f32 %v468
        %vm696 = vweird.f32 %v689
        %vm697 = vmor %vm695, %vm696
        %v698 = vsel %vm697, %v689, %v694
        %v699 = vrsqrt.pop %v469
        %v700 = vmul.f32 %v699, %v469
        %v701 = vmul.f32 %v700, %v699
        %v702 = vmul.f32 0.5, %v701
        %v703 = vsub.f32 1.5, %v702
        %v704 = vmul.f32 %v699, %v703
        %vm705 = vweird.f32 %v469
        %vm706 = vweird.f32 %v699
        %vm707 = vmor %vm705, %vm706
        %v708 = vsel %vm707, %v699, %v704
        %v709 = vrsqrt.pop %v470
        %v710 = vmul.f32 %v709, %v470
        %v711 = vmul.f32 %v710, %v709
        %v712 = vmul.f32 0.5, %v711
        %v713 = vsub.f32 1.5, %v712
        %v714 = vmul.f32 %v709, %v713
        %vm715 = vweird.f32 %v470
        %vm716 = vweird.f32 %v709
        %vm717 = vmor %vm715, %vm716
        %v718 = vsel %vm717, %v709, %v714
        %v719 = vrsqrt.pop %v471
        %v720 = vmul.f32 %v719, %v471
        %v721 = vmul.f32 %v720, %v719
        %v722 = vmul.f32 0.5, %v721
        %v723 = vsub.f32 1.5, %v722
        %v724 = vmul.f32 %v719, %v723
        %vm725 = vweird.f32 %v471
        %vm726 = vweird.f32 %v719
        %vm727 = vmor %vm725, %vm726
        %v728 = vsel %vm727, %v719, %v724
        %v729 = vrsqrt.pop %v472
        %v730 = vmul.f32 %v729, %v472
        %v731 = vmul.f32 %v730, %v729
        %v732 = vmul.f32 0.5, %v731
        %v733 = vsub.f32 1.5, %v732
        %v734 = vmul.f32 %v729, %v733
        %vm735 = vweird.f32 %v472
        %vm736 = vweird.f32 %v729
        %vm737 = vmor %vm735, %vm736
        %v738 = vsel %vm737, %v729, %v734
        %v739 = vrsqrt.pop %v473
        %v740 = vmul.f32 %v739, %v473
        %v741 = vmul.f32 %v740, %v739
        %v742 = vmul.f32 0.5, %v741
        %v743 = vsub.f32 1.5, %v742
        %v744 = vmul.f32 %v739, %v743
        %vm745 = vweird.f32 %v473
        %vm746 = vweird.f32 %v739
        %vm747 = vmor %vm745, %vm746
        %v748 = vsel %vm747, %v739, %v744
        %v749 = vrsqrt.pop %v474
        %v750 = vmul.f32 %v749, %v474
        %v751 = vmul.f32 %v750, %v749
        %v752 = vmul.f32 0.5, %v751
        %v753 = vsub.f32 1.5, %v752
        %v754 = vmul.f32 %v749, %v753
        %vm755 = vweird.f32 %v474
        %vm756 = vweird.f32 %v749
        %vm757 = vmor %vm755, %vm756
        %v758 = vsel %vm757, %v749, %v754
        %v759 = vrsqrt.pop %v475
        %v760 = vmul.f32 %v759, %v475
        %v761 = vmul.f32 %v760, %v759
        %v762 = vmul.f32 0.5, %v761
        %v763 = vsub.f32 1.5, %v762
        %v764 = vmul.f32 %v759, %v763
        %vm765 = vweird.f32 %v475
        %vm766 = vweird.f32 %v759
        %vm767 = vmor %vm765, %vm766
        %v768 = vsel %vm767, %v759, %v764
        %v769 = vrsqrt.pop %v476
        %v770 = vmul.f32 %v769, %v476
        %v771 = vmul.f32 %v770, %v769
        %v772 = vmul.f32 0.5, %v771
        %v773 = vsub.f32 1.5, %v772
        %v774 = vmul.f32 %v769, %v773
        %vm775 = vweird.f32 %v476
        %vm776 = vweird.f32 %v769
        %vm777 = vmor %vm775, %vm776
        %v778 = vsel %vm777, %v769, %v774
        %v779 = vrsqrt.pop %v477
        %v780 = vmul.f32 %v779, %v477
        %v781 = vmul.f32 %v780, %v779
        %v782 = vmul.f32 0.5, %v781
        %v783 = vsub.f32 1.5, %v782
        %v784 = vmul.f32 %v779, %v783
        %vm785 = vweird.f32 %v477
        %vm786 = vweird.f32 %v779
        %vm787 = vmor %vm785, %vm786
        %v788 = vsel %vm787, %v779, %v784
        %v789 = vrsqrt.pop %v478
        %v790 = vmul.f32 %v789, %v478
        %v791 = vmul.f32 %v790, %v789
        %v792 = vmul.f32 0.5, %v791
        %v793 = vsub.f32 1.5, %v792
        %v794 = vmul.f32 %v789, %v793
        %vm795 = vweird.f32 %v478
        %vm796 = vweird.f32 %v789
        %vm797 = vmor %vm795, %vm796
        %v798 = vsel %vm797, %v789, %v794
        %v799 = vmul.f32 %v285, %v488
        %v800 = vmul.f32 %v286, %v498
        %v801 = vmul.f32 %v287, %v508
        %v802 = vmul.f32 %v288, %v518
        %v803 = vmul.f32 %v289, %v528
        %v804 = vmul.f32 %v290, %v538
        %v805 = vmul.f32 %v291, %v548
        %v806 = vmul.f32 %v292, %v558
        %v807 = vmul.f32 %v293, %v568
        %v808 = vmul.f32 %v294, %v578
        %v809 = vmul.f32 %v295, %v588
        %v810 = vmul.f32 %v296, %v598
        %v811 = vmul.f32 %v297, %v608
        %v812 = vmul.f32 %v298, %v618
        %v813 = vmul.f32 %v299, %v628
        %v814 = vmul.f32 %v300, %v638
        %v815 = vmul.f32 %v301, %v648
        %v816 = vmul.f32 %v302, %v658
        %v817 = vmul.f32 %v303, %v668
        %v818 = vmul.f32 %v304, %v678
        %v819 = vmul.f32 %v305, %v688
        %v820 = vmul.f32 %v306, %v698
        %v821 = vmul.f32 %v307, %v708
        %v822 = vmul.f32 %v308, %v718
        %v823 = vmul.f32 %v309, %v728
        %v824 = vmul.f32 %v310, %v738
        %v825 = vmul.f32 %v311, %v748
        %v826 = vmul.f32 %v312, %v758
        %v827 = vmul.f32 %v313, %v768
        %v828 = vmul.f32 %v314, %v778
        %v829 = vmul.f32 %v315, %v788
        %v830 = vmul.f32 %v316, %v798
        %v832 = vsel %vm350, %v253, 0
        %v835 = vsel %vm350, %v254, 0
        %v838 = vsel %vm350, %v255, 0
        %v841 = vsel %vm350, %v256, 0
        %v844 = vsel %vm350, %v257, 0
        %v847 = vsel %vm350, %v258, 0
        %v850 = vsel %vm350, %v259, 0
        %v853 = vsel %vm350, %v260, 0
        %v856 = vsel %vm350, %v261, 0
        %v859 = vsel %vm350, %v262, 0
        %v862 = vsel %vm350, %v263, 0
        %v865 = vsel %vm350, %v264, 0
        %v868 = vsel %vm350, %v265, 0
        %v871 = vsel %vm350, %v266, 0
        %v874 = vsel %vm350, %v267, 0
        %v877 = vsel %vm350, %v268, 0
        %v880 = vsel %vm350, %v269, 0
        %v883 = vsel %vm350, %v270, 0
        %v886 = vsel %vm350, %v271, 0
        %v889 = vsel %vm350, %v272, 0
        %v892 = vsel %vm350, %v273, 0
        %v895 = vsel %vm350, %v274, 0
        %v898 = vsel %vm350, %v275, 0
        %v901 = vsel %vm350, %v276, 0
        %v904 = vsel %vm350, %v277, 0
        %v907 = vsel %vm350, %v278, 0
        %v910 = vsel %vm350, %v279, 0
        %v913 = vsel %vm350, %v280, 0
        %v916 = vsel %vm350, %v281, 0
        %v919 = vsel %vm350, %v282, 0
        %v922 = vsel %vm350, %v283, 0
        %v925 = vsel %vm350, %v284, 0
        %v928 = vsel %vm350, %v799, 0
        %v931 = vsel %vm350, %v800, 0
        %v934 = vsel %vm350, %v801, 0
        %v937 = vsel %vm350, %v802, 0
        %v940 = vsel %vm350, %v803, 0
        %v943 = vsel %vm350, %v804, 0
        %v946 = vsel %vm350, %v805, 0
        %v949 = vsel %vm350, %v806, 0
        %v952 = vsel %vm350, %v807, 0
        %v955 = vsel %vm350, %v808, 0
        %v958 = vsel %vm350, %v809, 0
        %v961 = vsel %vm350, %v810, 0
        %v964 = vsel %vm350, %v811, 0
        %v967 = vsel %vm350, %v812, 0
        %v970 = vsel %vm350, %v813, 0
        %v973 = vsel %vm350, %v814, 0
        %v976 = vsel %vm350, %v815, 0
        %v979 = vsel %vm350, %v816, 0
        %v982 = vsel %vm350, %v817, 0
        %v985 = vsel %vm350, %v818, 0
        %v988 = vsel %vm350, %v819, 0
        %v991 = vsel %vm350, %v820, 0
        %v994 = vsel %vm350, %v821, 0
        %v997 = vsel %vm350, %v822, 0
        %v1000 = vsel %vm350, %v823, 0
        %v1003 = vsel %vm350, %v824, 0
        %v1006 = vsel %vm350, %v825, 0
        %v1009 = vsel %vm350, %v826, 0
        %v1012 = vsel %vm350, %v827, 0
        %v1015 = vsel %vm350, %v828, 0
        %v1018 = vsel %vm350, %v829, 0
        %v1021 = vsel %vm350, %v830, 0
        %1023 = vmatpush.xpose.msra.mxu0 %v973
        %1024 = vmatpush.xpose.msra.mxu0 %v970
        %1025 = vmatpush.xpose.msra.mxu0 %v967
        %1026 = vmatpush.xpose.msra.mxu0 %v964
        %1027 = vmatpush.xpose.msra.mxu0 %v961
        %1028 = vmatpush.xpose.msra.mxu0 %v958
        %1029 = vmatpush.xpose.msra.mxu0 %v955
        %1030 = vmatpush.xpose.msra.mxu0 %v952
        %1031 = vmatpush.xpose.msra.mxu0 %v949
        %1032 = vmatpush.xpose.msra.mxu0 %v946
        %1033 = vmatpush.xpose.msra.mxu0 %v943
        %1034 = vmatpush.xpose.msra.mxu0 %v940
        %1035 = vmatpush.xpose.msra.mxu0 %v937
        %1036 = vmatpush.xpose.msra.mxu0 %v934
        %1037 = vmatpush.xpose.msra.mxu0 %v931
        %1038 = vmatpush.xpose.msra.mxu0 %v928
        %1039 = vmatmul.f32.gmra.mxu0 %v832
        %v1040 = vpop.f32.mrf.mxu0
        %v1041 = vadd.f32 0.0, %v1040
        %1042 = vmatmul.f32.gmra.mxu0 %v835
        %v1043 = vpop.f32.mrf.mxu0
        %v1044 = vadd.f32 0.0, %v1043
        %1045 = vmatmul.f32.gmra.mxu0 %v838
        %v1046 = vpop.f32.mrf.mxu0
        %v1047 = vadd.f32 0.0, %v1046
        %1048 = vmatmul.f32.gmra.mxu0 %v841
        %v1049 = vpop.f32.mrf.mxu0
        %v1050 = vadd.f32 0.0, %v1049
        %1051 = vmatmul.f32.gmra.mxu0 %v844
        %v1052 = vpop.f32.mrf.mxu0
        %v1053 = vadd.f32 0.0, %v1052
        %1054 = vmatmul.f32.gmra.mxu0 %v847
        %v1055 = vpop.f32.mrf.mxu0
        %v1056 = vadd.f32 0.0, %v1055
        %1057 = vmatmul.f32.gmra.mxu0 %v850
        %v1058 = vpop.f32.mrf.mxu0
        %v1059 = vadd.f32 0.0, %v1058
        %1060 = vmatmul.f32.gmra.mxu0 %v853
        %v1061 = vpop.f32.mrf.mxu0
        %v1062 = vadd.f32 0.0, %v1061
        %1063 = vmatmul.f32.gmra.mxu0 %v856
        %v1064 = vpop.f32.mrf.mxu0
        %v1065 = vadd.f32 0.0, %v1064
        %1066 = vmatmul.f32.gmra.mxu0 %v859
        %v1067 = vpop.f32.mrf.mxu0
        %v1068 = vadd.f32 0.0, %v1067
        %1069 = vmatmul.f32.gmra.mxu0 %v862
        %v1070 = vpop.f32.mrf.mxu0
        %v1071 = vadd.f32 0.0, %v1070
        %1072 = vmatmul.f32.gmra.mxu0 %v865
        %v1073 = vpop.f32.mrf.mxu0
        %v1074 = vadd.f32 0.0, %v1073
        %1075 = vmatmul.f32.gmra.mxu0 %v868
        %v1076 = vpop.f32.mrf.mxu0
        %v1077 = vadd.f32 0.0, %v1076
        %1078 = vmatmul.f32.gmra.mxu0 %v871
        %v1079 = vpop.f32.mrf.mxu0
        %v1080 = vadd.f32 0.0, %v1079
        %1081 = vmatmul.f32.gmra.mxu0 %v874
        %v1082 = vpop.f32.mrf.mxu0
        %v1083 = vadd.f32 0.0, %v1082
        %1084 = vmatmul.f32.gmra.mxu0 %v877
        %v1085 = vpop.f32.mrf.mxu0
        %v1086 = vadd.f32 0.0, %v1085
        %1087 = vmatmul.f32.gmra.mxu0 %v880
        %v1088 = vpop.f32.mrf.mxu0
        %v1089 = vadd.f32 0.0, %v1088
        %1090 = vmatmul.f32.gmra.mxu0 %v883
        %v1091 = vpop.f32.mrf.mxu0
        %v1092 = vadd.f32 0.0, %v1091
        %1093 = vmatmul.f32.gmra.mxu0 %v886
        %v1094 = vpop.f32.mrf.mxu0
        %v1095 = vadd.f32 0.0, %v1094
        %1096 = vmatmul.f32.gmra.mxu0 %v889
        %v1097 = vpop.f32.mrf.mxu0
        %v1098 = vadd.f32 0.0, %v1097
        %1099 = vmatmul.f32.gmra.mxu0 %v892
        %v1100 = vpop.f32.mrf.mxu0
        %v1101 = vadd.f32 0.0, %v1100
        %1102 = vmatmul.f32.gmra.mxu0 %v895
        %v1103 = vpop.f32.mrf.mxu0
        %v1104 = vadd.f32 0.0, %v1103
        %1105 = vmatmul.f32.gmra.mxu0 %v898
        %v1106 = vpop.f32.mrf.mxu0
        %v1107 = vadd.f32 0.0, %v1106
        %1108 = vmatmul.f32.gmra.mxu0 %v901
        %v1109 = vpop.f32.mrf.mxu0
        %v1110 = vadd.f32 0.0, %v1109
        %1111 = vmatmul.f32.gmra.mxu0 %v904
        %v1112 = vpop.f32.mrf.mxu0
        %v1113 = vadd.f32 0.0, %v1112
        %1114 = vmatmul.f32.gmra.mxu0 %v907
        %v1115 = vpop.f32.mrf.mxu0
        %v1116 = vadd.f32 0.0, %v1115
        %1117 = vmatmul.f32.gmra.mxu0 %v910
        %v1118 = vpop.f32.mrf.mxu0
        %v1119 = vadd.f32 0.0, %v1118
        %1120 = vmatmul.f32.gmra.mxu0 %v913
        %v1121 = vpop.f32.mrf.mxu0
        %v1122 = vadd.f32 0.0, %v1121
        %1123 = vmatmul.f32.gmra.mxu0 %v916
        %v1124 = vpop.f32.mrf.mxu0
        %v1125 = vadd.f32 0.0, %v1124
        %1126 = vmatmul.f32.gmra.mxu0 %v919
        %v1127 = vpop.f32.mrf.mxu0
        %v1128 = vadd.f32 0.0, %v1127
        %1129 = vmatmul.f32.gmra.mxu0 %v922
        %v1130 = vpop.f32.mrf.mxu0
        %v1131 = vadd.f32 0.0, %v1130
        %1132 = vmatmul.f32.gmra.mxu0 %v925
        %v1133 = vpop.f32.mrf.mxu0
        %v1134 = vadd.f32 0.0, %v1133
        %1135 = vdwg.mxu0
        %1136 = vmatpush.xpose.msra.mxu0 %v1021
        %1137 = vmatpush.xpose.msra.mxu0 %v1018
        %1138 = vmatpush.xpose.msra.mxu0 %v1015
        %1139 = vmatpush.xpose.msra.mxu0 %v1012
        %1140 = vmatpush.xpose.msra.mxu0 %v1009
        %1141 = vmatpush.xpose.msra.mxu0 %v1006
        %1142 = vmatpush.xpose.msra.mxu0 %v1003
        %1143 = vmatpush.xpose.msra.mxu0 %v1000
        %1144 = vmatpush.xpose.msra.mxu0 %v997
        %1145 = vmatpush.xpose.msra.mxu0 %v994
        %1146 = vmatpush.xpose.msra.mxu0 %v991
        %1147 = vmatpush.xpose.msra.mxu0 %v988
        %1148 = vmatpush.xpose.msra.mxu0 %v985
        %1149 = vmatpush.xpose.msra.mxu0 %v982
        %1150 = vmatpush.xpose.msra.mxu0 %v979
        %1151 = vmatpush.xpose.msra.mxu0 %v976
        %1152 = vmatmul.f32.gmra.mxu0 %v832
        %v1153 = vpop.f32.mrf.mxu0
        %v1154 = vadd.f32 0.0, %v1153
        %1155 = vmatmul.f32.gmra.mxu0 %v835
        %v1156 = vpop.f32.mrf.mxu0
        %v1157 = vadd.f32 0.0, %v1156
        %1158 = vmatmul.f32.gmra.mxu0 %v838
        %v1159 = vpop.f32.mrf.mxu0
        %v1160 = vadd.f32 0.0, %v1159
        %1161 = vmatmul.f32.gmra.mxu0 %v841
        %v1162 = vpop.f32.mrf.mxu0
        %v1163 = vadd.f32 0.0, %v1162
        %1164 = vmatmul.f32.gmra.mxu0 %v844
        %v1165 = vpop.f32.mrf.mxu0
        %v1166 = vadd.f32 0.0, %v1165
        %1167 = vmatmul.f32.gmra.mxu0 %v847
        %v1168 = vpop.f32.mrf.mxu0
        %v1169 = vadd.f32 0.0, %v1168
        %1170 = vmatmul.f32.gmra.mxu0 %v850
        %v1171 = vpop.f32.mrf.mxu0
        %v1172 = vadd.f32 0.0, %v1171
        %1173 = vmatmul.f32.gmra.mxu0 %v853
        %v1174 = vpop.f32.mrf.mxu0
        %v1175 = vadd.f32 0.0, %v1174
        %1176 = vmatmul.f32.gmra.mxu0 %v856
        %v1177 = vpop.f32.mrf.mxu0
        %v1178 = vadd.f32 0.0, %v1177
        %1179 = vmatmul.f32.gmra.mxu0 %v859
        %v1180 = vpop.f32.mrf.mxu0
        %v1181 = vadd.f32 0.0, %v1180
        %1182 = vmatmul.f32.gmra.mxu0 %v862
        %v1183 = vpop.f32.mrf.mxu0
        %v1184 = vadd.f32 0.0, %v1183
        %1185 = vmatmul.f32.gmra.mxu0 %v865
        %v1186 = vpop.f32.mrf.mxu0
        %v1187 = vadd.f32 0.0, %v1186
        %1188 = vmatmul.f32.gmra.mxu0 %v868
        %v1189 = vpop.f32.mrf.mxu0
        %v1190 = vadd.f32 0.0, %v1189
        %1191 = vmatmul.f32.gmra.mxu0 %v871
        %v1192 = vpop.f32.mrf.mxu0
        %v1193 = vadd.f32 0.0, %v1192
        %1194 = vmatmul.f32.gmra.mxu0 %v874
        %v1195 = vpop.f32.mrf.mxu0
        %v1196 = vadd.f32 0.0, %v1195
        %1197 = vmatmul.f32.gmra.mxu0 %v877
        %v1198 = vpop.f32.mrf.mxu0
        %v1199 = vadd.f32 0.0, %v1198
        %1200 = vmatmul.f32.gmra.mxu0 %v880
        %v1201 = vpop.f32.mrf.mxu0
        %v1202 = vadd.f32 0.0, %v1201
        %1203 = vmatmul.f32.gmra.mxu0 %v883
        %v1204 = vpop.f32.mrf.mxu0
        %v1205 = vadd.f32 0.0, %v1204
        %1206 = vmatmul.f32.gmra.mxu0 %v886
        %v1207 = vpop.f32.mrf.mxu0
        %v1208 = vadd.f32 0.0, %v1207
        %1209 = vmatmul.f32.gmra.mxu0 %v889
        %v1210 = vpop.f32.mrf.mxu0
        %v1211 = vadd.f32 0.0, %v1210
        %1212 = vmatmul.f32.gmra.mxu0 %v892
        %v1213 = vpop.f32.mrf.mxu0
        %v1214 = vadd.f32 0.0, %v1213
        %1215 = vmatmul.f32.gmra.mxu0 %v895
        %v1216 = vpop.f32.mrf.mxu0
        %v1217 = vadd.f32 0.0, %v1216
        %1218 = vmatmul.f32.gmra.mxu0 %v898
        %v1219 = vpop.f32.mrf.mxu0
        %v1220 = vadd.f32 0.0, %v1219
        %1221 = vmatmul.f32.gmra.mxu0 %v901
        %v1222 = vpop.f32.mrf.mxu0
        %v1223 = vadd.f32 0.0, %v1222
        %1224 = vmatmul.f32.gmra.mxu0 %v904
        %v1225 = vpop.f32.mrf.mxu0
        %v1226 = vadd.f32 0.0, %v1225
        %1227 = vmatmul.f32.gmra.mxu0 %v907
        %v1228 = vpop.f32.mrf.mxu0
        %v1229 = vadd.f32 0.0, %v1228
        %1230 = vmatmul.f32.gmra.mxu0 %v910
        %v1231 = vpop.f32.mrf.mxu0
        %v1232 = vadd.f32 0.0, %v1231
        %1233 = vmatmul.f32.gmra.mxu0 %v913
        %v1234 = vpop.f32.mrf.mxu0
        %v1235 = vadd.f32 0.0, %v1234
        %1236 = vmatmul.f32.gmra.mxu0 %v916
        %v1237 = vpop.f32.mrf.mxu0
        %v1238 = vadd.f32 0.0, %v1237
        %1239 = vmatmul.f32.gmra.mxu0 %v919
        %v1240 = vpop.f32.mrf.mxu0
        %v1241 = vadd.f32 0.0, %v1240
        %1242 = vmatmul.f32.gmra.mxu0 %v922
        %v1243 = vpop.f32.mrf.mxu0
        %v1244 = vadd.f32 0.0, %v1243
        %1245 = vmatmul.f32.gmra.mxu0 %v925
        %v1246 = vpop.f32.mrf.mxu0
        %v1247 = vadd.f32 0.0, %v1246
        %1248 = vdwg.mxu0
        %v1249 = vlaneseq
        %v1250 = vshrl.u32 %v1249, 7
        %v1251 = vadd.s32 %v1250, 8
        %v1252 = vadd.s32 %v1250, 16
        %v1253 = vadd.s32 %v1250, 24
        %v1254 = vadd.s32 %v1250, 32
        %v1255 = vadd.s32 %v1250, 40
        %v1256 = vadd.s32 %v1250, 48
        %v1257 = vadd.s32 %v1250, 56
        %v1258 = vadd.s32 %v1250, 64
        %v1259 = vadd.s32 %v1250, 72
        %v1260 = vadd.s32 %v1250, 80
        %v1261 = vadd.s32 %v1250, 88
        %v1262 = vadd.s32 %v1250, 96
        %v1263 = vadd.s32 %v1250, 104
        %v1264 = vadd.s32 %v1250, 112
        %v1265 = vadd.s32 %v1250, 120
        %v1266 = vadd.s32 %v1250, 128
        %v1267 = vadd.s32 %v1250, 136
        %v1268 = vadd.s32 %v1250, 144
        %v1269 = vadd.s32 %v1250, 152
        %v1270 = vadd.s32 %v1250, 160
        %v1271 = vadd.s32 %v1250, 168
        %v1272 = vadd.s32 %v1250, 176
        %v1273 = vadd.s32 %v1250, 184
        %v1274 = vadd.s32 %v1250, 192
        %v1275 = vadd.s32 %v1250, 200
        %v1276 = vadd.s32 %v1250, 208
        %v1277 = vadd.s32 %v1250, 216
        %v1278 = vadd.s32 %v1250, 224
        %v1279 = vadd.s32 %v1250, 232
        %v1280 = vadd.s32 %v1250, 240
        %v1281 = vadd.s32 %v1250, 248
        %v1282 = vlaneseq
        %v1283 = vand.u32 %v1282, 127
        %v1284 = vadd.s32 %v1283, 128
        %vm1349 = vcmask 1040384
        %v1350 = vrot.slane %v1041, 7
        %v1351 = vrot.slane %v1154, 7
        %v1352 = vrot.slane %v1044, 7
        %v1353 = vsel %vm1349, %v1350, %v1352
        %v1354 = vrot.slane %v1157, 7
        %v1355 = vsel %vm1349, %v1351, %v1354
        %v1356 = vrot.slane %v1047, 7
        %v1357 = vsel %vm1349, %v1352, %v1356
        %v1358 = vrot.slane %v1160, 7
        %v1359 = vsel %vm1349, %v1354, %v1358
        %v1360 = vrot.slane %v1050, 7
        %v1361 = vsel %vm1349, %v1356, %v1360
        %v1362 = vrot.slane %v1163, 7
        %v1363 = vsel %vm1349, %v1358, %v1362
        %v1364 = vrot.slane %v1053, 7
        %v1365 = vsel %vm1349, %v1360, %v1364
        %v1366 = vrot.slane %v1166, 7
        %v1367 = vsel %vm1349, %v1362, %v1366
        %v1368 = vrot.slane %v1056, 7
        %v1369 = vsel %vm1349, %v1364, %v1368
        %v1370 = vrot.slane %v1169, 7
        %v1371 = vsel %vm1349, %v1366, %v1370
        %v1372 = vrot.slane %v1059, 7
        %v1373 = vsel %vm1349, %v1368, %v1372
        %v1374 = vrot.slane %v1172, 7
        %v1375 = vsel %vm1349, %v1370, %v1374
        %v1376 = vrot.slane %v1062, 7
        %v1377 = vsel %vm1349, %v1372, %v1376
        %v1378 = vrot.slane %v1175, 7
        %v1379 = vsel %vm1349, %v1374, %v1378
        %v1380 = vrot.slane %v1065, 7
        %v1381 = vsel %vm1349, %v1376, %v1380
        %v1382 = vrot.slane %v1178, 7
        %v1383 = vsel %vm1349, %v1378, %v1382
        %v1384 = vrot.slane %v1068, 7
        %v1385 = vsel %vm1349, %v1380, %v1384
        %v1386 = vrot.slane %v1181, 7
        %v1387 = vsel %vm1349, %v1382, %v1386
        %v1388 = vrot.slane %v1071, 7
        %v1389 = vsel %vm1349, %v1384, %v1388
        %v1390 = vrot.slane %v1184, 7
        %v1391 = vsel %vm1349, %v1386, %v1390
        %v1392 = vrot.slane %v1074, 7
        %v1393 = vsel %vm1349, %v1388, %v1392
        %v1394 = vrot.slane %v1187, 7
        %v1395 = vsel %vm1349, %v1390, %v1394
        %v1396 = vrot.slane %v1077, 7
        %v1397 = vsel %vm1349, %v1392, %v1396
        %v1398 = vrot.slane %v1190, 7
        %v1399 = vsel %vm1349, %v1394, %v1398
        %v1400 = vrot.slane %v1080, 7
        %v1401 = vsel %vm1349, %v1396, %v1400
        %v1402 = vrot.slane %v1193, 7
        %v1403 = vsel %vm1349, %v1398, %v1402
        %v1404 = vrot.slane %v1083, 7
        %v1405 = vsel %vm1349, %v1400, %v1404
        %v1406 = vrot.slane %v1196, 7
        %v1407 = vsel %vm1349, %v1402, %v1406
        %v1408 = vrot.slane %v1086, 7
        %v1409 = vsel %vm1349, %v1404, %v1408
        %v1410 = vrot.slane %v1199, 7
        %v1411 = vsel %vm1349, %v1406, %v1410
        %v1412 = vrot.slane %v1089, 7
        %v1413 = vsel %vm1349, %v1408, %v1412
        %v1414 = vrot.slane %v1202, 7
        %v1415 = vsel %vm1349, %v1410, %v1414
        %v1416 = vrot.slane %v1092, 7
        %v1417 = vsel %vm1349, %v1412, %v1416
        %v1418 = vrot.slane %v1205, 7
        %v1419 = vsel %vm1349, %v1414, %v1418
        %v1420 = vrot.slane %v1095, 7
        %v1421 = vsel %vm1349, %v1416, %v1420
        %v1422 = vrot.slane %v1208, 7
        %v1423 = vsel %vm1349, %v1418, %v1422
        %v1424 = vrot.slane %v1098, 7
        %v1425 = vsel %vm1349, %v1420, %v1424
        %v1426 = vrot.slane %v1211, 7
        %v1427 = vsel %vm1349, %v1422, %v1426
        %v1428 = vrot.slane %v1101, 7
        %v1429 = vsel %vm1349, %v1424, %v1428
        %v1430 = vrot.slane %v1214, 7
        %v1431 = vsel %vm1349, %v1426, %v1430
        %v1432 = vrot.slane %v1104, 7
        %v1433 = vsel %vm1349, %v1428, %v1432
        %v1434 = vrot.slane %v1217, 7
        %v1435 = vsel %vm1349, %v1430, %v1434
        %v1436 = vrot.slane %v1107, 7
        %v1437 = vsel %vm1349, %v1432, %v1436
        %v1438 = vrot.slane %v1220, 7
        %v1439 = vsel %vm1349, %v1434, %v1438
        %v1440 = vrot.slane %v1110, 7
        %v1441 = vsel %vm1349, %v1436, %v1440
        %v1442 = vrot.slane %v1223, 7
        %v1443 = vsel %vm1349, %v1438, %v1442
        %v1444 = vrot.slane %v1113, 7
        %v1445 = vsel %vm1349, %v1440, %v1444
        %v1446 = vrot.slane %v1226, 7
        %v1447 = vsel %vm1349, %v1442, %v1446
        %v1448 = vrot.slane %v1116, 7
        %v1449 = vsel %vm1349, %v1444, %v1448
        %v1450 = vrot.slane %v1229, 7
        %v1451 = vsel %vm1349, %v1446, %v1450
        %v1452 = vrot.slane %v1119, 7
        %v1453 = vsel %vm1349, %v1448, %v1452
        %v1454 = vrot.slane %v1232, 7
        %v1455 = vsel %vm1349, %v1450, %v1454
        %v1456 = vrot.slane %v1122, 7
        %v1457 = vsel %vm1349, %v1452, %v1456
        %v1458 = vrot.slane %v1235, 7
        %v1459 = vsel %vm1349, %v1454, %v1458
        %v1460 = vrot.slane %v1125, 7
        %v1461 = vsel %vm1349, %v1456, %v1460
        %v1462 = vrot.slane %v1238, 7
        %v1463 = vsel %vm1349, %v1458, %v1462
        %v1464 = vrot.slane %v1128, 7
        %v1465 = vsel %vm1349, %v1460, %v1464
        %v1466 = vrot.slane %v1241, 7
        %v1467 = vsel %vm1349, %v1462, %v1466
        %v1468 = vrot.slane %v1131, 7
        %v1469 = vsel %vm1349, %v1464, %v1468
        %v1470 = vrot.slane %v1244, 7
        %v1471 = vsel %vm1349, %v1466, %v1470
        %v1472 = vrot.slane %v1134, 7
        %v1473 = vsel %vm1349, %v1468, %v1472
        %v1474 = vrot.slane %v1247, 7
        %v1475 = vsel %vm1349, %v1470, %v1474
        %v1478 = vsel %vm1349, 0.0, %v1350
        %v1479 = vsel %vm1349, 0.0, %v1351
        %1482 = vrot.lane.b32.xlu0 %v1478, 1
        %v1483 = vpop.permute.xlu0 %1482
        %1484 = vrot.lane.b32.xlu0 %v1479, 1
        %v1485 = vpop.permute.xlu0 %1484
        %1486 = vrot.lane.b32.xlu0 %v1353, 1
        %v1487 = vpop.permute.xlu0 %1486
        %1488 = vrot.lane.b32.xlu0 %v1355, 1
        %v1489 = vpop.permute.xlu0 %1488
        %1490 = vrot.lane.b32.xlu0 %v1357, 1
        %v1491 = vpop.permute.xlu0 %1490
        %1492 = vrot.lane.b32.xlu0 %v1359, 1
        %v1493 = vpop.permute.xlu0 %1492
        %1494 = vrot.lane.b32.xlu0 %v1361, 1
        %v1495 = vpop.permute.xlu0 %1494
        %1496 = vrot.lane.b32.xlu0 %v1363, 1
        %v1497 = vpop.permute.xlu0 %1496
        %1498 = vrot.lane.b32.xlu0 %v1365, 1
        %v1499 = vpop.permute.xlu0 %1498
        %1500 = vrot.lane.b32.xlu0 %v1367, 1
        %v1501 = vpop.permute.xlu0 %1500
        %1502 = vrot.lane.b32.xlu0 %v1369, 1
        %v1503 = vpop.permute.xlu0 %1502
        %1504 = vrot.lane.b32.xlu0 %v1371, 1
        %v1505 = vpop.permute.xlu0 %1504
        %1506 = vrot.lane.b32.xlu0 %v1373, 1
        %v1507 = vpop.permute.xlu0 %1506
        %1508 = vrot.lane.b32.xlu0 %v1375, 1
        %v1509 = vpop.permute.xlu0 %1508
        %1510 = vrot.lane.b32.xlu0 %v1377, 1
        %v1511 = vpop.permute.xlu0 %1510
        %1512 = vrot.lane.b32.xlu0 %v1379, 1
        %v1513 = vpop.permute.xlu0 %1512
        %1514 = vrot.lane.b32.xlu0 %v1381, 1
        %v1515 = vpop.permute.xlu0 %1514
        %1516 = vrot.lane.b32.xlu0 %v1383, 1
        %v1517 = vpop.permute.xlu0 %1516
        %1518 = vrot.lane.b32.xlu0 %v1385, 1
        %v1519 = vpop.permute.xlu0 %1518
        %1520 = vrot.lane.b32.xlu0 %v1387, 1
        %v1521 = vpop.permute.xlu0 %1520
        %1522 = vrot.lane.b32.xlu0 %v1389, 1
        %v1523 = vpop.permute.xlu0 %1522
        %1524 = vrot.lane.b32.xlu0 %v1391, 1
        %v1525 = vpop.permute.xlu0 %1524
        %1526 = vrot.lane.b32.xlu0 %v1393, 1
        %v1527 = vpop.permute.xlu0 %1526
        %1528 = vrot.lane.b32.xlu0 %v1395, 1
        %v1529 = vpop.permute.xlu0 %1528
        %1530 = vrot.lane.b32.xlu0 %v1397, 1
        %v1531 = vpop.permute.xlu0 %1530
        %1532 = vrot.lane.b32.xlu0 %v1399, 1
        %v1533 = vpop.permute.xlu0 %1532
        %1534 = vrot.lane.b32.xlu0 %v1401, 1
        %v1535 = vpop.permute.xlu0 %1534
        %1536 = vrot.lane.b32.xlu0 %v1403, 1
        %v1537 = vpop.permute.xlu0 %1536
        %1538 = vrot.lane.b32.xlu0 %v1405, 1
        %v1539 = vpop.permute.xlu0 %1538
        %1540 = vrot.lane.b32.xlu0 %v1407, 1
        %v1541 = vpop.permute.xlu0 %1540
        %1542 = vrot.lane.b32.xlu0 %v1409, 1
        %v1543 = vpop.permute.xlu0 %1542
        %1544 = vrot.lane.b32.xlu0 %v1411, 1
        %v1545 = vpop.permute.xlu0 %1544
        %1546 = vrot.lane.b32.xlu0 %v1413, 1
        %v1547 = vpop.permute.xlu0 %1546
        %1548 = vrot.lane.b32.xlu0 %v1415, 1
        %v1549 = vpop.permute.xlu0 %1548
        %1550 = vrot.lane.b32.xlu0 %v1417, 1
        %v1551 = vpop.permute.xlu0 %1550
        %1552 = vrot.lane.b32.xlu0 %v1419, 1
        %v1553 = vpop.permute.xlu0 %1552
        %1554 = vrot.lane.b32.xlu0 %v1421, 1
        %v1555 = vpop.permute.xlu0 %1554
        %1556 = vrot.lane.b32.xlu0 %v1423, 1
        %v1557 = vpop.permute.xlu0 %1556
        %1558 = vrot.lane.b32.xlu0 %v1425, 1
        %v1559 = vpop.permute.xlu0 %1558
        %1560 = vrot.lane.b32.xlu0 %v1427, 1
        %v1561 = vpop.permute.xlu0 %1560
        %1562 = vrot.lane.b32.xlu0 %v1429, 1
        %v1563 = vpop.permute.xlu0 %1562
        %1564 = vrot.lane.b32.xlu0 %v1431, 1
        %v1565 = vpop.permute.xlu0 %1564
        %1566 = vrot.lane.b32.xlu0 %v1433, 1
        %v1567 = vpop.permute.xlu0 %1566
        %1568 = vrot.lane.b32.xlu0 %v1435, 1
        %v1569 = vpop.permute.xlu0 %1568
        %1570 = vrot.lane.b32.xlu0 %v1437, 1
        %v1571 = vpop.permute.xlu0 %1570
        %1572 = vrot.lane.b32.xlu0 %v1439, 1
        %v1573 = vpop.permute.xlu0 %1572
        %1574 = vrot.lane.b32.xlu0 %v1441, 1
        %v1575 = vpop.permute.xlu0 %1574
        %1576 = vrot.lane.b32.xlu0 %v1443, 1
        %v1577 = vpop.permute.xlu0 %1576
        %1578 = vrot.lane.b32.xlu0 %v1445, 1
        %v1579 = vpop.permute.xlu0 %1578
        %1580 = vrot.lane.b32.xlu0 %v1447, 1
        %v1581 = vpop.permute.xlu0 %1580
        %1582 = vrot.lane.b32.xlu0 %v1449, 1
        %v1583 = vpop.permute.xlu0 %1582
        %1584 = vrot.lane.b32.xlu0 %v1451, 1
        %v1585 = vpop.permute.xlu0 %1584
        %1586 = vrot.lane.b32.xlu0 %v1453, 1
        %v1587 = vpop.permute.xlu0 %1586
        %1588 = vrot.lane.b32.xlu0 %v1455, 1
        %v1589 = vpop.permute.xlu0 %1588
        %1590 = vrot.lane.b32.xlu0 %v1457, 1
        %v1591 = vpop.permute.xlu0 %1590
        %1592 = vrot.lane.b32.xlu0 %v1459, 1
        %v1593 = vpop.permute.xlu0 %1592
        %1594 = vrot.lane.b32.xlu0 %v1461, 1
        %v1595 = vpop.permute.xlu0 %1594
        %1596 = vrot.lane.b32.xlu0 %v1463, 1
        %v1597 = vpop.permute.xlu0 %1596
        %1598 = vrot.lane.b32.xlu0 %v1465, 1
        %v1599 = vpop.permute.xlu0 %1598
        %1600 = vrot.lane.b32.xlu0 %v1467, 1
        %v1601 = vpop.permute.xlu0 %1600
        %1602 = vrot.lane.b32.xlu0 %v1469, 1
        %v1603 = vpop.permute.xlu0 %1602
        %1604 = vrot.lane.b32.xlu0 %v1471, 1
        %v1605 = vpop.permute.xlu0 %1604
        %1606 = vrot.lane.b32.xlu0 %v1473, 1
        %v1607 = vpop.permute.xlu0 %1606
        %1608 = vrot.lane.b32.xlu0 %v1475, 1
        %v1609 = vpop.permute.xlu0 %1608
        %vm1610 = vcmask 7168
        %v1611 = vsel %vm1610, %v1483, %v1485
        %v1612 = vsel %vm1610, %v1487, %v1489
        %v1613 = vsel %vm1610, %v1491, %v1493
        %v1614 = vsel %vm1610, %v1495, %v1497
        %v1615 = vsel %vm1610, %v1499, %v1501
        %v1616 = vsel %vm1610, %v1503, %v1505
        %v1617 = vsel %vm1610, %v1507, %v1509
        %v1618 = vsel %vm1610, %v1511, %v1513
        %v1619 = vsel %vm1610, %v1515, %v1517
        %v1620 = vsel %vm1610, %v1519, %v1521
        %v1621 = vsel %vm1610, %v1523, %v1525
        %v1622 = vsel %vm1610, %v1527, %v1529
        %v1623 = vsel %vm1610, %v1531, %v1533
        %v1624 = vsel %vm1610, %v1535, %v1537
        %v1625 = vsel %vm1610, %v1539, %v1541
        %v1626 = vsel %vm1610, %v1543, %v1545
        %v1627 = vsel %vm1610, %v1547, %v1549
        %v1628 = vsel %vm1610, %v1551, %v1553
        %v1629 = vsel %vm1610, %v1555, %v1557
        %v1630 = vsel %vm1610, %v1559, %v1561
        %v1631 = vsel %vm1610, %v1563, %v1565
        %v1632 = vsel %vm1610, %v1567, %v1569
        %v1633 = vsel %vm1610, %v1571, %v1573
        %v1634 = vsel %vm1610, %v1575, %v1577
        %v1635 = vsel %vm1610, %v1579, %v1581
        %v1636 = vsel %vm1610, %v1583, %v1585
        %v1637 = vsel %vm1610, %v1587, %v1589
        %v1638 = vsel %vm1610, %v1591, %v1593
        %v1639 = vsel %vm1610, %v1595, %v1597
        %v1640 = vsel %vm1610, %v1599, %v1601
        %v1641 = vsel %vm1610, %v1603, %v1605
        %v1642 = vsel %vm1610, %v1607, %v1609
        %v1707 = vsel %vm1610, 0.0, %v1483
        %v1708 = vsel %vm1610, 0.0, %v1487
        %v1709 = vsel %vm1610, 0.0, %v1491
        %v1710 = vsel %vm1610, 0.0, %v1495
        %v1711 = vsel %vm1610, 0.0, %v1499
        %v1712 = vsel %vm1610, 0.0, %v1503
        %v1713 = vsel %vm1610, 0.0, %v1507
        %v1714 = vsel %vm1610, 0.0, %v1511
        %v1715 = vsel %vm1610, 0.0, %v1515
        %v1716 = vsel %vm1610, 0.0, %v1519
        %v1717 = vsel %vm1610, 0.0, %v1523
        %v1718 = vsel %vm1610, 0.0, %v1527
        %v1719 = vsel %vm1610, 0.0, %v1531
        %v1720 = vsel %vm1610, 0.0, %v1535
        %v1721 = vsel %vm1610, 0.0, %v1539
        %v1722 = vsel %vm1610, 0.0, %v1543
        %v1723 = vsel %vm1610, 0.0, %v1547
        %v1724 = vsel %vm1610, 0.0, %v1551
        %v1725 = vsel %vm1610, 0.0, %v1555
        %v1726 = vsel %vm1610, 0.0, %v1559
        %v1727 = vsel %vm1610, 0.0, %v1563
        %v1728 = vsel %vm1610, 0.0, %v1567
        %v1729 = vsel %vm1610, 0.0, %v1571
        %v1730 = vsel %vm1610, 0.0, %v1575
        %v1731 = vsel %vm1610, 0.0, %v1579
        %v1732 = vsel %vm1610, 0.0, %v1583
        %v1733 = vsel %vm1610, 0.0, %v1587
        %v1734 = vsel %vm1610, 0.0, %v1591
        %v1735 = vsel %vm1610, 0.0, %v1595
        %v1736 = vsel %vm1610, 0.0, %v1599
        %v1737 = vsel %vm1610, 0.0, %v1603
        %v1738 = vsel %vm1610, 0.0, %v1607
        %v1739 = vadd.f32 %v1707, %v1041
        %v1740 = vadd.f32 %v1611, %v1154
        %v1741 = vadd.f32 %v1708, %v1044
        %v1742 = vadd.f32 %v1612, %v1157
        %v1743 = vadd.f32 %v1709, %v1047
        %v1744 = vadd.f32 %v1613, %v1160
        %v1745 = vadd.f32 %v1710, %v1050
        %v1746 = vadd.f32 %v1614, %v1163
        %v1747 = vadd.f32 %v1711, %v1053
        %v1748 = vadd.f32 %v1615, %v1166
        %v1749 = vadd.f32 %v1712, %v1056
        %v1750 = vadd.f32 %v1616, %v1169
        %v1751 = vadd.f32 %v1713, %v1059
        %v1752 = vadd.f32 %v1617, %v1172
        %v1753 = vadd.f32 %v1714, %v1062
        %v1754 = vadd.f32 %v1618, %v1175
        %v1755 = vadd.f32 %v1715, %v1065
        %v1756 = vadd.f32 %v1619, %v1178
        %v1757 = vadd.f32 %v1716, %v1068
        %v1758 = vadd.f32 %v1620, %v1181
        %v1759 = vadd.f32 %v1717, %v1071
        %v1760 = vadd.f32 %v1621, %v1184
        %v1761 = vadd.f32 %v1718, %v1074
        %v1762 = vadd.f32 %v1622, %v1187
        %v1763 = vadd.f32 %v1719, %v1077
        %v1764 = vadd.f32 %v1623, %v1190
        %v1765 = vadd.f32 %v1720, %v1080
        %v1766 = vadd.f32 %v1624, %v1193
        %v1767 = vadd.f32 %v1721, %v1083
        %v1768 = vadd.f32 %v1625, %v1196
        %v1769 = vadd.f32 %v1722, %v1086
        %v1770 = vadd.f32 %v1626, %v1199
        %v1771 = vadd.f32 %v1723, %v1089
        %v1772 = vadd.f32 %v1627, %v1202
        %v1773 = vadd.f32 %v1724, %v1092
        %v1774 = vadd.f32 %v1628, %v1205
        %v1775 = vadd.f32 %v1725, %v1095
        %v1776 = vadd.f32 %v1629, %v1208
        %v1777 = vadd.f32 %v1726, %v1098
        %v1778 = vadd.f32 %v1630, %v1211
        %v1779 = vadd.f32 %v1727, %v1101
        %v1780 = vadd.f32 %v1631, %v1214
        %v1781 = vadd.f32 %v1728, %v1104
        %v1782 = vadd.f32 %v1632, %v1217
        %v1783 = vadd.f32 %v1729, %v1107
        %v1784 = vadd.f32 %v1633, %v1220
        %v1785 = vadd.f32 %v1730, %v1110
        %v1786 = vadd.f32 %v1634, %v1223
        %v1787 = vadd.f32 %v1731, %v1113
        %v1788 = vadd.f32 %v1635, %v1226
        %v1789 = vadd.f32 %v1732, %v1116
        %v1790 = vadd.f32 %v1636, %v1229
        %v1791 = vadd.f32 %v1733, %v1119
        %v1792 = vadd.f32 %v1637, %v1232
        %v1793 = vadd.f32 %v1734, %v1122
        %v1794 = vadd.f32 %v1638, %v1235
        %v1795 = vadd.f32 %v1735, %v1125
        %v1796 = vadd.f32 %v1639, %v1238
        %v1797 = vadd.f32 %v1736, %v1128
        %v1798 = vadd.f32 %v1640, %v1241
        %v1799 = vadd.f32 %v1737, %v1131
        %v1800 = vadd.f32 %v1641, %v1244
        %v1801 = vadd.f32 %v1738, %v1134
        %v1802 = vadd.f32 %v1642, %v1247
        %vm1803 = vcmask 1046528
        %v1804 = vrot.slane %v1041, 1
        %v1805 = vrot.slane %v1044, 1
        %v1806 = vsel %vm1803, %v1804, %v1805
        %v1807 = vrot.slane %v1154, 1
        %v1808 = vrot.slane %v1157, 1
        %v1809 = vsel %vm1803, %v1807, %v1808
        %v1810 = vrot.slane %v1047, 1
        %v1811 = vsel %vm1803, %v1805, %v1810
        %v1812 = vrot.slane %v1160, 1
        %v1813 = vsel %vm1803, %v1808, %v1812
        %v1814 = vrot.slane %v1050, 1
        %v1815 = vsel %vm1803, %v1810, %v1814
        %v1816 = vrot.slane %v1163, 1
        %v1817 = vsel %vm1803, %v1812, %v1816
        %v1818 = vrot.slane %v1053, 1
        %v1819 = vsel %vm1803, %v1814, %v1818
        %v1820 = vrot.slane %v1166, 1
        %v1821 = vsel %vm1803, %v1816, %v1820
        %v1822 = vrot.slane %v1056, 1
        %v1823 = vsel %vm1803, %v1818, %v1822
        %v1824 = vrot.slane %v1169, 1
        %v1825 = vsel %vm1803, %v1820, %v1824
        %v1826 = vrot.slane %v1059, 1
        %v1827 = vsel %vm1803, %v1822, %v1826
        %v1828 = vrot.slane %v1172, 1
        %v1829 = vsel %vm1803, %v1824, %v1828
        %v1830 = vrot.slane %v1062, 1
        %v1831 = vsel %vm1803, %v1826, %v1830
        %v1832 = vrot.slane %v1175, 1
        %v1833 = vsel %vm1803, %v1828, %v1832
        %v1834 = vrot.slane %v1065, 1
        %v1835 = vsel %vm1803, %v1830, %v1834
        %v1836 = vrot.slane %v1178, 1
        %v1837 = vsel %vm1803, %v1832, %v1836
        %v1838 = vrot.slane %v1068, 1
        %v1839 = vsel %vm1803, %v1834, %v1838
        %v1840 = vrot.slane %v1181, 1
        %v1841 = vsel %vm1803, %v1836, %v1840
        %v1842 = vrot.slane %v1071, 1
        %v1843 = vsel %vm1803, %v1838, %v1842
        %v1844 = vrot.slane %v1184, 1
        %v1845 = vsel %vm1803, %v1840, %v1844
        %v1846 = vrot.slane %v1074, 1
        %v1847 = vsel %vm1803, %v1842, %v1846
        %v1848 = vrot.slane %v1187, 1
        %v1849 = vsel %vm1803, %v1844, %v1848
        %v1850 = vrot.slane %v1077, 1
        %v1851 = vsel %vm1803, %v1846, %v1850
        %v1852 = vrot.slane %v1190, 1
        %v1853 = vsel %vm1803, %v1848, %v1852
        %v1854 = vrot.slane %v1080, 1
        %v1855 = vsel %vm1803, %v1850, %v1854
        %v1856 = vrot.slane %v1193, 1
        %v1857 = vsel %vm1803, %v1852, %v1856
        %v1858 = vrot.slane %v1083, 1
        %v1859 = vsel %vm1803, %v1854, %v1858
        %v1860 = vrot.slane %v1196, 1
        %v1861 = vsel %vm1803, %v1856, %v1860
        %v1862 = vrot.slane %v1086, 1
        %v1863 = vsel %vm1803, %v1858, %v1862
        %v1864 = vrot.slane %v1199, 1
        %v1865 = vsel %vm1803, %v1860, %v1864
        %v1866 = vrot.slane %v1089, 1
        %v1867 = vsel %vm1803, %v1862, %v1866
        %v1868 = vrot.slane %v1202, 1
        %v1869 = vsel %vm1803, %v1864, %v1868
        %v1870 = vrot.slane %v1092, 1
        %v1871 = vsel %vm1803, %v1866, %v1870
        %v1872 = vrot.slane %v1205, 1
        %v1873 = vsel %vm1803, %v1868, %v1872
        %v1874 = vrot.slane %v1095, 1
        %v1875 = vsel %vm1803, %v1870, %v1874
        %v1876 = vrot.slane %v1208, 1
        %v1877 = vsel %vm1803, %v1872, %v1876
        %v1878 = vrot.slane %v1098, 1
        %v1879 = vsel %vm1803, %v1874, %v1878
        %v1880 = vrot.slane %v1211, 1
        %v1881 = vsel %vm1803, %v1876, %v1880
        %v1882 = vrot.slane %v1101, 1
        %v1883 = vsel %vm1803, %v1878, %v1882
        %v1884 = vrot.slane %v1214, 1
        %v1885 = vsel %vm1803, %v1880, %v1884
        %v1886 = vrot.slane %v1104, 1
        %v1887 = vsel %vm1803, %v1882, %v1886
        %v1888 = vrot.slane %v1217, 1
        %v1889 = vsel %vm1803, %v1884, %v1888
        %v1890 = vrot.slane %v1107, 1
        %v1891 = vsel %vm1803, %v1886, %v1890
        %v1892 = vrot.slane %v1220, 1
        %v1893 = vsel %vm1803, %v1888, %v1892
        %v1894 = vrot.slane %v1110, 1
        %v1895 = vsel %vm1803, %v1890, %v1894
        %v1896 = vrot.slane %v1223, 1
        %v1897 = vsel %vm1803, %v1892, %v1896
        %v1898 = vrot.slane %v1113, 1
        %v1899 = vsel %vm1803, %v1894, %v1898
        %v1900 = vrot.slane %v1226, 1
        %v1901 = vsel %vm1803, %v1896, %v1900
        %v1902 = vrot.slane %v1116, 1
        %v1903 = vsel %vm1803, %v1898, %v1902
        %v1904 = vrot.slane %v1229, 1
        %v1905 = vsel %vm1803, %v1900, %v1904
        %v1906 = vrot.slane %v1119, 1
        %v1907 = vsel %vm1803, %v1902, %v1906
        %v1908 = vrot.slane %v1232, 1
        %v1909 = vsel %vm1803, %v1904, %v1908
        %v1910 = vrot.slane %v1122, 1
        %v1911 = vsel %vm1803, %v1906, %v1910
        %v1912 = vrot.slane %v1235, 1
        %v1913 = vsel %vm1803, %v1908, %v1912
        %v1914 = vrot.slane %v1125, 1
        %v1915 = vsel %vm1803, %v1910, %v1914
        %v1916 = vrot.slane %v1238, 1
        %v1917 = vsel %vm1803, %v1912, %v1916
        %v1918 = vrot.slane %v1128, 1
        %v1919 = vsel %vm1803, %v1914, %v1918
        %v1920 = vrot.slane %v1241, 1
        %v1921 = vsel %vm1803, %v1916, %v1920
        %v1922 = vrot.slane %v1131, 1
        %v1923 = vsel %vm1803, %v1918, %v1922
        %v1924 = vrot.slane %v1244, 1
        %v1925 = vsel %vm1803, %v1920, %v1924
        %v1926 = vrot.slane %v1134, 1
        %v1927 = vsel %vm1803, %v1922, %v1926
        %v1928 = vrot.slane %v1247, 1
        %v1929 = vsel %vm1803, %v1924, %v1928
        %v1932 = vsel %vm1803, %v1926, 0.0
        %v1933 = vsel %vm1803, %v1928, 0.0
        %1936 = vrot.lane.b32.xlu0 %v1806, 127
        %v1937 = vpop.permute.xlu0 %1936
        %1938 = vrot.lane.b32.xlu0 %v1809, 127
        %v1939 = vpop.permute.xlu0 %1938
        %1940 = vrot.lane.b32.xlu0 %v1811, 127
        %v1941 = vpop.permute.xlu0 %1940
        %1942 = vrot.lane.b32.xlu0 %v1813, 127
        %v1943 = vpop.permute.xlu0 %1942
        %1944 = vrot.lane.b32.xlu0 %v1815, 127
        %v1945 = vpop.permute.xlu0 %1944
        %1946 = vrot.lane.b32.xlu0 %v1817, 127
        %v1947 = vpop.permute.xlu0 %1946
        %1948 = vrot.lane.b32.xlu0 %v1819, 127
        %v1949 = vpop.permute.xlu0 %1948
        %1950 = vrot.lane.b32.xlu0 %v1821, 127
        %v1951 = vpop.permute.xlu0 %1950
        %1952 = vrot.lane.b32.xlu0 %v1823, 127
        %v1953 = vpop.permute.xlu0 %1952
        %1954 = vrot.lane.b32.xlu0 %v1825, 127
        %v1955 = vpop.permute.xlu0 %1954
        %1956 = vrot.lane.b32.xlu0 %v1827, 127
        %v1957 = vpop.permute.xlu0 %1956
        %1958 = vrot.lane.b32.xlu0 %v1829, 127
        %v1959 = vpop.permute.xlu0 %1958
        %1960 = vrot.lane.b32.xlu0 %v1831, 127
        %v1961 = vpop.permute.xlu0 %1960
        %1962 = vrot.lane.b32.xlu0 %v1833, 127
        %v1963 = vpop.permute.xlu0 %1962
        %1964 = vrot.lane.b32.xlu0 %v1835, 127
        %v1965 = vpop.permute.xlu0 %1964
        %1966 = vrot.lane.b32.xlu0 %v1837, 127
        %v1967 = vpop.permute.xlu0 %1966
        %1968 = vrot.lane.b32.xlu0 %v1839, 127
        %v1969 = vpop.permute.xlu0 %1968
        %1970 = vrot.lane.b32.xlu0 %v1841, 127
        %v1971 = vpop.permute.xlu0 %1970
        %1972 = vrot.lane.b32.xlu0 %v1843, 127
        %v1973 = vpop.permute.xlu0 %1972
        %1974 = vrot.lane.b32.xlu0 %v1845, 127
        %v1975 = vpop.permute.xlu0 %1974
        %1976 = vrot.lane.b32.xlu0 %v1847, 127
        %v1977 = vpop.permute.xlu0 %1976
        %1978 = vrot.lane.b32.xlu0 %v1849, 127
        %v1979 = vpop.permute.xlu0 %1978
        %1980 = vrot.lane.b32.xlu0 %v1851, 127
        %v1981 = vpop.permute.xlu0 %1980
        %1982 = vrot.lane.b32.xlu0 %v1853, 127
        %v1983 = vpop.permute.xlu0 %1982
        %1984 = vrot.lane.b32.xlu0 %v1855, 127
        %v1985 = vpop.permute.xlu0 %1984
        %1986 = vrot.lane.b32.xlu0 %v1857, 127
        %v1987 = vpop.permute.xlu0 %1986
        %1988 = vrot.lane.b32.xlu0 %v1859, 127
        %v1989 = vpop.permute.xlu0 %1988
        %1990 = vrot.lane.b32.xlu0 %v1861, 127
        %v1991 = vpop.permute.xlu0 %1990
        %1992 = vrot.lane.b32.xlu0 %v1863, 127
        %v1993 = vpop.permute.xlu0 %1992
        %1994 = vrot.lane.b32.xlu0 %v1865, 127
        %v1995 = vpop.permute.xlu0 %1994
        %1996 = vrot.lane.b32.xlu0 %v1867, 127
        %v1997 = vpop.permute.xlu0 %1996
        %1998 = vrot.lane.b32.xlu0 %v1869, 127
        %v1999 = vpop.permute.xlu0 %1998
        %2000 = vrot.lane.b32.xlu0 %v1871, 127
        %v2001 = vpop.permute.xlu0 %2000
        %2002 = vrot.lane.b32.xlu0 %v1873, 127
        %v2003 = vpop.permute.xlu0 %2002
        %2004 = vrot.lane.b32.xlu0 %v1875, 127
        %v2005 = vpop.permute.xlu0 %2004
        %2006 = vrot.lane.b32.xlu0 %v1877, 127
        %v2007 = vpop.permute.xlu0 %2006
        %2008 = vrot.lane.b32.xlu0 %v1879, 127
        %v2009 = vpop.permute.xlu0 %2008
        %2010 = vrot.lane.b32.xlu0 %v1881, 127
        %v2011 = vpop.permute.xlu0 %2010
        %2012 = vrot.lane.b32.xlu0 %v1883, 127
        %v2013 = vpop.permute.xlu0 %2012
        %2014 = vrot.lane.b32.xlu0 %v1885, 127
        %v2015 = vpop.permute.xlu0 %2014
        %2016 = vrot.lane.b32.xlu0 %v1887, 127
        %v2017 = vpop.permute.xlu0 %2016
        %2018 = vrot.lane.b32.xlu0 %v1889, 127
        %v2019 = vpop.permute.xlu0 %2018
        %2020 = vrot.lane.b32.xlu0 %v1891, 127
        %v2021 = vpop.permute.xlu0 %2020
        %2022 = vrot.lane.b32.xlu0 %v1893, 127
        %v2023 = vpop.permute.xlu0 %2022
        %2024 = vrot.lane.b32.xlu0 %v1895, 127
        %v2025 = vpop.permute.xlu0 %2024
        %2026 = vrot.lane.b32.xlu0 %v1897, 127
        %v2027 = vpop.permute.xlu0 %2026
        %2028 = vrot.lane.b32.xlu0 %v1899, 127
        %v2029 = vpop.permute.xlu0 %2028
        %2030 = vrot.lane.b32.xlu0 %v1901, 127
        %v2031 = vpop.permute.xlu0 %2030
        %2032 = vrot.lane.b32.xlu0 %v1903, 127
        %v2033 = vpop.permute.xlu0 %2032
        %2034 = vrot.lane.b32.xlu0 %v1905, 127
        %v2035 = vpop.permute.xlu0 %2034
        %2036 = vrot.lane.b32.xlu0 %v1907, 127
        %v2037 = vpop.permute.xlu0 %2036
        %2038 = vrot.lane.b32.xlu0 %v1909, 127
        %v2039 = vpop.permute.xlu0 %2038
        %2040 = vrot.lane.b32.xlu0 %v1911, 127
        %v2041 = vpop.permute.xlu0 %2040
        %2042 = vrot.lane.b32.xlu0 %v1913, 127
        %v2043 = vpop.permute.xlu0 %2042
        %2044 = vrot.lane.b32.xlu0 %v1915, 127
        %v2045 = vpop.permute.xlu0 %2044
        %2046 = vrot.lane.b32.xlu0 %v1917, 127
        %v2047 = vpop.permute.xlu0 %2046
        %2048 = vrot.lane.b32.xlu0 %v1919, 127
        %v2049 = vpop.permute.xlu0 %2048
        %2050 = vrot.lane.b32.xlu0 %v1921, 127
        %v2051 = vpop.permute.xlu0 %2050
        %2052 = vrot.lane.b32.xlu0 %v1923, 127
        %v2053 = vpop.permute.xlu0 %2052
        %2054 = vrot.lane.b32.xlu0 %v1925, 127
        %v2055 = vpop.permute.xlu0 %2054
        %2056 = vrot.lane.b32.xlu0 %v1927, 127
        %v2057 = vpop.permute.xlu0 %2056
        %2058 = vrot.lane.b32.xlu0 %v1929, 127
        %v2059 = vpop.permute.xlu0 %2058
        %2060 = vrot.lane.b32.xlu0 %v1932, 127
        %v2061 = vpop.permute.xlu0 %2060
        %2062 = vrot.lane.b32.xlu0 %v1933, 127
        %v2063 = vpop.permute.xlu0 %2062
        %vm2064 = vcmask 1039360
        %v2065 = vsel %vm2064, %v1937, %v1939
        %v2066 = vsel %vm2064, %v1941, %v1943
        %v2067 = vsel %vm2064, %v1945, %v1947
        %v2068 = vsel %vm2064, %v1949, %v1951
        %v2069 = vsel %vm2064, %v1953, %v1955
        %v2070 = vsel %vm2064, %v1957, %v1959
        %v2071 = vsel %vm2064, %v1961, %v1963
        %v2072 = vsel %vm2064, %v1965, %v1967
        %v2073 = vsel %vm2064, %v1969, %v1971
        %v2074 = vsel %vm2064, %v1973, %v1975
        %v2075 = vsel %vm2064, %v1977, %v1979
        %v2076 = vsel %vm2064, %v1981, %v1983
        %v2077 = vsel %vm2064, %v1985, %v1987
        %v2078 = vsel %vm2064, %v1989, %v1991
        %v2079 = vsel %vm2064, %v1993, %v1995
        %v2080 = vsel %vm2064, %v1997, %v1999
        %v2081 = vsel %vm2064, %v2001, %v2003
        %v2082 = vsel %vm2064, %v2005, %v2007
        %v2083 = vsel %vm2064, %v2009, %v2011
        %v2084 = vsel %vm2064, %v2013, %v2015
        %v2085 = vsel %vm2064, %v2017, %v2019
        %v2086 = vsel %vm2064, %v2021, %v2023
        %v2087 = vsel %vm2064, %v2025, %v2027
        %v2088 = vsel %vm2064, %v2029, %v2031
        %v2089 = vsel %vm2064, %v2033, %v2035
        %v2090 = vsel %vm2064, %v2037, %v2039
        %v2091 = vsel %vm2064, %v2041, %v2043
        %v2092 = vsel %vm2064, %v2045, %v2047
        %v2093 = vsel %vm2064, %v2049, %v2051
        %v2094 = vsel %vm2064, %v2053, %v2055
        %v2095 = vsel %vm2064, %v2057, %v2059
        %v2096 = vsel %vm2064, %v2061, %v2063
        %v2161 = vsel %vm2064, %v1939, 0.0
        %v2162 = vsel %vm2064, %v1943, 0.0
        %v2163 = vsel %vm2064, %v1947, 0.0
        %v2164 = vsel %vm2064, %v1951, 0.0
        %v2165 = vsel %vm2064, %v1955, 0.0
        %v2166 = vsel %vm2064, %v1959, 0.0
        %v2167 = vsel %vm2064, %v1963, 0.0
        %v2168 = vsel %vm2064, %v1967, 0.0
        %v2169 = vsel %vm2064, %v1971, 0.0
        %v2170 = vsel %vm2064, %v1975, 0.0
        %v2171 = vsel %vm2064, %v1979, 0.0
        %v2172 = vsel %vm2064, %v1983, 0.0
        %v2173 = vsel %vm2064, %v1987, 0.0
        %v2174 = vsel %vm2064, %v1991, 0.0
        %v2175 = vsel %vm2064, %v1995, 0.0
        %v2176 = vsel %vm2064, %v1999, 0.0
        %v2177 = vsel %vm2064, %v2003, 0.0
        %v2178 = vsel %vm2064, %v2007, 0.0
        %v2179 = vsel %vm2064, %v2011, 0.0
        %v2180 = vsel %vm2064, %v2015, 0.0
        %v2181 = vsel %vm2064, %v2019, 0.0
        %v2182 = vsel %vm2064, %v2023, 0.0
        %v2183 = vsel %vm2064, %v2027, 0.0
        %v2184 = vsel %vm2064, %v2031, 0.0
        %v2185 = vsel %vm2064, %v2035, 0.0
        %v2186 = vsel %vm2064, %v2039, 0.0
        %v2187 = vsel %vm2064, %v2043, 0.0
        %v2188 = vsel %vm2064, %v2047, 0.0
        %v2189 = vsel %vm2064, %v2051, 0.0
        %v2190 = vsel %vm2064, %v2055, 0.0
        %v2191 = vsel %vm2064, %v2059, 0.0
        %v2192 = vsel %vm2064, %v2063, 0.0
        %v2193 = vadd.f32 %v1739, %v2065
        %v2194 = vadd.f32 %v1740, %v2161
        %v2195 = vadd.f32 %v1741, %v2066
        %v2196 = vadd.f32 %v1742, %v2162
        %v2197 = vadd.f32 %v1743, %v2067
        %v2198 = vadd.f32 %v1744, %v2163
        %v2199 = vadd.f32 %v1745, %v2068
        %v2200 = vadd.f32 %v1746, %v2164
        %v2201 = vadd.f32 %v1747, %v2069
        %v2202 = vadd.f32 %v1748, %v2165
        %v2203 = vadd.f32 %v1749, %v2070
        %v2204 = vadd.f32 %v1750, %v2166
        %v2205 = vadd.f32 %v1751, %v2071
        %v2206 = vadd.f32 %v1752, %v2167
        %v2207 = vadd.f32 %v1753, %v2072
        %v2208 = vadd.f32 %v1754, %v2168
        %v2209 = vadd.f32 %v1755, %v2073
        %v2210 = vadd.f32 %v1756, %v2169
        %v2211 = vadd.f32 %v1757, %v2074
        %v2212 = vadd.f32 %v1758, %v2170
        %v2213 = vadd.f32 %v1759, %v2075
        %v2214 = vadd.f32 %v1760, %v2171
        %v2215 = vadd.f32 %v1761, %v2076
        %v2216 = vadd.f32 %v1762, %v2172
        %v2217 = vadd.f32 %v1763, %v2077
        %v2218 = vadd.f32 %v1764, %v2173
        %v2219 = vadd.f32 %v1765, %v2078
        %v2220 = vadd.f32 %v1766, %v2174
        %v2221 = vadd.f32 %v1767, %v2079
        %v2222 = vadd.f32 %v1768, %v2175
        %v2223 = vadd.f32 %v1769, %v2080
        %v2224 = vadd.f32 %v1770, %v2176
        %v2225 = vadd.f32 %v1771, %v2081
        %v2226 = vadd.f32 %v1772, %v2177
        %v2227 = vadd.f32 %v1773, %v2082
        %v2228 = vadd.f32 %v1774, %v2178
        %v2229 = vadd.f32 %v1775, %v2083
        %v2230 = vadd.f32 %v1776, %v2179
        %v2231 = vadd.f32 %v1777, %v2084
        %v2232 = vadd.f32 %v1778, %v2180
        %v2233 = vadd.f32 %v1779, %v2085
        %v2234 = vadd.f32 %v1780, %v2181
        %v2235 = vadd.f32 %v1781, %v2086
        %v2236 = vadd.f32 %v1782, %v2182
        %v2237 = vadd.f32 %v1783, %v2087
        %v2238 = vadd.f32 %v1784, %v2183
        %v2239 = vadd.f32 %v1785, %v2088
        %v2240 = vadd.f32 %v1786, %v2184
        %v2241 = vadd.f32 %v1787, %v2089
        %v2242 = vadd.f32 %v1788, %v2185
        %v2243 = vadd.f32 %v1789, %v2090
        %v2244 = vadd.f32 %v1790, %v2186
        %v2245 = vadd.f32 %v1791, %v2091
        %v2246 = vadd.f32 %v1792, %v2187
        %v2247 = vadd.f32 %v1793, %v2092
        %v2248 = vadd.f32 %v1794, %v2188
        %v2249 = vadd.f32 %v1795, %v2093
        %v2250 = vadd.f32 %v1796, %v2189
        %v2251 = vadd.f32 %v1797, %v2094
        %v2252 = vadd.f32 %v1798, %v2190
        %v2253 = vadd.f32 %v1799, %v2095
        %v2254 = vadd.f32 %v1800, %v2191
        %v2255 = vadd.f32 %v1801, %v2096
        %v2256 = vadd.f32 %v1802, %v2192
        %2321 = vrot.lane.b32.xlu0 %v2193, 112
        %v2322 = vpop.permute.xlu0 %2321
        %2323 = vrot.lane.b32.xlu0 %v2194, 112
        %v2324 = vpop.permute.xlu0 %2323
        %2325 = vrot.lane.b32.xlu0 %v2195, 112
        %v2326 = vpop.permute.xlu0 %2325
        %2327 = vrot.lane.b32.xlu0 %v2196, 112
        %v2328 = vpop.permute.xlu0 %2327
        %2329 = vrot.lane.b32.xlu0 %v2197, 112
        %v2330 = vpop.permute.xlu0 %2329
        %2331 = vrot.lane.b32.xlu0 %v2198, 112
        %v2332 = vpop.permute.xlu0 %2331
        %2333 = vrot.lane.b32.xlu0 %v2199, 112
        %v2334 = vpop.permute.xlu0 %2333
        %2335 = vrot.lane.b32.xlu0 %v2200, 112
        %v2336 = vpop.permute.xlu0 %2335
        %2337 = vrot.lane.b32.xlu0 %v2201, 112
        %v2338 = vpop.permute.xlu0 %2337
        %2339 = vrot.lane.b32.xlu0 %v2202, 112
        %v2340 = vpop.permute.xlu0 %2339
        %2341 = vrot.lane.b32.xlu0 %v2203, 112
        %v2342 = vpop.permute.xlu0 %2341
        %2343 = vrot.lane.b32.xlu0 %v2204, 112
        %v2344 = vpop.permute.xlu0 %2343
        %2345 = vrot.lane.b32.xlu0 %v2205, 112
        %v2346 = vpop.permute.xlu0 %2345
        %2347 = vrot.lane.b32.xlu0 %v2206, 112
        %v2348 = vpop.permute.xlu0 %2347
        %2349 = vrot.lane.b32.xlu0 %v2207, 112
        %v2350 = vpop.permute.xlu0 %2349
        %2351 = vrot.lane.b32.xlu0 %v2208, 112
        %v2352 = vpop.permute.xlu0 %2351
        %2353 = vrot.lane.b32.xlu0 %v2209, 112
        %v2354 = vpop.permute.xlu0 %2353
        %2355 = vrot.lane.b32.xlu0 %v2210, 112
        %v2356 = vpop.permute.xlu0 %2355
        %2357 = vrot.lane.b32.xlu0 %v2211, 112
        %v2358 = vpop.permute.xlu0 %2357
        %2359 = vrot.lane.b32.xlu0 %v2212, 112
        %v2360 = vpop.permute.xlu0 %2359
        %2361 = vrot.lane.b32.xlu0 %v2213, 112
        %v2362 = vpop.permute.xlu0 %2361
        %2363 = vrot.lane.b32.xlu0 %v2214, 112
        %v2364 = vpop.permute.xlu0 %2363
        %2365 = vrot.lane.b32.xlu0 %v2215, 112
        %v2366 = vpop.permute.xlu0 %2365
        %2367 = vrot.lane.b32.xlu0 %v2216, 112
        %v2368 = vpop.permute.xlu0 %2367
        %2369 = vrot.lane.b32.xlu0 %v2217, 112
        %v2370 = vpop.permute.xlu0 %2369
        %2371 = vrot.lane.b32.xlu0 %v2218, 112
        %v2372 = vpop.permute.xlu0 %2371
        %2373 = vrot.lane.b32.xlu0 %v2219, 112
        %v2374 = vpop.permute.xlu0 %2373
        %2375 = vrot.lane.b32.xlu0 %v2220, 112
        %v2376 = vpop.permute.xlu0 %2375
        %2377 = vrot.lane.b32.xlu0 %v2221, 112
        %v2378 = vpop.permute.xlu0 %2377
        %2379 = vrot.lane.b32.xlu0 %v2222, 112
        %v2380 = vpop.permute.xlu0 %2379
        %2381 = vrot.lane.b32.xlu0 %v2223, 112
        %v2382 = vpop.permute.xlu0 %2381
        %2383 = vrot.lane.b32.xlu0 %v2224, 112
        %v2384 = vpop.permute.xlu0 %2383
        %2385 = vrot.lane.b32.xlu0 %v2225, 112
        %v2386 = vpop.permute.xlu0 %2385
        %2387 = vrot.lane.b32.xlu0 %v2226, 112
        %v2388 = vpop.permute.xlu0 %2387
        %2389 = vrot.lane.b32.xlu0 %v2227, 112
        %v2390 = vpop.permute.xlu0 %2389
        %2391 = vrot.lane.b32.xlu0 %v2228, 112
        %v2392 = vpop.permute.xlu0 %2391
        %2393 = vrot.lane.b32.xlu0 %v2229, 112
        %v2394 = vpop.permute.xlu0 %2393
        %2395 = vrot.lane.b32.xlu0 %v2230, 112
        %v2396 = vpop.permute.xlu0 %2395
        %2397 = vrot.lane.b32.xlu0 %v2231, 112
        %v2398 = vpop.permute.xlu0 %2397
        %2399 = vrot.lane.b32.xlu0 %v2232, 112
        %v2400 = vpop.permute.xlu0 %2399
        %2401 = vrot.lane.b32.xlu0 %v2233, 112
        %v2402 = vpop.permute.xlu0 %2401
        %2403 = vrot.lane.b32.xlu0 %v2234, 112
        %v2404 = vpop.permute.xlu0 %2403
        %2405 = vrot.lane.b32.xlu0 %v2235, 112
        %v2406 = vpop.permute.xlu0 %2405
        %2407 = vrot.lane.b32.xlu0 %v2236, 112
        %v2408 = vpop.permute.xlu0 %2407
        %2409 = vrot.lane.b32.xlu0 %v2237, 112
        %v2410 = vpop.permute.xlu0 %2409
        %2411 = vrot.lane.b32.xlu0 %v2238, 112
        %v2412 = vpop.permute.xlu0 %2411
        %2413 = vrot.lane.b32.xlu0 %v2239, 112
        %v2414 = vpop.permute.xlu0 %2413
        %2415 = vrot.lane.b32.xlu0 %v2240, 112
        %v2416 = vpop.permute.xlu0 %2415
        %2417 = vrot.lane.b32.xlu0 %v2241, 112
        %v2418 = vpop.permute.xlu0 %2417
        %2419 = vrot.lane.b32.xlu0 %v2242, 112
        %v2420 = vpop.permute.xlu0 %2419
        %2421 = vrot.lane.b32.xlu0 %v2243, 112
        %v2422 = vpop.permute.xlu0 %2421
        %2423 = vrot.lane.b32.xlu0 %v2244, 112
        %v2424 = vpop.permute.xlu0 %2423
        %2425 = vrot.lane.b32.xlu0 %v2245, 112
        %v2426 = vpop.permute.xlu0 %2425
        %2427 = vrot.lane.b32.xlu0 %v2246, 112
        %v2428 = vpop.permute.xlu0 %2427
        %2429 = vrot.lane.b32.xlu0 %v2247, 112
        %v2430 = vpop.permute.xlu0 %2429
        %2431 = vrot.lane.b32.xlu0 %v2248, 112
        %v2432 = vpop.permute.xlu0 %2431
        %2433 = vrot.lane.b32.xlu0 %v2249, 112
        %v2434 = vpop.permute.xlu0 %2433
        %2435 = vrot.lane.b32.xlu0 %v2250, 112
        %v2436 = vpop.permute.xlu0 %2435
        %2437 = vrot.lane.b32.xlu0 %v2251, 112
        %v2438 = vpop.permute.xlu0 %2437
        %2439 = vrot.lane.b32.xlu0 %v2252, 112
        %v2440 = vpop.permute.xlu0 %2439
        %2441 = vrot.lane.b32.xlu0 %v2253, 112
        %v2442 = vpop.permute.xlu0 %2441
        %2443 = vrot.lane.b32.xlu0 %v2254, 112
        %v2444 = vpop.permute.xlu0 %2443
        %2445 = vrot.lane.b32.xlu0 %v2255, 112
        %v2446 = vpop.permute.xlu0 %2445
        %2447 = vrot.lane.b32.xlu0 %v2256, 112
        %v2448 = vpop.permute.xlu0 %2447
        %vm2449 = vcmask 916480
        %v2450 = vsel %vm2449, %v2322, %v2324
        %v2451 = vsel %vm2449, %v2326, %v2328
        %v2452 = vsel %vm2449, %v2330, %v2332
        %v2453 = vsel %vm2449, %v2334, %v2336
        %v2454 = vsel %vm2449, %v2338, %v2340
        %v2455 = vsel %vm2449, %v2342, %v2344
        %v2456 = vsel %vm2449, %v2346, %v2348
        %v2457 = vsel %vm2449, %v2350, %v2352
        %v2458 = vsel %vm2449, %v2354, %v2356
        %v2459 = vsel %vm2449, %v2358, %v2360
        %v2460 = vsel %vm2449, %v2362, %v2364
        %v2461 = vsel %vm2449, %v2366, %v2368
        %v2462 = vsel %vm2449, %v2370, %v2372
        %v2463 = vsel %vm2449, %v2374, %v2376
        %v2464 = vsel %vm2449, %v2378, %v2380
        %v2465 = vsel %vm2449, %v2382, %v2384
        %v2466 = vsel %vm2449, %v2386, %v2388
        %v2467 = vsel %vm2449, %v2390, %v2392
        %v2468 = vsel %vm2449, %v2394, %v2396
        %v2469 = vsel %vm2449, %v2398, %v2400
        %v2470 = vsel %vm2449, %v2402, %v2404
        %v2471 = vsel %vm2449, %v2406, %v2408
        %v2472 = vsel %vm2449, %v2410, %v2412
        %v2473 = vsel %vm2449, %v2414, %v2416
        %v2474 = vsel %vm2449, %v2418, %v2420
        %v2475 = vsel %vm2449, %v2422, %v2424
        %v2476 = vsel %vm2449, %v2426, %v2428
        %v2477 = vsel %vm2449, %v2430, %v2432
        %v2478 = vsel %vm2449, %v2434, %v2436
        %v2479 = vsel %vm2449, %v2438, %v2440
        %v2480 = vsel %vm2449, %v2442, %v2444
        %v2481 = vsel %vm2449, %v2446, %v2448
        %v2546 = vsel %vm2449, %v2324, 0.0
        %v2547 = vsel %vm2449, %v2328, 0.0
        %v2548 = vsel %vm2449, %v2332, 0.0
        %v2549 = vsel %vm2449, %v2336, 0.0
        %v2550 = vsel %vm2449, %v2340, 0.0
        %v2551 = vsel %vm2449, %v2344, 0.0
        %v2552 = vsel %vm2449, %v2348, 0.0
        %v2553 = vsel %vm2449, %v2352, 0.0
        %v2554 = vsel %vm2449, %v2356, 0.0
        %v2555 = vsel %vm2449, %v2360, 0.0
        %v2556 = vsel %vm2449, %v2364, 0.0
        %v2557 = vsel %vm2449, %v2368, 0.0
        %v2558 = vsel %vm2449, %v2372, 0.0
        %v2559 = vsel %vm2449, %v2376, 0.0
        %v2560 = vsel %vm2449, %v2380, 0.0
        %v2561 = vsel %vm2449, %v2384, 0.0
        %v2562 = vsel %vm2449, %v2388, 0.0
        %v2563 = vsel %vm2449, %v2392, 0.0
        %v2564 = vsel %vm2449, %v2396, 0.0
        %v2565 = vsel %vm2449, %v2400, 0.0
        %v2566 = vsel %vm2449, %v2404, 0.0
        %v2567 = vsel %vm2449, %v2408, 0.0
        %v2568 = vsel %vm2449, %v2412, 0.0
        %v2569 = vsel %vm2449, %v2416, 0.0
        %v2570 = vsel %vm2449, %v2420, 0.0
        %v2571 = vsel %vm2449, %v2424, 0.0
        %v2572 = vsel %vm2449, %v2428, 0.0
        %v2573 = vsel %vm2449, %v2432, 0.0
        %v2574 = vsel %vm2449, %v2436, 0.0
        %v2575 = vsel %vm2449, %v2440, 0.0
        %v2576 = vsel %vm2449, %v2444, 0.0
        %v2577 = vsel %vm2449, %v2448, 0.0
        %2578 = vrot.lane.b32.xlu0 %v2193, 111
        %v2579 = vpop.permute.xlu0 %2578
        %2580 = vrot.lane.b32.xlu0 %v2195, 111
        %v2581 = vpop.permute.xlu0 %2580
        %2582 = vrot.lane.b32.xlu0 %v2197, 111
        %v2583 = vpop.permute.xlu0 %2582
        %2584 = vrot.lane.b32.xlu0 %v2199, 111
        %v2585 = vpop.permute.xlu0 %2584
        %2586 = vrot.lane.b32.xlu0 %v2201, 111
        %v2587 = vpop.permute.xlu0 %2586
        %2588 = vrot.lane.b32.xlu0 %v2203, 111
        %v2589 = vpop.permute.xlu0 %2588
        %2590 = vrot.lane.b32.xlu0 %v2205, 111
        %v2591 = vpop.permute.xlu0 %2590
        %2592 = vrot.lane.b32.xlu0 %v2207, 111
        %v2593 = vpop.permute.xlu0 %2592
        %2594 = vrot.lane.b32.xlu0 %v2209, 111
        %v2595 = vpop.permute.xlu0 %2594
        %2596 = vrot.lane.b32.xlu0 %v2211, 111
        %v2597 = vpop.permute.xlu0 %2596
        %2598 = vrot.lane.b32.xlu0 %v2213, 111
        %v2599 = vpop.permute.xlu0 %2598
        %2600 = vrot.lane.b32.xlu0 %v2215, 111
        %v2601 = vpop.permute.xlu0 %2600
        %2602 = vrot.lane.b32.xlu0 %v2217, 111
        %v2603 = vpop.permute.xlu0 %2602
        %2604 = vrot.lane.b32.xlu0 %v2219, 111
        %v2605 = vpop.permute.xlu0 %2604
        %2606 = vrot.lane.b32.xlu0 %v2221, 111
        %v2607 = vpop.permute.xlu0 %2606
        %2608 = vrot.lane.b32.xlu0 %v2223, 111
        %v2609 = vpop.permute.xlu0 %2608
        %2610 = vrot.lane.b32.xlu0 %v2225, 111
        %v2611 = vpop.permute.xlu0 %2610
        %2612 = vrot.lane.b32.xlu0 %v2227, 111
        %v2613 = vpop.permute.xlu0 %2612
        %2614 = vrot.lane.b32.xlu0 %v2229, 111
        %v2615 = vpop.permute.xlu0 %2614
        %2616 = vrot.lane.b32.xlu0 %v2231, 111
        %v2617 = vpop.permute.xlu0 %2616
        %2618 = vrot.lane.b32.xlu0 %v2233, 111
        %v2619 = vpop.permute.xlu0 %2618
        %2620 = vrot.lane.b32.xlu0 %v2235, 111
        %v2621 = vpop.permute.xlu0 %2620
        %2622 = vrot.lane.b32.xlu0 %v2237, 111
        %v2623 = vpop.permute.xlu0 %2622
        %2624 = vrot.lane.b32.xlu0 %v2239, 111
        %v2625 = vpop.permute.xlu0 %2624
        %2626 = vrot.lane.b32.xlu0 %v2241, 111
        %v2627 = vpop.permute.xlu0 %2626
        %2628 = vrot.lane.b32.xlu0 %v2243, 111
        %v2629 = vpop.permute.xlu0 %2628
        %2630 = vrot.lane.b32.xlu0 %v2245, 111
        %v2631 = vpop.permute.xlu0 %2630
        %2632 = vrot.lane.b32.xlu0 %v2247, 111
        %v2633 = vpop.permute.xlu0 %2632
        %2634 = vrot.lane.b32.xlu0 %v2249, 111
        %v2635 = vpop.permute.xlu0 %2634
        %2636 = vrot.lane.b32.xlu0 %v2251, 111
        %v2637 = vpop.permute.xlu0 %2636
        %2638 = vrot.lane.b32.xlu0 %v2253, 111
        %v2639 = vpop.permute.xlu0 %2638
        %2640 = vrot.lane.b32.xlu0 %v2255, 111
        %v2641 = vpop.permute.xlu0 %2640
        %vm2674 = vcmask 908288
        %v2675 = vsel %vm2674, 0.0, %v2579
        %v2676 = vsel %vm2674, 0.0, %v2581
        %v2677 = vsel %vm2674, 0.0, %v2583
        %v2678 = vsel %vm2674, 0.0, %v2585
        %v2679 = vsel %vm2674, 0.0, %v2587
        %v2680 = vsel %vm2674, 0.0, %v2589
        %v2681 = vsel %vm2674, 0.0, %v2591
        %v2682 = vsel %vm2674, 0.0, %v2593
        %v2683 = vsel %vm2674, 0.0, %v2595
        %v2684 = vsel %vm2674, 0.0, %v2597
        %v2685 = vsel %vm2674, 0.0, %v2599
        %v2686 = vsel %vm2674, 0.0, %v2601
        %v2687 = vsel %vm2674, 0.0, %v2603
        %v2688 = vsel %vm2674, 0.0, %v2605
        %v2689 = vsel %vm2674, 0.0, %v2607
        %v2690 = vsel %vm2674, 0.0, %v2609
        %v2691 = vsel %vm2674, 0.0, %v2611
        %v2692 = vsel %vm2674, 0.0, %v2613
        %v2693 = vsel %vm2674, 0.0, %v2615
        %v2694 = vsel %vm2674, 0.0, %v2617
        %v2695 = vsel %vm2674, 0.0, %v2619
        %v2696 = vsel %vm2674, 0.0, %v2621
        %v2697 = vsel %vm2674, 0.0, %v2623
        %v2698 = vsel %vm2674, 0.0, %v2625
        %v2699 = vsel %vm2674, 0.0, %v2627
        %v2700 = vsel %vm2674, 0.0, %v2629
        %v2701 = vsel %vm2674, 0.0, %v2631
        %v2702 = vsel %vm2674, 0.0, %v2633
        %v2703 = vsel %vm2674, 0.0, %v2635
        %v2704 = vsel %vm2674, 0.0, %v2637
        %v2705 = vsel %vm2674, 0.0, %v2639
        %v2706 = vsel %vm2674, 0.0, %v2641
        %vm2707 = vcmp.lt.s32.totalorder %v1283, 240
        %vm2708 = vcmp.lt.s32.totalorder %v1284, 240
        %vm2709 = vcmp.eq.s32.totalorder %v1284, 255
        %v2710 = vsel %vm2709, 0.0, %v2675
        %v2711 = vsel %vm2709, 0.0, %v2676
        %v2712 = vsel %vm2709, 0.0, %v2677
        %v2713 = vsel %vm2709, 0.0, %v2678
        %v2714 = vsel %vm2709, 0.0, %v2679
        %v2715 = vsel %vm2709, 0.0, %v2680
        %v2716 = vsel %vm2709, 0.0, %v2681
        %v2717 = vsel %vm2709, 0.0, %v2682
        %v2718 = vsel %vm2709, 0.0, %v2683
        %v2719 = vsel %vm2709, 0.0, %v2684
        %v2720 = vsel %vm2709, 0.0, %v2685
        %v2721 = vsel %vm2709, 0.0, %v2686
        %v2722 = vsel %vm2709, 0.0, %v2687
        %v2723 = vsel %vm2709, 0.0, %v2688
        %v2724 = vsel %vm2709, 0.0, %v2689
        %v2725 = vsel %vm2709, 0.0, %v2690
        %v2726 = vsel %vm2709, 0.0, %v2691
        %v2727 = vsel %vm2709, 0.0, %v2692
        %v2728 = vsel %vm2709, 0.0, %v2693
        %v2729 = vsel %vm2709, 0.0, %v2694
        %v2730 = vsel %vm2709, 0.0, %v2695
        %v2731 = vsel %vm2709, 0.0, %v2696
        %v2732 = vsel %vm2709, 0.0, %v2697
        %v2733 = vsel %vm2709, 0.0, %v2698
        %v2734 = vsel %vm2709, 0.0, %v2699
        %v2735 = vsel %vm2709, 0.0, %v2700
        %v2736 = vsel %vm2709, 0.0, %v2701
        %v2737 = vsel %vm2709, 0.0, %v2702
        %v2738 = vsel %vm2709, 0.0, %v2703
        %v2739 = vsel %vm2709, 0.0, %v2704
        %v2740 = vsel %vm2709, 0.0, %v2705
        %v2741 = vsel %vm2709, 0.0, %v2706
        %v2742 = vsel %vm2707, %v2450, 0.0
        %v2743 = vsel %vm2708, %v2546, %v2710
        %v2744 = vsel %vm2707, %v2451, 0.0
        %v2745 = vsel %vm2708, %v2547, %v2711
        %v2746 = vsel %vm2707, %v2452, 0.0
        %v2747 = vsel %vm2708, %v2548, %v2712
        %v2748 = vsel %vm2707, %v2453, 0.0
        %v2749 = vsel %vm2708, %v2549, %v2713
        %v2750 = vsel %vm2707, %v2454, 0.0
        %v2751 = vsel %vm2708, %v2550, %v2714
        %v2752 = vsel %vm2707, %v2455, 0.0
        %v2753 = vsel %vm2708, %v2551, %v2715
        %v2754 = vsel %vm2707, %v2456, 0.0
        %v2755 = vsel %vm2708, %v2552, %v2716
        %v2756 = vsel %vm2707, %v2457, 0.0
        %v2757 = vsel %vm2708, %v2553, %v2717
        %v2758 = vsel %vm2707, %v2458, 0.0
        %v2759 = vsel %vm2708, %v2554, %v2718
        %v2760 = vsel %vm2707, %v2459, 0.0
        %v2761 = vsel %vm2708, %v2555, %v2719
        %v2762 = vsel %vm2707, %v2460, 0.0
        %v2763 = vsel %vm2708, %v2556, %v2720
        %v2764 = vsel %vm2707, %v2461, 0.0
        %v2765 = vsel %vm2708, %v2557, %v2721
        %v2766 = vsel %vm2707, %v2462, 0.0
        %v2767 = vsel %vm2708, %v2558, %v2722
        %v2768 = vsel %vm2707, %v2463, 0.0
        %v2769 = vsel %vm2708, %v2559, %v2723
        %v2770 = vsel %vm2707, %v2464, 0.0
        %v2771 = vsel %vm2708, %v2560, %v2724
        %v2772 = vsel %vm2707, %v2465, 0.0
        %v2773 = vsel %vm2708, %v2561, %v2725
        %v2774 = vsel %vm2707, %v2466, 0.0
        %v2775 = vsel %vm2708, %v2562, %v2726
        %v2776 = vsel %vm2707, %v2467, 0.0
        %v2777 = vsel %vm2708, %v2563, %v2727
        %v2778 = vsel %vm2707, %v2468, 0.0
        %v2779 = vsel %vm2708, %v2564, %v2728
        %v2780 = vsel %vm2707, %v2469, 0.0
        %v2781 = vsel %vm2708, %v2565, %v2729
        %v2782 = vsel %vm2707, %v2470, 0.0
        %v2783 = vsel %vm2708, %v2566, %v2730
        %v2784 = vsel %vm2707, %v2471, 0.0
        %v2785 = vsel %vm2708, %v2567, %v2731
        %v2786 = vsel %vm2707, %v2472, 0.0
        %v2787 = vsel %vm2708, %v2568, %v2732
        %v2788 = vsel %vm2707, %v2473, 0.0
        %v2789 = vsel %vm2708, %v2569, %v2733
        %v2790 = vsel %vm2707, %v2474, 0.0
        %v2791 = vsel %vm2708, %v2570, %v2734
        %v2792 = vsel %vm2707, %v2475, 0.0
        %v2793 = vsel %vm2708, %v2571, %v2735
        %v2794 = vsel %vm2707, %v2476, 0.0
        %v2795 = vsel %vm2708, %v2572, %v2736
        %v2796 = vsel %vm2707, %v2477, 0.0
        %v2797 = vsel %vm2708, %v2573, %v2737
        %v2798 = vsel %vm2707, %v2478, 0.0
        %v2799 = vsel %vm2708, %v2574, %v2738
        %v2800 = vsel %vm2707, %v2479, 0.0
        %v2801 = vsel %vm2708, %v2575, %v2739
        %v2802 = vsel %vm2707, %v2480, 0.0
        %v2803 = vsel %vm2708, %v2576, %v2740
        %v2804 = vsel %vm2707, %v2481, 0.0
        %v2805 = vsel %vm2708, %v2577, %v2741
        %v2812 = vrot.slane %v2742, 1
        %v2813 = vrot.slane %v2743, 1
        %v2814 = vrot.slane %v2744, 1
        %v2815 = vsel %vm1803, %v2812, %v2814
        %v2816 = vrot.slane %v2745, 1
        %v2817 = vsel %vm1803, %v2813, %v2816
        %v2818 = vrot.slane %v2746, 1
        %v2819 = vsel %vm1803, %v2814, %v2818
        %v2820 = vrot.slane %v2747, 1
        %v2821 = vsel %vm1803, %v2816, %v2820
        %v2828 = vsel %vm1803, 0.0, %v2812
        %v2829 = vsel %vm1803, 0.0, %v2813
        %vm2830 = vcmp.lt.s32.totalorder %v1250, 240
        %vm2831 = vcmp.lt.s32.totalorder %v1251, 240
        %vm2832 = vcmp.lt.s32.totalorder %v1252, 240
        %vm2833 = vcmp.lt.s32.totalorder %v1253, 240
        %vm2834 = vcmp.lt.s32.totalorder %v1254, 240
        %vm2835 = vcmp.lt.s32.totalorder %v1255, 240
        %vm2836 = vcmp.lt.s32.totalorder %v1256, 240
        %vm2837 = vcmp.lt.s32.totalorder %v1257, 240
        %vm2838 = vcmp.lt.s32.totalorder %v1258, 240
        %vm2839 = vcmp.lt.s32.totalorder %v1259, 240
        %vm2840 = vcmp.lt.s32.totalorder %v1260, 240
        %vm2841 = vcmp.lt.s32.totalorder %v1261, 240
        %vm2842 = vcmp.lt.s32.totalorder %v1262, 240
        %vm2843 = vcmp.lt.s32.totalorder %v1263, 240
        %vm2844 = vcmp.lt.s32.totalorder %v1264, 240
        %vm2845 = vcmp.lt.s32.totalorder %v1265, 240
        %vm2846 = vcmp.lt.s32.totalorder %v1266, 240
        %vm2847 = vcmp.lt.s32.totalorder %v1267, 240
        %vm2848 = vcmp.lt.s32.totalorder %v1268, 240
        %vm2849 = vcmp.lt.s32.totalorder %v1269, 240
        %vm2850 = vcmp.lt.s32.totalorder %v1270, 240
        %vm2851 = vcmp.lt.s32.totalorder %v1271, 240
        %vm2852 = vcmp.lt.s32.totalorder %v1272, 240
        %vm2853 = vcmp.lt.s32.totalorder %v1273, 240
        %vm2854 = vcmp.lt.s32.totalorder %v1274, 240
        %vm2855 = vcmp.lt.s32.totalorder %v1275, 240
        %vm2856 = vcmp.lt.s32.totalorder %v1276, 240
        %vm2857 = vcmp.lt.s32.totalorder %v1277, 240
        %vm2858 = vcmp.lt.s32.totalorder %v1278, 240
        %vm2859 = vcmp.lt.s32.totalorder %v1279, 240
        %vm2860 = vcmp.lt.s32.totalorder %v1280, 240
        %vm2861 = vcmp.lt.s32.totalorder %v1281, 240
        %vm2862 = vcmp.eq.s32.totalorder %v1279, 255
        %vm2863 = vcmp.eq.s32.totalorder %v1280, 255
        %vm2864 = vcmp.eq.s32.totalorder %v1281, 255
        %v2865 = vsel %vm2862, 0.0, %v2828
        %v2866 = vsel %vm2862, 0.0, %v2829
        %v2867 = vsel %vm2863, 0.0, %v2815
        %v2868 = vsel %vm2863, 0.0, %v2817
        %v2869 = vsel %vm2864, 0.0, %v2819
        %v2870 = vsel %vm2864, 0.0, %v2821
        %v2871 = vsel %vm2830, %v2746, 0.0
        %v2872 = vsel %vm2830, %v2747, 0.0
        %v2873 = vsel %vm2831, %v2748, 0.0
        %v2874 = vsel %vm2831, %v2749, 0.0
        %v2875 = vsel %vm2832, %v2750, 0.0
        %v2876 = vsel %vm2832, %v2751, 0.0
        %v2877 = vsel %vm2833, %v2752, 0.0
        %v2878 = vsel %vm2833, %v2753, 0.0
        %v2879 = vsel %vm2834, %v2754, 0.0
        %v2880 = vsel %vm2834, %v2755, 0.0
        %v2881 = vsel %vm2835, %v2756, 0.0
        %v2882 = vsel %vm2835, %v2757, 0.0
        %v2883 = vsel %vm2836, %v2758, 0.0
        %v2884 = vsel %vm2836, %v2759, 0.0
        %v2885 = vsel %vm2837, %v2760, 0.0
        %v2886 = vsel %vm2837, %v2761, 0.0
        %v2887 = vsel %vm2838, %v2762, 0.0
        %v2888 = vsel %vm2838, %v2763, 0.0
        %v2889 = vsel %vm2839, %v2764, 0.0
        %v2890 = vsel %vm2839, %v2765, 0.0
        %v2891 = vsel %vm2840, %v2766, 0.0
        %v2892 = vsel %vm2840, %v2767, 0.0
        %v2893 = vsel %vm2841, %v2768, 0.0
        %v2894 = vsel %vm2841, %v2769, 0.0
        %v2895 = vsel %vm2842, %v2770, 0.0
        %v2896 = vsel %vm2842, %v2771, 0.0
        %v2897 = vsel %vm2843, %v2772, 0.0
        %v2898 = vsel %vm2843, %v2773, 0.0
        %v2899 = vsel %vm2844, %v2774, 0.0
        %v2900 = vsel %vm2844, %v2775, 0.0
        %v2901 = vsel %vm2845, %v2776, 0.0
        %v2902 = vsel %vm2845, %v2777, 0.0
        %v2903 = vsel %vm2846, %v2778, 0.0
        %v2904 = vsel %vm2846, %v2779, 0.0
        %v2905 = vsel %vm2847, %v2780, 0.0
        %v2906 = vsel %vm2847, %v2781, 0.0
        %v2907 = vsel %vm2848, %v2782, 0.0
        %v2908 = vsel %vm2848, %v2783, 0.0
        %v2909 = vsel %vm2849, %v2784, 0.0
        %v2910 = vsel %vm2849, %v2785, 0.0
        %v2911 = vsel %vm2850, %v2786, 0.0
        %v2912 = vsel %vm2850, %v2787, 0.0
        %v2913 = vsel %vm2851, %v2788, 0.0
        %v2914 = vsel %vm2851, %v2789, 0.0
        %v2915 = vsel %vm2852, %v2790, 0.0
        %v2916 = vsel %vm2852, %v2791, 0.0
        %v2917 = vsel %vm2853, %v2792, 0.0
        %v2918 = vsel %vm2853, %v2793, 0.0
        %v2919 = vsel %vm2854, %v2794, 0.0
        %v2920 = vsel %vm2854, %v2795, 0.0
        %v2921 = vsel %vm2855, %v2796, 0.0
        %v2922 = vsel %vm2855, %v2797, 0.0
        %v2923 = vsel %vm2856, %v2798, 0.0
        %v2924 = vsel %vm2856, %v2799, 0.0
        %v2925 = vsel %vm2857, %v2800, 0.0
        %v2926 = vsel %vm2857, %v2801, 0.0
        %v2927 = vsel %vm2858, %v2802, 0.0
        %v2928 = vsel %vm2858, %v2803, 0.0
        %v2929 = vsel %vm2859, %v2804, %v2865
        %v2930 = vsel %vm2859, %v2805, %v2866
        %v2931 = vsel %vm2860, 0.0, %v2867
        %v2932 = vsel %vm2860, 0.0, %v2868
        %v2933 = vsel %vm2861, 0.0, %v2869
        %v2934 = vsel %vm2861, 0.0, %v2870
        %2935 = vrot.lane.b32.xlu0 %v2193, 16
        %v2936 = vpop.permute.xlu0 %2935
        %2937 = vrot.lane.b32.xlu0 %v2194, 16
        %v2938 = vpop.permute.xlu0 %2937
        %2939 = vrot.lane.b32.xlu0 %v2195, 16
        %v2940 = vpop.permute.xlu0 %2939
        %2941 = vrot.lane.b32.xlu0 %v2196, 16
        %v2942 = vpop.permute.xlu0 %2941
        %2943 = vrot.lane.b32.xlu0 %v2197, 16
        %v2944 = vpop.permute.xlu0 %2943
        %2945 = vrot.lane.b32.xlu0 %v2198, 16
        %v2946 = vpop.permute.xlu0 %2945
        %2947 = vrot.lane.b32.xlu0 %v2199, 16
        %v2948 = vpop.permute.xlu0 %2947
        %2949 = vrot.lane.b32.xlu0 %v2200, 16
        %v2950 = vpop.permute.xlu0 %2949
        %2951 = vrot.lane.b32.xlu0 %v2201, 16
        %v2952 = vpop.permute.xlu0 %2951
        %2953 = vrot.lane.b32.xlu0 %v2202, 16
        %v2954 = vpop.permute.xlu0 %2953
        %2955 = vrot.lane.b32.xlu0 %v2203, 16
        %v2956 = vpop.permute.xlu0 %2955
        %2957 = vrot.lane.b32.xlu0 %v2204, 16
        %v2958 = vpop.permute.xlu0 %2957
        %2959 = vrot.lane.b32.xlu0 %v2205, 16
        %v2960 = vpop.permute.xlu0 %2959
        %2961 = vrot.lane.b32.xlu0 %v2206, 16
        %v2962 = vpop.permute.xlu0 %2961
        %2963 = vrot.lane.b32.xlu0 %v2207, 16
        %v2964 = vpop.permute.xlu0 %2963
        %2965 = vrot.lane.b32.xlu0 %v2208, 16
        %v2966 = vpop.permute.xlu0 %2965
        %2967 = vrot.lane.b32.xlu0 %v2209, 16
        %v2968 = vpop.permute.xlu0 %2967
        %2969 = vrot.lane.b32.xlu0 %v2210, 16
        %v2970 = vpop.permute.xlu0 %2969
        %2971 = vrot.lane.b32.xlu0 %v2211, 16
        %v2972 = vpop.permute.xlu0 %2971
        %2973 = vrot.lane.b32.xlu0 %v2212, 16
        %v2974 = vpop.permute.xlu0 %2973
        %2975 = vrot.lane.b32.xlu0 %v2213, 16
        %v2976 = vpop.permute.xlu0 %2975
        %2977 = vrot.lane.b32.xlu0 %v2214, 16
        %v2978 = vpop.permute.xlu0 %2977
        %2979 = vrot.lane.b32.xlu0 %v2215, 16
        %v2980 = vpop.permute.xlu0 %2979
        %2981 = vrot.lane.b32.xlu0 %v2216, 16
        %v2982 = vpop.permute.xlu0 %2981
        %2983 = vrot.lane.b32.xlu0 %v2217, 16
        %v2984 = vpop.permute.xlu0 %2983
        %2985 = vrot.lane.b32.xlu0 %v2218, 16
        %v2986 = vpop.permute.xlu0 %2985
        %2987 = vrot.lane.b32.xlu0 %v2219, 16
        %v2988 = vpop.permute.xlu0 %2987
        %2989 = vrot.lane.b32.xlu0 %v2220, 16
        %v2990 = vpop.permute.xlu0 %2989
        %2991 = vrot.lane.b32.xlu0 %v2221, 16
        %v2992 = vpop.permute.xlu0 %2991
        %2993 = vrot.lane.b32.xlu0 %v2222, 16
        %v2994 = vpop.permute.xlu0 %2993
        %2995 = vrot.lane.b32.xlu0 %v2223, 16
        %v2996 = vpop.permute.xlu0 %2995
        %2997 = vrot.lane.b32.xlu0 %v2224, 16
        %v2998 = vpop.permute.xlu0 %2997
        %2999 = vrot.lane.b32.xlu0 %v2225, 16
        %v3000 = vpop.permute.xlu0 %2999
        %3001 = vrot.lane.b32.xlu0 %v2226, 16
        %v3002 = vpop.permute.xlu0 %3001
        %3003 = vrot.lane.b32.xlu0 %v2227, 16
        %v3004 = vpop.permute.xlu0 %3003
        %3005 = vrot.lane.b32.xlu0 %v2228, 16
        %v3006 = vpop.permute.xlu0 %3005
        %3007 = vrot.lane.b32.xlu0 %v2229, 16
        %v3008 = vpop.permute.xlu0 %3007
        %3009 = vrot.lane.b32.xlu0 %v2230, 16
        %v3010 = vpop.permute.xlu0 %3009
        %3011 = vrot.lane.b32.xlu0 %v2231, 16
        %v3012 = vpop.permute.xlu0 %3011
        %3013 = vrot.lane.b32.xlu0 %v2232, 16
        %v3014 = vpop.permute.xlu0 %3013
        %3015 = vrot.lane.b32.xlu0 %v2233, 16
        %v3016 = vpop.permute.xlu0 %3015
        %3017 = vrot.lane.b32.xlu0 %v2234, 16
        %v3018 = vpop.permute.xlu0 %3017
        %3019 = vrot.lane.b32.xlu0 %v2235, 16
        %v3020 = vpop.permute.xlu0 %3019
        %3021 = vrot.lane.b32.xlu0 %v2236, 16
        %v3022 = vpop.permute.xlu0 %3021
        %3023 = vrot.lane.b32.xlu0 %v2237, 16
        %v3024 = vpop.permute.xlu0 %3023
        %3025 = vrot.lane.b32.xlu0 %v2238, 16
        %v3026 = vpop.permute.xlu0 %3025
        %3027 = vrot.lane.b32.xlu0 %v2239, 16
        %v3028 = vpop.permute.xlu0 %3027
        %3029 = vrot.lane.b32.xlu0 %v2240, 16
        %v3030 = vpop.permute.xlu0 %3029
        %3031 = vrot.lane.b32.xlu0 %v2241, 16
        %v3032 = vpop.permute.xlu0 %3031
        %3033 = vrot.lane.b32.xlu0 %v2242, 16
        %v3034 = vpop.permute.xlu0 %3033
        %3035 = vrot.lane.b32.xlu0 %v2243, 16
        %v3036 = vpop.permute.xlu0 %3035
        %3037 = vrot.lane.b32.xlu0 %v2244, 16
        %v3038 = vpop.permute.xlu0 %3037
        %3039 = vrot.lane.b32.xlu0 %v2245, 16
        %v3040 = vpop.permute.xlu0 %3039
        %3041 = vrot.lane.b32.xlu0 %v2246, 16
        %v3042 = vpop.permute.xlu0 %3041
        %3043 = vrot.lane.b32.xlu0 %v2247, 16
        %v3044 = vpop.permute.xlu0 %3043
        %3045 = vrot.lane.b32.xlu0 %v2248, 16
        %v3046 = vpop.permute.xlu0 %3045
        %3047 = vrot.lane.b32.xlu0 %v2249, 16
        %v3048 = vpop.permute.xlu0 %3047
        %3049 = vrot.lane.b32.xlu0 %v2250, 16
        %v3050 = vpop.permute.xlu0 %3049
        %3051 = vrot.lane.b32.xlu0 %v2251, 16
        %v3052 = vpop.permute.xlu0 %3051
        %3053 = vrot.lane.b32.xlu0 %v2252, 16
        %v3054 = vpop.permute.xlu0 %3053
        %3055 = vrot.lane.b32.xlu0 %v2253, 16
        %v3056 = vpop.permute.xlu0 %3055
        %3057 = vrot.lane.b32.xlu0 %v2254, 16
        %v3058 = vpop.permute.xlu0 %3057
        %3059 = vrot.lane.b32.xlu0 %v2255, 16
        %v3060 = vpop.permute.xlu0 %3059
        %3061 = vrot.lane.b32.xlu0 %v2256, 16
        %v3062 = vpop.permute.xlu0 %3061
        %vm3063 = vcmask 130048
        %v3064 = vsel %vm3063, %v2936, %v2938
        %v3065 = vsel %vm3063, %v2940, %v2942
        %v3066 = vsel %vm3063, %v2944, %v2946
        %v3067 = vsel %vm3063, %v2948, %v2950
        %v3068 = vsel %vm3063, %v2952, %v2954
        %v3069 = vsel %vm3063, %v2956, %v2958
        %v3070 = vsel %vm3063, %v2960, %v2962
        %v3071 = vsel %vm3063, %v2964, %v2966
        %v3072 = vsel %vm3063, %v2968, %v2970
        %v3073 = vsel %vm3063, %v2972, %v2974
        %v3074 = vsel %vm3063, %v2976, %v2978
        %v3075 = vsel %vm3063, %v2980, %v2982
        %v3076 = vsel %vm3063, %v2984, %v2986
        %v3077 = vsel %vm3063, %v2988, %v2990
        %v3078 = vsel %vm3063, %v2992, %v2994
        %v3079 = vsel %vm3063, %v2996, %v2998
        %v3080 = vsel %vm3063, %v3000, %v3002
        %v3081 = vsel %vm3063, %v3004, %v3006
        %v3082 = vsel %vm3063, %v3008, %v3010
        %v3083 = vsel %vm3063, %v3012, %v3014
        %v3084 = vsel %vm3063, %v3016, %v3018
        %v3085 = vsel %vm3063, %v3020, %v3022
        %v3086 = vsel %vm3063, %v3024, %v3026
        %v3087 = vsel %vm3063, %v3028, %v3030
        %v3088 = vsel %vm3063, %v3032, %v3034
        %v3089 = vsel %vm3063, %v3036, %v3038
        %v3090 = vsel %vm3063, %v3040, %v3042
        %v3091 = vsel %vm3063, %v3044, %v3046
        %v3092 = vsel %vm3063, %v3048, %v3050
        %v3093 = vsel %vm3063, %v3052, %v3054
        %v3094 = vsel %vm3063, %v3056, %v3058
        %v3095 = vsel %vm3063, %v3060, %v3062
        %v3160 = vsel %vm3063, 0.0, %v2936
        %v3161 = vsel %vm3063, 0.0, %v2940
        %v3162 = vsel %vm3063, 0.0, %v2944
        %v3163 = vsel %vm3063, 0.0, %v2948
        %v3164 = vsel %vm3063, 0.0, %v2952
        %v3165 = vsel %vm3063, 0.0, %v2956
        %v3166 = vsel %vm3063, 0.0, %v2960
        %v3167 = vsel %vm3063, 0.0, %v2964
        %v3168 = vsel %vm3063, 0.0, %v2968
        %v3169 = vsel %vm3063, 0.0, %v2972
        %v3170 = vsel %vm3063, 0.0, %v2976
        %v3171 = vsel %vm3063, 0.0, %v2980
        %v3172 = vsel %vm3063, 0.0, %v2984
        %v3173 = vsel %vm3063, 0.0, %v2988
        %v3174 = vsel %vm3063, 0.0, %v2992
        %v3175 = vsel %vm3063, 0.0, %v2996
        %v3176 = vsel %vm3063, 0.0, %v3000
        %v3177 = vsel %vm3063, 0.0, %v3004
        %v3178 = vsel %vm3063, 0.0, %v3008
        %v3179 = vsel %vm3063, 0.0, %v3012
        %v3180 = vsel %vm3063, 0.0, %v3016
        %v3181 = vsel %vm3063, 0.0, %v3020
        %v3182 = vsel %vm3063, 0.0, %v3024
        %v3183 = vsel %vm3063, 0.0, %v3028
        %v3184 = vsel %vm3063, 0.0, %v3032
        %v3185 = vsel %vm3063, 0.0, %v3036
        %v3186 = vsel %vm3063, 0.0, %v3040
        %v3187 = vsel %vm3063, 0.0, %v3044
        %v3188 = vsel %vm3063, 0.0, %v3048
        %v3189 = vsel %vm3063, 0.0, %v3052
        %v3190 = vsel %vm3063, 0.0, %v3056
        %v3191 = vsel %vm3063, 0.0, %v3060
        %3192 = vrot.lane.b32.xlu0 %v2194, 17
        %v3193 = vpop.permute.xlu0 %3192
        %3194 = vrot.lane.b32.xlu0 %v2196, 17
        %v3195 = vpop.permute.xlu0 %3194
        %3196 = vrot.lane.b32.xlu0 %v2198, 17
        %v3197 = vpop.permute.xlu0 %3196
        %3198 = vrot.lane.b32.xlu0 %v2200, 17
        %v3199 = vpop.permute.xlu0 %3198
        %3200 = vrot.lane.b32.xlu0 %v2202, 17
        %v3201 = vpop.permute.xlu0 %3200
        %3202 = vrot.lane.b32.xlu0 %v2204, 17
        %v3203 = vpop.permute.xlu0 %3202
        %3204 = vrot.lane.b32.xlu0 %v2206, 17
        %v3205 = vpop.permute.xlu0 %3204
        %3206 = vrot.lane.b32.xlu0 %v2208, 17
        %v3207 = vpop.permute.xlu0 %3206
        %3208 = vrot.lane.b32.xlu0 %v2210, 17
        %v3209 = vpop.permute.xlu0 %3208
        %3210 = vrot.lane.b32.xlu0 %v2212, 17
        %v3211 = vpop.permute.xlu0 %3210
        %3212 = vrot.lane.b32.xlu0 %v2214, 17
        %v3213 = vpop.permute.xlu0 %3212
        %3214 = vrot.lane.b32.xlu0 %v2216, 17
        %v3215 = vpop.permute.xlu0 %3214
        %3216 = vrot.lane.b32.xlu0 %v2218, 17
        %v3217 = vpop.permute.xlu0 %3216
        %3218 = vrot.lane.b32.xlu0 %v2220, 17
        %v3219 = vpop.permute.xlu0 %3218
        %3220 = vrot.lane.b32.xlu0 %v2222, 17
        %v3221 = vpop.permute.xlu0 %3220
        %3222 = vrot.lane.b32.xlu0 %v2224, 17
        %v3223 = vpop.permute.xlu0 %3222
        %3224 = vrot.lane.b32.xlu0 %v2226, 17
        %v3225 = vpop.permute.xlu0 %3224
        %3226 = vrot.lane.b32.xlu0 %v2228, 17
        %v3227 = vpop.permute.xlu0 %3226
        %3228 = vrot.lane.b32.xlu0 %v2230, 17
        %v3229 = vpop.permute.xlu0 %3228
        %3230 = vrot.lane.b32.xlu0 %v2232, 17
        %v3231 = vpop.permute.xlu0 %3230
        %3232 = vrot.lane.b32.xlu0 %v2234, 17
        %v3233 = vpop.permute.xlu0 %3232
        %3234 = vrot.lane.b32.xlu0 %v2236, 17
        %v3235 = vpop.permute.xlu0 %3234
        %3236 = vrot.lane.b32.xlu0 %v2238, 17
        %v3237 = vpop.permute.xlu0 %3236
        %3238 = vrot.lane.b32.xlu0 %v2240, 17
        %v3239 = vpop.permute.xlu0 %3238
        %3240 = vrot.lane.b32.xlu0 %v2242, 17
        %v3241 = vpop.permute.xlu0 %3240
        %3242 = vrot.lane.b32.xlu0 %v2244, 17
        %v3243 = vpop.permute.xlu0 %3242
        %3244 = vrot.lane.b32.xlu0 %v2246, 17
        %v3245 = vpop.permute.xlu0 %3244
        %3246 = vrot.lane.b32.xlu0 %v2248, 17
        %v3247 = vpop.permute.xlu0 %3246
        %3248 = vrot.lane.b32.xlu0 %v2250, 17
        %v3249 = vpop.permute.xlu0 %3248
        %3250 = vrot.lane.b32.xlu0 %v2252, 17
        %v3251 = vpop.permute.xlu0 %3250
        %3252 = vrot.lane.b32.xlu0 %v2254, 17
        %v3253 = vpop.permute.xlu0 %3252
        %3254 = vrot.lane.b32.xlu0 %v2256, 17
        %v3255 = vpop.permute.xlu0 %3254
        %vm3288 = vcmask 138240
        %v3289 = vsel %vm3288, %v3193, 0.0
        %v3290 = vsel %vm3288, %v3195, 0.0
        %v3291 = vsel %vm3288, %v3197, 0.0
        %v3292 = vsel %vm3288, %v3199, 0.0
        %v3293 = vsel %vm3288, %v3201, 0.0
        %v3294 = vsel %vm3288, %v3203, 0.0
        %v3295 = vsel %vm3288, %v3205, 0.0
        %v3296 = vsel %vm3288, %v3207, 0.0
        %v3297 = vsel %vm3288, %v3209, 0.0
        %v3298 = vsel %vm3288, %v3211, 0.0
        %v3299 = vsel %vm3288, %v3213, 0.0
        %v3300 = vsel %vm3288, %v3215, 0.0
        %v3301 = vsel %vm3288, %v3217, 0.0
        %v3302 = vsel %vm3288, %v3219, 0.0
        %v3303 = vsel %vm3288, %v3221, 0.0
        %v3304 = vsel %vm3288, %v3223, 0.0
        %v3305 = vsel %vm3288, %v3225, 0.0
        %v3306 = vsel %vm3288, %v3227, 0.0
        %v3307 = vsel %vm3288, %v3229, 0.0
        %v3308 = vsel %vm3288, %v3231, 0.0
        %v3309 = vsel %vm3288, %v3233, 0.0
        %v3310 = vsel %vm3288, %v3235, 0.0
        %v3311 = vsel %vm3288, %v3237, 0.0
        %v3312 = vsel %vm3288, %v3239, 0.0
        %v3313 = vsel %vm3288, %v3241, 0.0
        %v3314 = vsel %vm3288, %v3243, 0.0
        %v3315 = vsel %vm3288, %v3245, 0.0
        %v3316 = vsel %vm3288, %v3247, 0.0
        %v3317 = vsel %vm3288, %v3249, 0.0
        %v3318 = vsel %vm3288, %v3251, 0.0
        %v3319 = vsel %vm3288, %v3253, 0.0
        %v3320 = vsel %vm3288, %v3255, 0.0
        %vm3321 = vcmp.ge.s32.totalorder %v1283, 16
        %vm3322 = vcmp.ge.s32.totalorder %v1284, 16
        %vm3323 = vcmp.eq.s32.totalorder %v1283, 0
        %v3324 = vsel %vm3323, 0.0, %v3289
        %v3325 = vsel %vm3323, 0.0, %v3290
        %v3326 = vsel %vm3323, 0.0, %v3291
        %v3327 = vsel %vm3323, 0.0, %v3292
        %v3328 = vsel %vm3323, 0.0, %v3293
        %v3329 = vsel %vm3323, 0.0, %v3294
        %v3330 = vsel %vm3323, 0.0, %v3295
        %v3331 = vsel %vm3323, 0.0, %v3296
        %v3332 = vsel %vm3323, 0.0, %v3297
        %v3333 = vsel %vm3323, 0.0, %v3298
        %v3334 = vsel %vm3323, 0.0, %v3299
        %v3335 = vsel %vm3323, 0.0, %v3300
        %v3336 = vsel %vm3323, 0.0, %v3301
        %v3337 = vsel %vm3323, 0.0, %v3302
        %v3338 = vsel %vm3323, 0.0, %v3303
        %v3339 = vsel %vm3323, 0.0, %v3304
        %v3340 = vsel %vm3323, 0.0, %v3305
        %v3341 = vsel %vm3323, 0.0, %v3306
        %v3342 = vsel %vm3323, 0.0, %v3307
        %v3343 = vsel %vm3323, 0.0, %v3308
        %v3344 = vsel %vm3323, 0.0, %v3309
        %v3345 = vsel %vm3323, 0.0, %v3310
        %v3346 = vsel %vm3323, 0.0, %v3311
        %v3347 = vsel %vm3323, 0.0, %v3312
        %v3348 = vsel %vm3323, 0.0, %v3313
        %v3349 = vsel %vm3323, 0.0, %v3314
        %v3350 = vsel %vm3323, 0.0, %v3315
        %v3351 = vsel %vm3323, 0.0, %v3316
        %v3352 = vsel %vm3323, 0.0, %v3317
        %v3353 = vsel %vm3323, 0.0, %v3318
        %v3354 = vsel %vm3323, 0.0, %v3319
        %v3355 = vsel %vm3323, 0.0, %v3320
        %v3356 = vsel %vm3321, %v3160, %v3324
        %v3357 = vsel %vm3322, %v3064, 0.0
        %v3358 = vsel %vm3321, %v3161, %v3325
        %v3359 = vsel %vm3322, %v3065, 0.0
        %v3360 = vsel %vm3321, %v3162, %v3326
        %v3361 = vsel %vm3322, %v3066, 0.0
        %v3362 = vsel %vm3321, %v3163, %v3327
        %v3363 = vsel %vm3322, %v3067, 0.0
        %v3364 = vsel %vm3321, %v3164, %v3328
        %v3365 = vsel %vm3322, %v3068, 0.0
        %v3366 = vsel %vm3321, %v3165, %v3329
        %v3367 = vsel %vm3322, %v3069, 0.0
        %v3368 = vsel %vm3321, %v3166, %v3330
        %v3369 = vsel %vm3322, %v3070, 0.0
        %v3370 = vsel %vm3321, %v3167, %v3331
        %v3371 = vsel %vm3322, %v3071, 0.0
        %v3372 = vsel %vm3321, %v3168, %v3332
        %v3373 = vsel %vm3322, %v3072, 0.0
        %v3374 = vsel %vm3321, %v3169, %v3333
        %v3375 = vsel %vm3322, %v3073, 0.0
        %v3376 = vsel %vm3321, %v3170, %v3334
        %v3377 = vsel %vm3322, %v3074, 0.0
        %v3378 = vsel %vm3321, %v3171, %v3335
        %v3379 = vsel %vm3322, %v3075, 0.0
        %v3380 = vsel %vm3321, %v3172, %v3336
        %v3381 = vsel %vm3322, %v3076, 0.0
        %v3382 = vsel %vm3321, %v3173, %v3337
        %v3383 = vsel %vm3322, %v3077, 0.0
        %v3384 = vsel %vm3321, %v3174, %v3338
        %v3385 = vsel %vm3322, %v3078, 0.0
        %v3386 = vsel %vm3321, %v3175, %v3339
        %v3387 = vsel %vm3322, %v3079, 0.0
        %v3388 = vsel %vm3321, %v3176, %v3340
        %v3389 = vsel %vm3322, %v3080, 0.0
        %v3390 = vsel %vm3321, %v3177, %v3341
        %v3391 = vsel %vm3322, %v3081, 0.0
        %v3392 = vsel %vm3321, %v3178, %v3342
        %v3393 = vsel %vm3322, %v3082, 0.0
        %v3394 = vsel %vm3321, %v3179, %v3343
        %v3395 = vsel %vm3322, %v3083, 0.0
        %v3396 = vsel %vm3321, %v3180, %v3344
        %v3397 = vsel %vm3322, %v3084, 0.0
        %v3398 = vsel %vm3321, %v3181, %v3345
        %v3399 = vsel %vm3322, %v3085, 0.0
        %v3400 = vsel %vm3321, %v3182, %v3346
        %v3401 = vsel %vm3322, %v3086, 0.0
        %v3402 = vsel %vm3321, %v3183, %v3347
        %v3403 = vsel %vm3322, %v3087, 0.0
        %v3404 = vsel %vm3321, %v3184, %v3348
        %v3405 = vsel %vm3322, %v3088, 0.0
        %v3406 = vsel %vm3321, %v3185, %v3349
        %v3407 = vsel %vm3322, %v3089, 0.0
        %v3408 = vsel %vm3321, %v3186, %v3350
        %v3409 = vsel %vm3322, %v3090, 0.0
        %v3410 = vsel %vm3321, %v3187, %v3351
        %v3411 = vsel %vm3322, %v3091, 0.0
        %v3412 = vsel %vm3321, %v3188, %v3352
        %v3413 = vsel %vm3322, %v3092, 0.0
        %v3414 = vsel %vm3321, %v3189, %v3353
        %v3415 = vsel %vm3322, %v3093, 0.0
        %v3416 = vsel %vm3321, %v3190, %v3354
        %v3417 = vsel %vm3322, %v3094, 0.0
        %v3418 = vsel %vm3321, %v3191, %v3355
        %v3419 = vsel %vm3322, %v3095, 0.0
        %v3426 = vrot.slane %v3414, 7
        %v3427 = vrot.slane %v3416, 7
        %v3428 = vsel %vm1349, %v3426, %v3427
        %v3429 = vrot.slane %v3415, 7
        %v3430 = vrot.slane %v3417, 7
        %v3431 = vsel %vm1349, %v3429, %v3430
        %v3432 = vrot.slane %v3418, 7
        %v3433 = vsel %vm1349, %v3427, %v3432
        %v3434 = vrot.slane %v3419, 7
        %v3435 = vsel %vm1349, %v3430, %v3434
        %v3442 = vsel %vm1349, %v3432, 0.0
        %v3443 = vsel %vm1349, %v3434, 0.0
        %vm3444 = vcmp.ge.s32.totalorder %v1250, 16
        %vm3445 = vcmp.ge.s32.totalorder %v1251, 16
        %vm3446 = vcmp.ge.s32.totalorder %v1252, 16
        %vm3447 = vcmp.ge.s32.totalorder %v1253, 16
        %vm3448 = vcmp.ge.s32.totalorder %v1254, 16
        %vm3449 = vcmp.ge.s32.totalorder %v1255, 16
        %vm3450 = vcmp.ge.s32.totalorder %v1256, 16
        %vm3451 = vcmp.ge.s32.totalorder %v1257, 16
        %vm3452 = vcmp.ge.s32.totalorder %v1258, 16
        %vm3453 = vcmp.ge.s32.totalorder %v1259, 16
        %vm3454 = vcmp.ge.s32.totalorder %v1260, 16
        %vm3455 = vcmp.ge.s32.totalorder %v1261, 16
        %vm3456 = vcmp.ge.s32.totalorder %v1262, 16
        %vm3457 = vcmp.ge.s32.totalorder %v1263, 16
        %vm3458 = vcmp.ge.s32.totalorder %v1264, 16
        %vm3459 = vcmp.ge.s32.totalorder %v1265, 16
        %vm3460 = vcmp.ge.s32.totalorder %v1266, 16
        %vm3461 = vcmp.ge.s32.totalorder %v1267, 16
        %vm3462 = vcmp.ge.s32.totalorder %v1268, 16
        %vm3463 = vcmp.ge.s32.totalorder %v1269, 16
        %vm3464 = vcmp.ge.s32.totalorder %v1270, 16
        %vm3465 = vcmp.ge.s32.totalorder %v1271, 16
        %vm3466 = vcmp.ge.s32.totalorder %v1272, 16
        %vm3467 = vcmp.ge.s32.totalorder %v1273, 16
        %vm3468 = vcmp.ge.s32.totalorder %v1274, 16
        %vm3469 = vcmp.ge.s32.totalorder %v1275, 16
        %vm3470 = vcmp.ge.s32.totalorder %v1276, 16
        %vm3471 = vcmp.ge.s32.totalorder %v1277, 16
        %vm3472 = vcmp.ge.s32.totalorder %v1278, 16
        %vm3473 = vcmp.ge.s32.totalorder %v1279, 16
        %vm3474 = vcmp.ge.s32.totalorder %v1280, 16
        %vm3475 = vcmp.ge.s32.totalorder %v1281, 16
        %vm3476 = vcmp.eq.s32.totalorder %v1250, 0
        %vm3477 = vcmp.eq.s32.totalorder %v1251, 0
        %vm3478 = vcmp.eq.s32.totalorder %v1252, 0
        %v3479 = vsel %vm3476, 0.0, %v3428
        %v3480 = vsel %vm3476, 0.0, %v3431
        %v3481 = vsel %vm3477, 0.0, %v3433
        %v3482 = vsel %vm3477, 0.0, %v3435
        %v3483 = vsel %vm3478, 0.0, %v3442
        %v3484 = vsel %vm3478, 0.0, %v3443
        %v3485 = vsel %vm3444, 0.0, %v3479
        %v3486 = vsel %vm3444, 0.0, %v3480
        %v3487 = vsel %vm3445, 0.0, %v3481
        %v3488 = vsel %vm3445, 0.0, %v3482
        %v3489 = vsel %vm3446, %v3356, %v3483
        %v3490 = vsel %vm3446, %v3357, %v3484
        %v3491 = vsel %vm3447, %v3358, 0.0
        %v3492 = vsel %vm3447, %v3359, 0.0
        %v3493 = vsel %vm3448, %v3360, 0.0
        %v3494 = vsel %vm3448, %v3361, 0.0
        %v3495 = vsel %vm3449, %v3362, 0.0
        %v3496 = vsel %vm3449, %v3363, 0.0
        %v3497 = vsel %vm3450, %v3364, 0.0
        %v3498 = vsel %vm3450, %v3365, 0.0
        %v3499 = vsel %vm3451, %v3366, 0.0
        %v3500 = vsel %vm3451, %v3367, 0.0
        %v3501 = vsel %vm3452, %v3368, 0.0
        %v3502 = vsel %vm3452, %v3369, 0.0
        %v3503 = vsel %vm3453, %v3370, 0.0
        %v3504 = vsel %vm3453, %v3371, 0.0
        %v3505 = vsel %vm3454, %v3372, 0.0
        %v3506 = vsel %vm3454, %v3373, 0.0
        %v3507 = vsel %vm3455, %v3374, 0.0
        %v3508 = vsel %vm3455, %v3375, 0.0
        %v3509 = vsel %vm3456, %v3376, 0.0
        %v3510 = vsel %vm3456, %v3377, 0.0
        %v3511 = vsel %vm3457, %v3378, 0.0
        %v3512 = vsel %vm3457, %v3379, 0.0
        %v3513 = vsel %vm3458, %v3380, 0.0
        %v3514 = vsel %vm3458, %v3381, 0.0
        %v3515 = vsel %vm3459, %v3382, 0.0
        %v3516 = vsel %vm3459, %v3383, 0.0
        %v3517 = vsel %vm3460, %v3384, 0.0
        %v3518 = vsel %vm3460, %v3385, 0.0
        %v3519 = vsel %vm3461, %v3386, 0.0
        %v3520 = vsel %vm3461, %v3387, 0.0
        %v3521 = vsel %vm3462, %v3388, 0.0
        %v3522 = vsel %vm3462, %v3389, 0.0
        %v3523 = vsel %vm3463, %v3390, 0.0
        %v3524 = vsel %vm3463, %v3391, 0.0
        %v3525 = vsel %vm3464, %v3392, 0.0
        %v3526 = vsel %vm3464, %v3393, 0.0
        %v3527 = vsel %vm3465, %v3394, 0.0
        %v3528 = vsel %vm3465, %v3395, 0.0
        %v3529 = vsel %vm3466, %v3396, 0.0
        %v3530 = vsel %vm3466, %v3397, 0.0
        %v3531 = vsel %vm3467, %v3398, 0.0
        %v3532 = vsel %vm3467, %v3399, 0.0
        %v3533 = vsel %vm3468, %v3400, 0.0
        %v3534 = vsel %vm3468, %v3401, 0.0
        %v3535 = vsel %vm3469, %v3402, 0.0
        %v3536 = vsel %vm3469, %v3403, 0.0
        %v3537 = vsel %vm3470, %v3404, 0.0
        %v3538 = vsel %vm3470, %v3405, 0.0
        %v3539 = vsel %vm3471, %v3406, 0.0
        %v3540 = vsel %vm3471, %v3407, 0.0
        %v3541 = vsel %vm3472, %v3408, 0.0
        %v3542 = vsel %vm3472, %v3409, 0.0
        %v3543 = vsel %vm3473, %v3410, 0.0
        %v3544 = vsel %vm3473, %v3411, 0.0
        %v3545 = vsel %vm3474, %v3412, 0.0
        %v3546 = vsel %vm3474, %v3413, 0.0
        %v3547 = vsel %vm3475, %v3414, 0.0
        %v3548 = vsel %vm3475, %v3415, 0.0
        %v3549 = vadd.f32 %v2193, %v2871
        %v3550 = vadd.f32 %v2194, %v2872
        %v3551 = vadd.f32 %v2195, %v2873
        %v3552 = vadd.f32 %v2196, %v2874
        %v3553 = vadd.f32 %v2197, %v2875
        %v3554 = vadd.f32 %v2198, %v2876
        %v3555 = vadd.f32 %v2199, %v2877
        %v3556 = vadd.f32 %v2200, %v2878
        %v3557 = vadd.f32 %v2201, %v2879
        %v3558 = vadd.f32 %v2202, %v2880
        %v3559 = vadd.f32 %v2203, %v2881
        %v3560 = vadd.f32 %v2204, %v2882
        %v3561 = vadd.f32 %v2205, %v2883
        %v3562 = vadd.f32 %v2206, %v2884
        %v3563 = vadd.f32 %v2207, %v2885
        %v3564 = vadd.f32 %v2208, %v2886
        %v3565 = vadd.f32 %v2209, %v2887
        %v3566 = vadd.f32 %v2210, %v2888
        %v3567 = vadd.f32 %v2211, %v2889
        %v3568 = vadd.f32 %v2212, %v2890
        %v3569 = vadd.f32 %v2213, %v2891
        %v3570 = vadd.f32 %v2214, %v2892
        %v3571 = vadd.f32 %v2215, %v2893
        %v3572 = vadd.f32 %v2216, %v2894
        %v3573 = vadd.f32 %v2217, %v2895
        %v3574 = vadd.f32 %v2218, %v2896
        %v3575 = vadd.f32 %v2219, %v2897
        %v3576 = vadd.f32 %v2220, %v2898
        %v3577 = vadd.f32 %v2221, %v2899
        %v3578 = vadd.f32 %v2222, %v2900
        %v3579 = vadd.f32 %v2223, %v2901
        %v3580 = vadd.f32 %v2224, %v2902
        %v3581 = vadd.f32 %v2225, %v2903
        %v3582 = vadd.f32 %v2226, %v2904
        %v3583 = vadd.f32 %v2227, %v2905
        %v3584 = vadd.f32 %v2228, %v2906
        %v3585 = vadd.f32 %v2229, %v2907
        %v3586 = vadd.f32 %v2230, %v2908
        %v3587 = vadd.f32 %v2231, %v2909
        %v3588 = vadd.f32 %v2232, %v2910
        %v3589 = vadd.f32 %v2233, %v2911
        %v3590 = vadd.f32 %v2234, %v2912
        %v3591 = vadd.f32 %v2235, %v2913
        %v3592 = vadd.f32 %v2236, %v2914
        %v3593 = vadd.f32 %v2237, %v2915
        %v3594 = vadd.f32 %v2238, %v2916
        %v3595 = vadd.f32 %v2239, %v2917
        %v3596 = vadd.f32 %v2240, %v2918
        %v3597 = vadd.f32 %v2241, %v2919
        %v3598 = vadd.f32 %v2242, %v2920
        %v3599 = vadd.f32 %v2243, %v2921
        %v3600 = vadd.f32 %v2244, %v2922
        %v3601 = vadd.f32 %v2245, %v2923
        %v3602 = vadd.f32 %v2246, %v2924
        %v3603 = vadd.f32 %v2247, %v2925
        %v3604 = vadd.f32 %v2248, %v2926
        %v3605 = vadd.f32 %v2249, %v2927
        %v3606 = vadd.f32 %v2250, %v2928
        %v3607 = vadd.f32 %v2251, %v2929
        %v3608 = vadd.f32 %v2252, %v2930
        %v3609 = vadd.f32 %v2253, %v2931
        %v3610 = vadd.f32 %v2254, %v2932
        %v3611 = vadd.f32 %v2255, %v2933
        %v3612 = vadd.f32 %v2256, %v2934
        %v3613 = vadd.f32 %v3549, %v3485
        %v3614 = vadd.f32 %v3550, %v3486
        %v3615 = vadd.f32 %v3551, %v3487
        %v3616 = vadd.f32 %v3552, %v3488
        %v3617 = vadd.f32 %v3553, %v3489
        %v3618 = vadd.f32 %v3554, %v3490
        %v3619 = vadd.f32 %v3555, %v3491
        %v3620 = vadd.f32 %v3556, %v3492
        %v3621 = vadd.f32 %v3557, %v3493
        %v3622 = vadd.f32 %v3558, %v3494
        %v3623 = vadd.f32 %v3559, %v3495
        %v3624 = vadd.f32 %v3560, %v3496
        %v3625 = vadd.f32 %v3561, %v3497
        %v3626 = vadd.f32 %v3562, %v3498
        %v3627 = vadd.f32 %v3563, %v3499
        %v3628 = vadd.f32 %v3564, %v3500
        %v3629 = vadd.f32 %v3565, %v3501
        %v3630 = vadd.f32 %v3566, %v3502
        %v3631 = vadd.f32 %v3567, %v3503
        %v3632 = vadd.f32 %v3568, %v3504
        %v3633 = vadd.f32 %v3569, %v3505
        %v3634 = vadd.f32 %v3570, %v3506
        %v3635 = vadd.f32 %v3571, %v3507
        %v3636 = vadd.f32 %v3572, %v3508
        %v3637 = vadd.f32 %v3573, %v3509
        %v3638 = vadd.f32 %v3574, %v3510
        %v3639 = vadd.f32 %v3575, %v3511
        %v3640 = vadd.f32 %v3576, %v3512
        %v3641 = vadd.f32 %v3577, %v3513
        %v3642 = vadd.f32 %v3578, %v3514
        %v3643 = vadd.f32 %v3579, %v3515
        %v3644 = vadd.f32 %v3580, %v3516
        %v3645 = vadd.f32 %v3581, %v3517
        %v3646 = vadd.f32 %v3582, %v3518
        %v3647 = vadd.f32 %v3583, %v3519
        %v3648 = vadd.f32 %v3584, %v3520
        %v3649 = vadd.f32 %v3585, %v3521
        %v3650 = vadd.f32 %v3586, %v3522
        %v3651 = vadd.f32 %v3587, %v3523
        %v3652 = vadd.f32 %v3588, %v3524
        %v3653 = vadd.f32 %v3589, %v3525
        %v3654 = vadd.f32 %v3590, %v3526
        %v3655 = vadd.f32 %v3591, %v3527
        %v3656 = vadd.f32 %v3592, %v3528
        %v3657 = vadd.f32 %v3593, %v3529
        %v3658 = vadd.f32 %v3594, %v3530
        %v3659 = vadd.f32 %v3595, %v3531
        %v3660 = vadd.f32 %v3596, %v3532
        %v3661 = vadd.f32 %v3597, %v3533
        %v3662 = vadd.f32 %v3598, %v3534
        %v3663 = vadd.f32 %v3599, %v3535
        %v3664 = vadd.f32 %v3600, %v3536
        %v3665 = vadd.f32 %v3601, %v3537
        %v3666 = vadd.f32 %v3602, %v3538
        %v3667 = vadd.f32 %v3603, %v3539
        %v3668 = vadd.f32 %v3604, %v3540
        %v3669 = vadd.f32 %v3605, %v3541
        %v3670 = vadd.f32 %v3606, %v3542
        %v3671 = vadd.f32 %v3607, %v3543
        %v3672 = vadd.f32 %v3608, %v3544
        %v3673 = vadd.f32 %v3609, %v3545
        %v3674 = vadd.f32 %v3610, %v3546
        %v3675 = vadd.f32 %v3611, %v3547
        %v3676 = vadd.f32 %v3612, %v3548
        %v3677 = vmul.f32 %v317, 10.0
        %v3679 = vperm.slane %v3677, 0
        %v3680 = vperm.slane %v3677, 1
        %v3683 = vmul.f32 %v3613, %v3679
        %v3684 = vmul.f32 %v3614, %v3680
        %v3685 = vmul.f32 %v3615, %v3679
        %v3686 = vmul.f32 %v3616, %v3680
        %v3687 = vmul.f32 %v3617, %v3679
        %v3688 = vmul.f32 %v3618, %v3680
        %v3689 = vmul.f32 %v3619, %v3679
        %v3690 = vmul.f32 %v3620, %v3680
        %v3691 = vmul.f32 %v3621, %v3679
        %v3692 = vmul.f32 %v3622, %v3680
        %v3693 = vmul.f32 %v3623, %v3679
        %v3694 = vmul.f32 %v3624, %v3680
        %v3695 = vmul.f32 %v3625, %v3679
        %v3696 = vmul.f32 %v3626, %v3680
        %v3697 = vmul.f32 %v3627, %v3679
        %v3698 = vmul.f32 %v3628, %v3680
        %v3699 = vmul.f32 %v3629, %v3679
        %v3700 = vmul.f32 %v3630, %v3680
        %v3701 = vmul.f32 %v3631, %v3679
        %v3702 = vmul.f32 %v3632, %v3680
        %v3703 = vmul.f32 %v3633, %v3679
        %v3704 = vmul.f32 %v3634, %v3680
        %v3705 = vmul.f32 %v3635, %v3679
        %v3706 = vmul.f32 %v3636, %v3680
        %v3707 = vmul.f32 %v3637, %v3679
        %v3708 = vmul.f32 %v3638, %v3680
        %v3709 = vmul.f32 %v3639, %v3679
        %v3710 = vmul.f32 %v3640, %v3680
        %v3711 = vmul.f32 %v3641, %v3679
        %v3712 = vmul.f32 %v3642, %v3680
        %v3713 = vmul.f32 %v3643, %v3679
        %v3714 = vmul.f32 %v3644, %v3680
        %v3715 = vmul.f32 %v3645, %v3679
        %v3716 = vmul.f32 %v3646, %v3680
        %v3717 = vmul.f32 %v3647, %v3679
        %v3718 = vmul.f32 %v3648, %v3680
        %v3719 = vmul.f32 %v3649, %v3679
        %v3720 = vmul.f32 %v3650, %v3680
        %v3721 = vmul.f32 %v3651, %v3679
        %v3722 = vmul.f32 %v3652, %v3680
        %v3723 = vmul.f32 %v3653, %v3679
        %v3724 = vmul.f32 %v3654, %v3680
        %v3725 = vmul.f32 %v3655, %v3679
        %v3726 = vmul.f32 %v3656, %v3680
        %v3727 = vmul.f32 %v3657, %v3679
        %v3728 = vmul.f32 %v3658, %v3680
        %v3729 = vmul.f32 %v3659, %v3679
        %v3730 = vmul.f32 %v3660, %v3680
        %v3731 = vmul.f32 %v3661, %v3679
        %v3732 = vmul.f32 %v3662, %v3680
        %v3733 = vmul.f32 %v3663, %v3679
        %v3734 = vmul.f32 %v3664, %v3680
        %v3735 = vmul.f32 %v3665, %v3679
        %v3736 = vmul.f32 %v3666, %v3680
        %v3737 = vmul.f32 %v3667, %v3679
        %v3738 = vmul.f32 %v3668, %v3680
        %v3739 = vmul.f32 %v3669, %v3679
        %v3740 = vmul.f32 %v3670, %v3680
        %v3741 = vmul.f32 %v3671, %v3679
        %v3742 = vmul.f32 %v3672, %v3680
        %v3743 = vmul.f32 %v3673, %v3679
        %v3744 = vmul.f32 %v3674, %v3680
        %v3745 = vmul.f32 %v3675, %v3679
        %v3746 = vmul.f32 %v3676, %v3680
        %v3747 = vmax.f32 %v3683, %v3684
        %3748 = vmax.xlane.f32.xlu0 %v3747
        %v3749 = vpop.xlane.xlu0 %3748
        %v3750 = vmax.f32 %v3685, %v3686
        %3751 = vmax.xlane.f32.xlu0 %v3750
        %v3752 = vpop.xlane.xlu0 %3751
        %v3753 = vmax.f32 %v3687, %v3688
        %3754 = vmax.xlane.f32.xlu0 %v3753
        %v3755 = vpop.xlane.xlu0 %3754
        %v3756 = vmax.f32 %v3689, %v3690
        %3757 = vmax.xlane.f32.xlu0 %v3756
        %v3758 = vpop.xlane.xlu0 %3757
        %v3759 = vmax.f32 %v3691, %v3692
        %3760 = vmax.xlane.f32.xlu0 %v3759
        %v3761 = vpop.xlane.xlu0 %3760
        %v3762 = vmax.f32 %v3693, %v3694
        %3763 = vmax.xlane.f32.xlu0 %v3762
        %v3764 = vpop.xlane.xlu0 %3763
        %v3765 = vmax.f32 %v3695, %v3696
        %3766 = vmax.xlane.f32.xlu0 %v3765
        %v3767 = vpop.xlane.xlu0 %3766
        %v3768 = vmax.f32 %v3697, %v3698
        %3769 = vmax.xlane.f32.xlu0 %v3768
        %v3770 = vpop.xlane.xlu0 %3769
        %v3771 = vmax.f32 %v3699, %v3700
        %3772 = vmax.xlane.f32.xlu0 %v3771
        %v3773 = vpop.xlane.xlu0 %3772
        %v3774 = vmax.f32 %v3701, %v3702
        %3775 = vmax.xlane.f32.xlu0 %v3774
        %v3776 = vpop.xlane.xlu0 %3775
        %v3777 = vmax.f32 %v3703, %v3704
        %3778 = vmax.xlane.f32.xlu0 %v3777
        %v3779 = vpop.xlane.xlu0 %3778
        %v3780 = vmax.f32 %v3705, %v3706
        %3781 = vmax.xlane.f32.xlu0 %v3780
        %v3782 = vpop.xlane.xlu0 %3781
        %v3783 = vmax.f32 %v3707, %v3708
        %3784 = vmax.xlane.f32.xlu0 %v3783
        %v3785 = vpop.xlane.xlu0 %3784
        %v3786 = vmax.f32 %v3709, %v3710
        %3787 = vmax.xlane.f32.xlu0 %v3786
        %v3788 = vpop.xlane.xlu0 %3787
        %v3789 = vmax.f32 %v3711, %v3712
        %3790 = vmax.xlane.f32.xlu0 %v3789
        %v3791 = vpop.xlane.xlu0 %3790
        %v3792 = vmax.f32 %v3713, %v3714
        %3793 = vmax.xlane.f32.xlu0 %v3792
        %v3794 = vpop.xlane.xlu0 %3793
        %v3795 = vmax.f32 %v3715, %v3716
        %3796 = vmax.xlane.f32.xlu0 %v3795
        %v3797 = vpop.xlane.xlu0 %3796
        %v3798 = vmax.f32 %v3717, %v3718
        %3799 = vmax.xlane.f32.xlu0 %v3798
        %v3800 = vpop.xlane.xlu0 %3799
        %v3801 = vmax.f32 %v3719, %v3720
        %3802 = vmax.xlane.f32.xlu0 %v3801
        %v3803 = vpop.xlane.xlu0 %3802
        %v3804 = vmax.f32 %v3721, %v3722
        %3805 = vmax.xlane.f32.xlu0 %v3804
        %v3806 = vpop.xlane.xlu0 %3805
        %v3807 = vmax.f32 %v3723, %v3724
        %3808 = vmax.xlane.f32.xlu0 %v3807
        %v3809 = vpop.xlane.xlu0 %3808
        %v3810 = vmax.f32 %v3725, %v3726
        %3811 = vmax.xlane.f32.xlu0 %v3810
        %v3812 = vpop.xlane.xlu0 %3811
        %v3813 = vmax.f32 %v3727, %v3728
        %3814 = vmax.xlane.f32.xlu0 %v3813
        %v3815 = vpop.xlane.xlu0 %3814
        %v3816 = vmax.f32 %v3729, %v3730
        %3817 = vmax.xlane.f32.xlu0 %v3816
        %v3818 = vpop.xlane.xlu0 %3817
        %v3819 = vmax.f32 %v3731, %v3732
        %3820 = vmax.xlane.f32.xlu0 %v3819
        %v3821 = vpop.xlane.xlu0 %3820
        %v3822 = vmax.f32 %v3733, %v3734
        %3823 = vmax.xlane.f32.xlu0 %v3822
        %v3824 = vpop.xlane.xlu0 %3823
        %v3825 = vmax.f32 %v3735, %v3736
        %3826 = vmax.xlane.f32.xlu0 %v3825
        %v3827 = vpop.xlane.xlu0 %3826
        %v3828 = vmax.f32 %v3737, %v3738
        %3829 = vmax.xlane.f32.xlu0 %v3828
        %v3830 = vpop.xlane.xlu0 %3829
        %v3831 = vmax.f32 %v3739, %v3740
        %3832 = vmax.xlane.f32.xlu0 %v3831
        %v3833 = vpop.xlane.xlu0 %3832
        %v3834 = vmax.f32 %v3741, %v3742
        %3835 = vmax.xlane.f32.xlu0 %v3834
        %v3836 = vpop.xlane.xlu0 %3835
        %v3837 = vmax.f32 %v3743, %v3744
        %3838 = vmax.xlane.f32.xlu0 %v3837
        %v3839 = vpop.xlane.xlu0 %3838
        %v3840 = vmax.f32 %v3745, %v3746
        %3841 = vmax.xlane.f32.xlu0 %v3840
        %v3842 = vpop.xlane.xlu0 %3841
        %v3843 = vsub.f32 %v3683, %v3749
        %v3844 = vsub.f32 %v3684, %v3749
        %v3845 = vsub.f32 %v3685, %v3752
        %v3846 = vsub.f32 %v3686, %v3752
        %v3847 = vsub.f32 %v3687, %v3755
        %v3848 = vsub.f32 %v3688, %v3755
        %v3849 = vsub.f32 %v3689, %v3758
        %v3850 = vsub.f32 %v3690, %v3758
        %v3851 = vsub.f32 %v3691, %v3761
        %v3852 = vsub.f32 %v3692, %v3761
        %v3853 = vsub.f32 %v3693, %v3764
        %v3854 = vsub.f32 %v3694, %v3764
        %v3855 = vsub.f32 %v3695, %v3767
        %v3856 = vsub.f32 %v3696, %v3767
        %v3857 = vsub.f32 %v3697, %v3770
        %v3858 = vsub.f32 %v3698, %v3770
        %v3859 = vsub.f32 %v3699, %v3773
        %v3860 = vsub.f32 %v3700, %v3773
        %v3861 = vsub.f32 %v3701, %v3776
        %v3862 = vsub.f32 %v3702, %v3776
        %v3863 = vsub.f32 %v3703, %v3779
        %v3864 = vsub.f32 %v3704, %v3779
        %v3865 = vsub.f32 %v3705, %v3782
        %v3866 = vsub.f32 %v3706, %v3782
        %v3867 = vsub.f32 %v3707, %v3785
        %v3868 = vsub.f32 %v3708, %v3785
        %v3869 = vsub.f32 %v3709, %v3788
        %v3870 = vsub.f32 %v3710, %v3788
        %v3871 = vsub.f32 %v3711, %v3791
        %v3872 = vsub.f32 %v3712, %v3791
        %v3873 = vsub.f32 %v3713, %v3794
        %v3874 = vsub.f32 %v3714, %v3794
        %v3875 = vsub.f32 %v3715, %v3797
        %v3876 = vsub.f32 %v3716, %v3797
        %v3877 = vsub.f32 %v3717, %v3800
        %v3878 = vsub.f32 %v3718, %v3800
        %v3879 = vsub.f32 %v3719, %v3803
        %v3880 = vsub.f32 %v3720, %v3803
        %v3881 = vsub.f32 %v3721, %v3806
        %v3882 = vsub.f32 %v3722, %v3806
        %v3883 = vsub.f32 %v3723, %v3809
        %v3884 = vsub.f32 %v3724, %v3809
        %v3885 = vsub.f32 %v3725, %v3812
        %v3886 = vsub.f32 %v3726, %v3812
        %v3887 = vsub.f32 %v3727, %v3815
        %v3888 = vsub.f32 %v3728, %v3815
        %v3889 = vsub.f32 %v3729, %v3818
        %v3890 = vsub.f32 %v3730, %v3818
        %v3891 = vsub.f32 %v3731, %v3821
        %v3892 = vsub.f32 %v3732, %v3821
        %v3893 = vsub.f32 %v3733, %v3824
        %v3894 = vsub.f32 %v3734, %v3824
        %v3895 = vsub.f32 %v3735, %v3827
        %v3896 = vsub.f32 %v3736, %v3827
        %v3897 = vsub.f32 %v3737, %v3830
        %v3898 = vsub.f32 %v3738, %v3830
        %v3899 = vsub.f32 %v3739, %v3833
        %v3900 = vsub.f32 %v3740, %v3833
        %v3901 = vsub.f32 %v3741, %v3836
        %v3902 = vsub.f32 %v3742, %v3836
        %v3903 = vsub.f32 %v3743, %v3839
        %v3904 = vsub.f32 %v3744, %v3839
        %v3905 = vsub.f32 %v3745, %v3842
        %v3906 = vsub.f32 %v3746, %v3842
        %v3907 = vmul.f32 %v3843, 1.442695
        %v3908 = vpow.pop %v3907
        %v3909 = vmul.f32 %v3844, 1.442695
        %v3910 = vpow.pop %v3909
        %v3911 = vmul.f32 %v3845, 1.442695
        %v3912 = vpow.pop %v3911
        %v3913 = vmul.f32 %v3846, 1.442695
        %v3914 = vpow.pop %v3913
        %v3915 = vmul.f32 %v3847, 1.442695
        %v3916 = vpow.pop %v3915
        %v3917 = vmul.f32 %v3848, 1.442695
        %v3918 = vpow.pop %v3917
        %v3919 = vmul.f32 %v3849, 1.442695
        %v3920 = vpow.pop %v3919
        %v3921 = vmul.f32 %v3850, 1.442695
        %v3922 = vpow.pop %v3921
        %v3923 = vmul.f32 %v3851, 1.442695
        %v3924 = vpow.pop %v3923
        %v3925 = vmul.f32 %v3852, 1.442695
        %v3926 = vpow.pop %v3925
        %v3927 = vmul.f32 %v3853, 1.442695
        %v3928 = vpow.pop %v3927
        %v3929 = vmul.f32 %v3854, 1.442695
        %v3930 = vpow.pop %v3929
        %v3931 = vmul.f32 %v3855, 1.442695
        %v3932 = vpow.pop %v3931
        %v3933 = vmul.f32 %v3856, 1.442695
        %v3934 = vpow.pop %v3933
        %v3935 = vmul.f32 %v3857, 1.442695
        %v3936 = vpow.pop %v3935
        %v3937 = vmul.f32 %v3858, 1.442695
        %v3938 = vpow.pop %v3937
        %v3939 = vmul.f32 %v3859, 1.442695
        %v3940 = vpow.pop %v3939
        %v3941 = vmul.f32 %v3860, 1.442695
        %v3942 = vpow.pop %v3941
        %v3943 = vmul.f32 %v3861, 1.442695
        %v3944 = vpow.pop %v3943
        %v3945 = vmul.f32 %v3862, 1.442695
        %v3946 = vpow.pop %v3945
        %v3947 = vmul.f32 %v3863, 1.442695
        %v3948 = vpow.pop %v3947
        %v3949 = vmul.f32 %v3864, 1.442695
        %v3950 = vpow.pop %v3949
        %v3951 = vmul.f32 %v3865, 1.442695
        %v3952 = vpow.pop %v3951
        %v3953 = vmul.f32 %v3866, 1.442695
        %v3954 = vpow.pop %v3953
        %v3955 = vmul.f32 %v3867, 1.442695
        %v3956 = vpow.pop %v3955
        %v3957 = vmul.f32 %v3868, 1.442695
        %v3958 = vpow.pop %v3957
        %v3959 = vmul.f32 %v3869, 1.442695
        %v3960 = vpow.pop %v3959
        %v3961 = vmul.f32 %v3870, 1.442695
        %v3962 = vpow.pop %v3961
        %v3963 = vmul.f32 %v3871, 1.442695
        %v3964 = vpow.pop %v3963
        %v3965 = vmul.f32 %v3872, 1.442695
        %v3966 = vpow.pop %v3965
        %v3967 = vmul.f32 %v3873, 1.442695
        %v3968 = vpow.pop %v3967
        %v3969 = vmul.f32 %v3874, 1.442695
        %v3970 = vpow.pop %v3969
        %v3971 = vmul.f32 %v3875, 1.442695
        %v3972 = vpow.pop %v3971
        %v3973 = vmul.f32 %v3876, 1.442695
        %v3974 = vpow.pop %v3973
        %v3975 = vmul.f32 %v3877, 1.442695
        %v3976 = vpow.pop %v3975
        %v3977 = vmul.f32 %v3878, 1.442695
        %v3978 = vpow.pop %v3977
        %v3979 = vmul.f32 %v3879, 1.442695
        %v3980 = vpow.pop %v3979
        %v3981 = vmul.f32 %v3880, 1.442695
        %v3982 = vpow.pop %v3981
        %v3983 = vmul.f32 %v3881, 1.442695
        %v3984 = vpow.pop %v3983
        %v3985 = vmul.f32 %v3882, 1.442695
        %v3986 = vpow.pop %v3985
        %v3987 = vmul.f32 %v3883, 1.442695
        %v3988 = vpow.pop %v3987
        %v3989 = vmul.f32 %v3884, 1.442695
        %v3990 = vpow.pop %v3989
        %v3991 = vmul.f32 %v3885, 1.442695
        %v3992 = vpow.pop %v3991
        %v3993 = vmul.f32 %v3886, 1.442695
        %v3994 = vpow.pop %v3993
        %v3995 = vmul.f32 %v3887, 1.442695
        %v3996 = vpow.pop %v3995
        %v3997 = vmul.f32 %v3888, 1.442695
        %v3998 = vpow.pop %v3997
        %v3999 = vmul.f32 %v3889, 1.442695
        %v4000 = vpow.pop %v3999
        %v4001 = vmul.f32 %v3890, 1.442695
        %v4002 = vpow.pop %v4001
        %v4003 = vmul.f32 %v3891, 1.442695
        %v4004 = vpow.pop %v4003
        %v4005 = vmul.f32 %v3892, 1.442695
        %v4006 = vpow.pop %v4005
        %v4007 = vmul.f32 %v3893, 1.442695
        %v4008 = vpow.pop %v4007
        %v4009 = vmul.f32 %v3894, 1.442695
        %v4010 = vpow.pop %v4009
        %v4011 = vmul.f32 %v3895, 1.442695
        %v4012 = vpow.pop %v4011
        %v4013 = vmul.f32 %v3896, 1.442695
        %v4014 = vpow.pop %v4013
        %v4015 = vmul.f32 %v3897, 1.442695
        %v4016 = vpow.pop %v4015
        %v4017 = vmul.f32 %v3898, 1.442695
        %v4018 = vpow.pop %v4017
        %v4019 = vmul.f32 %v3899, 1.442695
        %v4020 = vpow.pop %v4019
        %v4021 = vmul.f32 %v3900, 1.442695
        %v4022 = vpow.pop %v4021
        %v4023 = vmul.f32 %v3901, 1.442695
        %v4024 = vpow.pop %v4023
        %v4025 = vmul.f32 %v3902, 1.442695
        %v4026 = vpow.pop %v4025
        %v4027 = vmul.f32 %v3903, 1.442695
        %v4028 = vpow.pop %v4027
        %v4029 = vmul.f32 %v3904, 1.442695
        %v4030 = vpow.pop %v4029
        %v4031 = vmul.f32 %v3905, 1.442695
        %v4032 = vpow.pop %v4031
        %v4033 = vmul.f32 %v3906, 1.442695
        %v4034 = vpow.pop %v4033
        %v4035 = vadd.f32 %v3908, %v3910
        %4036 = vadd.xlane.f32.xlu0 %v4035
        %v4037 = vpop.xlane.xlu0 %4036
        %v4038 = vadd.f32 %v3912, %v3914
        %4039 = vadd.xlane.f32.xlu0 %v4038
        %v4040 = vpop.xlane.xlu0 %4039
        %v4041 = vadd.f32 %v3916, %v3918
        %4042 = vadd.xlane.f32.xlu0 %v4041
        %v4043 = vpop.xlane.xlu0 %4042
        %v4044 = vadd.f32 %v3920, %v3922
        %4045 = vadd.xlane.f32.xlu0 %v4044
        %v4046 = vpop.xlane.xlu0 %4045
        %v4047 = vadd.f32 %v3924, %v3926
        %4048 = vadd.xlane.f32.xlu0 %v4047
        %v4049 = vpop.xlane.xlu0 %4048
        %v4050 = vadd.f32 %v3928, %v3930
        %4051 = vadd.xlane.f32.xlu0 %v4050
        %v4052 = vpop.xlane.xlu0 %4051
        %v4053 = vadd.f32 %v3932, %v3934
        %4054 = vadd.xlane.f32.xlu0 %v4053
        %v4055 = vpop.xlane.xlu0 %4054
        %v4056 = vadd.f32 %v3936, %v3938
        %4057 = vadd.xlane.f32.xlu0 %v4056
        %v4058 = vpop.xlane.xlu0 %4057
        %v4059 = vadd.f32 %v3940, %v3942
        %4060 = vadd.xlane.f32.xlu0 %v4059
        %v4061 = vpop.xlane.xlu0 %4060
        %v4062 = vadd.f32 %v3944, %v3946
        %4063 = vadd.xlane.f32.xlu0 %v4062
        %v4064 = vpop.xlane.xlu0 %4063
        %v4065 = vadd.f32 %v3948, %v3950
        %4066 = vadd.xlane.f32.xlu0 %v4065
        %v4067 = vpop.xlane.xlu0 %4066
        %v4068 = vadd.f32 %v3952, %v3954
        %4069 = vadd.xlane.f32.xlu0 %v4068
        %v4070 = vpop.xlane.xlu0 %4069
        %v4071 = vadd.f32 %v3956, %v3958
        %4072 = vadd.xlane.f32.xlu0 %v4071
        %v4073 = vpop.xlane.xlu0 %4072
        %v4074 = vadd.f32 %v3960, %v3962
        %4075 = vadd.xlane.f32.xlu0 %v4074
        %v4076 = vpop.xlane.xlu0 %4075
        %v4077 = vadd.f32 %v3964, %v3966
        %4078 = vadd.xlane.f32.xlu0 %v4077
        %v4079 = vpop.xlane.xlu0 %4078
        %v4080 = vadd.f32 %v3968, %v3970
        %4081 = vadd.xlane.f32.xlu0 %v4080
        %v4082 = vpop.xlane.xlu0 %4081
        %v4083 = vadd.f32 %v3972, %v3974
        %4084 = vadd.xlane.f32.xlu0 %v4083
        %v4085 = vpop.xlane.xlu0 %4084
        %v4086 = vadd.f32 %v3976, %v3978
        %4087 = vadd.xlane.f32.xlu0 %v4086
        %v4088 = vpop.xlane.xlu0 %4087
        %v4089 = vadd.f32 %v3980, %v3982
        %4090 = vadd.xlane.f32.xlu0 %v4089
        %v4091 = vpop.xlane.xlu0 %4090
        %v4092 = vadd.f32 %v3984, %v3986
        %4093 = vadd.xlane.f32.xlu0 %v4092
        %v4094 = vpop.xlane.xlu0 %4093
        %v4095 = vadd.f32 %v3988, %v3990
        %4096 = vadd.xlane.f32.xlu0 %v4095
        %v4097 = vpop.xlane.xlu0 %4096
        %v4098 = vadd.f32 %v3992, %v3994
        %4099 = vadd.xlane.f32.xlu0 %v4098
        %v4100 = vpop.xlane.xlu0 %4099
        %v4101 = vadd.f32 %v3996, %v3998
        %4102 = vadd.xlane.f32.xlu0 %v4101
        %v4103 = vpop.xlane.xlu0 %4102
        %v4104 = vadd.f32 %v4000, %v4002
        %4105 = vadd.xlane.f32.xlu0 %v4104
        %v4106 = vpop.xlane.xlu0 %4105
        %v4107 = vadd.f32 %v4004, %v4006
        %4108 = vadd.xlane.f32.xlu0 %v4107
        %v4109 = vpop.xlane.xlu0 %4108
        %v4110 = vadd.f32 %v4008, %v4010
        %4111 = vadd.xlane.f32.xlu0 %v4110
        %v4112 = vpop.xlane.xlu0 %4111
        %v4113 = vadd.f32 %v4012, %v4014
        %4114 = vadd.xlane.f32.xlu0 %v4113
        %v4115 = vpop.xlane.xlu0 %4114
        %v4116 = vadd.f32 %v4016, %v4018
        %4117 = vadd.xlane.f32.xlu0 %v4116
        %v4118 = vpop.xlane.xlu0 %4117
        %v4119 = vadd.f32 %v4020, %v4022
        %4120 = vadd.xlane.f32.xlu0 %v4119
        %v4121 = vpop.xlane.xlu0 %4120
        %v4122 = vadd.f32 %v4024, %v4026
        %4123 = vadd.xlane.f32.xlu0 %v4122
        %v4124 = vpop.xlane.xlu0 %4123
        %v4125 = vadd.f32 %v4028, %v4030
        %4126 = vadd.xlane.f32.xlu0 %v4125
        %v4127 = vpop.xlane.xlu0 %4126
        %v4128 = vadd.f32 %v4032, %v4034
        %4129 = vadd.xlane.f32.xlu0 %v4128
        %v4130 = vpop.xlane.xlu0 %4129
        %v4131 = vrcp.pop %v4037
        %v4132 = vrcp.pop %v4040
        %v4133 = vrcp.pop %v4043
        %v4134 = vrcp.pop %v4046
        %v4135 = vrcp.pop %v4049
        %v4136 = vrcp.pop %v4052
        %v4137 = vrcp.pop %v4055
        %v4138 = vrcp.pop %v4058
        %v4139 = vrcp.pop %v4061
        %v4140 = vrcp.pop %v4064
        %v4141 = vrcp.pop %v4067
        %v4142 = vrcp.pop %v4070
        %v4143 = vrcp.pop %v4073
        %v4144 = vrcp.pop %v4076
        %v4145 = vrcp.pop %v4079
        %v4146 = vrcp.pop %v4082
        %v4147 = vrcp.pop %v4085
        %v4148 = vrcp.pop %v4088
        %v4149 = vrcp.pop %v4091
        %v4150 = vrcp.pop %v4094
        %v4151 = vrcp.pop %v4097
        %v4152 = vrcp.pop %v4100
        %v4153 = vrcp.pop %v4103
        %v4154 = vrcp.pop %v4106
        %v4155 = vrcp.pop %v4109
        %v4156 = vrcp.pop %v4112
        %v4157 = vrcp.pop %v4115
        %v4158 = vrcp.pop %v4118
        %v4159 = vrcp.pop %v4121
        %v4160 = vrcp.pop %v4124
        %v4161 = vrcp.pop %v4127
        %v4162 = vrcp.pop %v4130
        %v4163 = vmul.f32 %v3908, %v4131
        %v4164 = vmul.f32 %v3910, %v4131
        %v4165 = vmul.f32 %v3912, %v4132
        %v4166 = vmul.f32 %v3914, %v4132
        %v4167 = vmul.f32 %v3916, %v4133
        %v4168 = vmul.f32 %v3918, %v4133
        %v4169 = vmul.f32 %v3920, %v4134
        %v4170 = vmul.f32 %v3922, %v4134
        %v4171 = vmul.f32 %v3924, %v4135
        %v4172 = vmul.f32 %v3926, %v4135
        %v4173 = vmul.f32 %v3928, %v4136
        %v4174 = vmul.f32 %v3930, %v4136
        %v4175 = vmul.f32 %v3932, %v4137
        %v4176 = vmul.f32 %v3934, %v4137
        %v4177 = vmul.f32 %v3936, %v4138
        %v4178 = vmul.f32 %v3938, %v4138
        %v4179 = vmul.f32 %v3940, %v4139
        %v4180 = vmul.f32 %v3942, %v4139
        %v4181 = vmul.f32 %v3944, %v4140
        %v4182 = vmul.f32 %v3946, %v4140
        %v4183 = vmul.f32 %v3948, %v4141
        %v4184 = vmul.f32 %v3950, %v4141
        %v4185 = vmul.f32 %v3952, %v4142
        %v4186 = vmul.f32 %v3954, %v4142
        %v4187 = vmul.f32 %v3956, %v4143
        %v4188 = vmul.f32 %v3958, %v4143
        %v4189 = vmul.f32 %v3960, %v4144
        %v4190 = vmul.f32 %v3962, %v4144
        %v4191 = vmul.f32 %v3964, %v4145
        %v4192 = vmul.f32 %v3966, %v4145
        %v4193 = vmul.f32 %v3968, %v4146
        %v4194 = vmul.f32 %v3970, %v4146
        %v4195 = vmul.f32 %v3972, %v4147
        %v4196 = vmul.f32 %v3974, %v4147
        %v4197 = vmul.f32 %v3976, %v4148
        %v4198 = vmul.f32 %v3978, %v4148
        %v4199 = vmul.f32 %v3980, %v4149
        %v4200 = vmul.f32 %v3982, %v4149
        %v4201 = vmul.f32 %v3984, %v4150
        %v4202 = vmul.f32 %v3986, %v4150
        %v4203 = vmul.f32 %v3988, %v4151
        %v4204 = vmul.f32 %v3990, %v4151
        %v4205 = vmul.f32 %v3992, %v4152
        %v4206 = vmul.f32 %v3994, %v4152
        %v4207 = vmul.f32 %v3996, %v4153
        %v4208 = vmul.f32 %v3998, %v4153
        %v4209 = vmul.f32 %v4000, %v4154
        %v4210 = vmul.f32 %v4002, %v4154
        %v4211 = vmul.f32 %v4004, %v4155
        %v4212 = vmul.f32 %v4006, %v4155
        %v4213 = vmul.f32 %v4008, %v4156
        %v4214 = vmul.f32 %v4010, %v4156
        %v4215 = vmul.f32 %v4012, %v4157
        %v4216 = vmul.f32 %v4014, %v4157
        %v4217 = vmul.f32 %v4016, %v4158
        %v4218 = vmul.f32 %v4018, %v4158
        %v4219 = vmul.f32 %v4020, %v4159
        %v4220 = vmul.f32 %v4022, %v4159
        %v4221 = vmul.f32 %v4024, %v4160
        %v4222 = vmul.f32 %v4026, %v4160
        %v4223 = vmul.f32 %v4028, %v4161
        %v4224 = vmul.f32 %v4030, %v4161
        %v4225 = vmul.f32 %v4032, %v4162
        %v4226 = vmul.f32 %v4034, %v4162
        %v4228 = vperm.slane %v317, 0
        %v4229 = vperm.slane %v317, 1
        %v4232 = vmul.f32 %v4163, %v4228
        %v4233 = vmul.f32 %v4164, %v4229
        %v4234 = vmul.f32 %v4165, %v4228
        %v4235 = vmul.f32 %v4166, %v4229
        %v4236 = vmul.f32 %v4167, %v4228
        %v4237 = vmul.f32 %v4168, %v4229
        %v4238 = vmul.f32 %v4169, %v4228
        %v4239 = vmul.f32 %v4170, %v4229
        %v4240 = vmul.f32 %v4171, %v4228
        %v4241 = vmul.f32 %v4172, %v4229
        %v4242 = vmul.f32 %v4173, %v4228
        %v4243 = vmul.f32 %v4174, %v4229
        %v4244 = vmul.f32 %v4175, %v4228
        %v4245 = vmul.f32 %v4176, %v4229
        %v4246 = vmul.f32 %v4177, %v4228
        %v4247 = vmul.f32 %v4178, %v4229
        %v4248 = vmul.f32 %v4179, %v4228
        %v4249 = vmul.f32 %v4180, %v4229
        %v4250 = vmul.f32 %v4181, %v4228
        %v4251 = vmul.f32 %v4182, %v4229
        %v4252 = vmul.f32 %v4183, %v4228
        %v4253 = vmul.f32 %v4184, %v4229
        %v4254 = vmul.f32 %v4185, %v4228
        %v4255 = vmul.f32 %v4186, %v4229
        %v4256 = vmul.f32 %v4187, %v4228
        %v4257 = vmul.f32 %v4188, %v4229
        %v4258 = vmul.f32 %v4189, %v4228
        %v4259 = vmul.f32 %v4190, %v4229
        %v4260 = vmul.f32 %v4191, %v4228
        %v4261 = vmul.f32 %v4192, %v4229
        %v4262 = vmul.f32 %v4193, %v4228
        %v4263 = vmul.f32 %v4194, %v4229
        %v4264 = vmul.f32 %v4195, %v4228
        %v4265 = vmul.f32 %v4196, %v4229
        %v4266 = vmul.f32 %v4197, %v4228
        %v4267 = vmul.f32 %v4198, %v4229
        %v4268 = vmul.f32 %v4199, %v4228
        %v4269 = vmul.f32 %v4200, %v4229
        %v4270 = vmul.f32 %v4201, %v4228
        %v4271 = vmul.f32 %v4202, %v4229
        %v4272 = vmul.f32 %v4203, %v4228
        %v4273 = vmul.f32 %v4204, %v4229
        %v4274 = vmul.f32 %v4205, %v4228
        %v4275 = vmul.f32 %v4206, %v4229
        %v4276 = vmul.f32 %v4207, %v4228
        %v4277 = vmul.f32 %v4208, %v4229
        %v4278 = vmul.f32 %v4209, %v4228
        %v4279 = vmul.f32 %v4210, %v4229
        %v4280 = vmul.f32 %v4211, %v4228
        %v4281 = vmul.f32 %v4212, %v4229
        %v4282 = vmul.f32 %v4213, %v4228
        %v4283 = vmul.f32 %v4214, %v4229
        %v4284 = vmul.f32 %v4215, %v4228
        %v4285 = vmul.f32 %v4216, %v4229
        %v4286 = vmul.f32 %v4217, %v4228
        %v4287 = vmul.f32 %v4218, %v4229
        %v4288 = vmul.f32 %v4219, %v4228
        %v4289 = vmul.f32 %v4220, %v4229
        %v4290 = vmul.f32 %v4221, %v4228
        %v4291 = vmul.f32 %v4222, %v4229
        %v4292 = vmul.f32 %v4223, %v4228
        %v4293 = vmul.f32 %v4224, %v4229
        %v4294 = vmul.f32 %v4225, %v4228
        %v4295 = vmul.f32 %v4226, %v4229
        %v4296 = vld [vmem:[%s248] sm:$0xff]
        %v4297 = vld [vmem:[%s248 + $0x8] sm:$0xff]
        %v4298 = vld [vmem:[%s248 + $0x10] sm:$0xff]
        %v4299 = vld [vmem:[%s248 + $0x18] sm:$0xff]
        %v4300 = vld [vmem:[%s248 + $0x20] sm:$0xff]
        %v4301 = vld [vmem:[%s248 + $0x28] sm:$0xff]
        %v4302 = vld [vmem:[%s248 + $0x30] sm:$0xff]
        %v4303 = vld [vmem:[%s248 + $0x38] sm:$0xff]
        %v4304 = vld [vmem:[%s248 + $0x40] sm:$0xff]
        %v4305 = vld [vmem:[%s248 + $0x48] sm:$0xff]
        %v4306 = vpack.c.bf16 %v4298, %v4296
        %v4307 = vpack.c.bf16 %v4299, %v4297
        %v4308 = vpack.c.bf16 %v4302, %v4300
        %v4309 = vpack.c.bf16 %v4303, %v4301
        %v4310 = vpack.c.bf16 %v4304, %v4304
        %v4311 = vpack.c.bf16 %v4305, %v4305
        %v4312 = vpack.c.bf16 %v4234, %v4232
        %v4313 = vpack.c.bf16 %v4235, %v4233
        %v4314 = vpack.c.bf16 %v4238, %v4236
        %v4315 = vpack.c.bf16 %v4239, %v4237
        %v4316 = vpack.c.bf16 %v4242, %v4240
        %v4317 = vpack.c.bf16 %v4243, %v4241
        %v4318 = vpack.c.bf16 %v4246, %v4244
        %v4319 = vpack.c.bf16 %v4247, %v4245
        %v4320 = vpack.c.bf16 %v4250, %v4248
        %v4321 = vpack.c.bf16 %v4251, %v4249
        %v4322 = vpack.c.bf16 %v4254, %v4252
        %v4323 = vpack.c.bf16 %v4255, %v4253
        %v4324 = vpack.c.bf16 %v4258, %v4256
        %v4325 = vpack.c.bf16 %v4259, %v4257
        %v4326 = vpack.c.bf16 %v4262, %v4260
        %v4327 = vpack.c.bf16 %v4263, %v4261
        %v4328 = vpack.c.bf16 %v4266, %v4264
        %v4329 = vpack.c.bf16 %v4267, %v4265
        %v4330 = vpack.c.bf16 %v4270, %v4268
        %v4331 = vpack.c.bf16 %v4271, %v4269
        %v4332 = vpack.c.bf16 %v4274, %v4272
        %v4333 = vpack.c.bf16 %v4275, %v4273
        %v4334 = vpack.c.bf16 %v4278, %v4276
        %v4335 = vpack.c.bf16 %v4279, %v4277
        %v4336 = vpack.c.bf16 %v4282, %v4280
        %v4337 = vpack.c.bf16 %v4283, %v4281
        %v4338 = vpack.c.bf16 %v4286, %v4284
        %v4339 = vpack.c.bf16 %v4287, %v4285
        %v4340 = vpack.c.bf16 %v4290, %v4288
        %v4341 = vpack.c.bf16 %v4291, %v4289
        %v4342 = vpack.c.bf16 %v4294, %v4292
        %v4343 = vpack.c.bf16 %v4295, %v4293
        %4344 = vmatpush.bf16.xpose.msra.mxu0 %v4326
        %4345 = vmatpush.bf16.xpose.msra.mxu0 %v4324
        %4346 = vmatpush.bf16.xpose.msra.mxu0 %v4322
        %4347 = vmatpush.bf16.xpose.msra.mxu0 %v4320
        %4348 = vmatpush.bf16.xpose.msra.mxu0 %v4318
        %4349 = vmatpush.bf16.xpose.msra.mxu0 %v4316
        %4350 = vmatpush.bf16.xpose.msra.mxu0 %v4314
        %4351 = vmatpush.bf16.xpose.msra.mxu0 %v4312
        %4352 = vmatmul.bf16.gmra.mxu0 %v4306
        %v4353 = vpop.f32.mrf.mxu0
        %v4354 = vadd.f32 0.0, %v4353
        %v4355 = vpop.f32.mrf.mxu0
        %v4356 = vadd.f32 0.0, %v4355
        %4357 = vmatmul.bf16.gmra.mxu0 %v4308
        %v4358 = vpop.f32.mrf.mxu0
        %v4359 = vadd.f32 0.0, %v4358
        %v4360 = vpop.f32.mrf.mxu0
        %v4361 = vadd.f32 0.0, %v4360
        %4362 = vmatmul.bf16.gmra.mxu0 %v4310
        %v4363 = vpop.f32.mrf.mxu0
        %v4364 = vadd.f32 0.0, %v4363
        %v4365 = vpop.f32.mrf.mxu0
        %4366 = vdwg.mxu0
        %4367 = vmatpush.bf16.xpose.msra.mxu0 %v4327
        %4368 = vmatpush.bf16.xpose.msra.mxu0 %v4325
        %4369 = vmatpush.bf16.xpose.msra.mxu0 %v4323
        %4370 = vmatpush.bf16.xpose.msra.mxu0 %v4321
        %4371 = vmatpush.bf16.xpose.msra.mxu0 %v4319
        %4372 = vmatpush.bf16.xpose.msra.mxu0 %v4317
        %4373 = vmatpush.bf16.xpose.msra.mxu0 %v4315
        %4374 = vmatpush.bf16.xpose.msra.mxu0 %v4313
        %4375 = vmatmul.bf16.gmra.mxu0 %v4307
        %v4376 = vpop.f32.mrf.mxu0
        %v4377 = vadd.f32 %v4354, %v4376
        %v4378 = vpop.f32.mrf.mxu0
        %v4379 = vadd.f32 %v4356, %v4378
        %4380 = vmatmul.bf16.gmra.mxu0 %v4309
        %v4381 = vpop.f32.mrf.mxu0
        %v4382 = vadd.f32 %v4359, %v4381
        %v4383 = vpop.f32.mrf.mxu0
        %v4384 = vadd.f32 %v4361, %v4383
        %4385 = vmatmul.bf16.gmra.mxu0 %v4311
        %v4386 = vpop.f32.mrf.mxu0
        %v4387 = vadd.f32 %v4364, %v4386
        %v4388 = vpop.f32.mrf.mxu0
        %4389 = vdwg.mxu0
        %4390 = vmatpush.bf16.xpose.msra.mxu0 %v4342
        %4391 = vmatpush.bf16.xpose.msra.mxu0 %v4340
        %4392 = vmatpush.bf16.xpose.msra.mxu0 %v4338
        %4393 = vmatpush.bf16.xpose.msra.mxu0 %v4336
        %4394 = vmatpush.bf16.xpose.msra.mxu0 %v4334
        %4395 = vmatpush.bf16.xpose.msra.mxu0 %v4332
        %4396 = vmatpush.bf16.xpose.msra.mxu0 %v4330
        %4397 = vmatpush.bf16.xpose.msra.mxu0 %v4328
        %4398 = vmatmul.bf16.gmra.mxu0 %v4306
        %v4399 = vpop.f32.mrf.mxu0
        %v4400 = vadd.f32 0.0, %v4399
        %v4401 = vpop.f32.mrf.mxu0
        %v4402 = vadd.f32 0.0, %v4401
        %4403 = vmatmul.bf16.gmra.mxu0 %v4308
        %v4404 = vpop.f32.mrf.mxu0
        %v4405 = vadd.f32 0.0, %v4404
        %v4406 = vpop.f32.mrf.mxu0
        %v4407 = vadd.f32 0.0, %v4406
        %4408 = vmatmul.bf16.gmra.mxu0 %v4310
        %v4409 = vpop.f32.mrf.mxu0
        %v4410 = vadd.f32 0.0, %v4409
        %v4411 = vpop.f32.mrf.mxu0
        %4412 = vdwg.mxu0
        %4413 = vmatpush.bf16.xpose.msra.mxu0 %v4343
        %4414 = vmatpush.bf16.xpose.msra.mxu0 %v4341
        %4415 = vmatpush.bf16.xpose.msra.mxu0 %v4339
        %4416 = vmatpush.bf16.xpose.msra.mxu0 %v4337
        %4417 = vmatpush.bf16.xpose.msra.mxu0 %v4335
        %4418 = vmatpush.bf16.xpose.msra.mxu0 %v4333
        %4419 = vmatpush.bf16.xpose.msra.mxu0 %v4331
        %4420 = vmatpush.bf16.xpose.msra.mxu0 %v4329
        %4421 = vmatmul.bf16.gmra.mxu0 %v4307
        %v4422 = vpop.f32.mrf.mxu0
        %v4423 = vadd.f32 %v4400, %v4422
        %v4424 = vpop.f32.mrf.mxu0
        %v4425 = vadd.f32 %v4402, %v4424
        %4426 = vmatmul.bf16.gmra.mxu0 %v4309
        %v4427 = vpop.f32.mrf.mxu0
        %v4428 = vadd.f32 %v4405, %v4427
        %v4429 = vpop.f32.mrf.mxu0
        %v4430 = vadd.f32 %v4407, %v4429
        %4431 = vmatmul.bf16.gmra.mxu0 %v4311
        %v4432 = vpop.f32.mrf.mxu0
        %v4433 = vadd.f32 %v4410, %v4432
        %v4434 = vpop.f32.mrf.mxu0
        %4435 = vdwg.mxu0
        %4436 = vst [vmem:[%s233] sm:$0xff] %v4377
        %4437 = vst [vmem:[%s233 + $0x8] sm:$0xff] %v4423
        %4438 = vst [vmem:[%s233 + $0x10] sm:$0xff] %v4379
        %4439 = vst [vmem:[%s233 + $0x18] sm:$0xff] %v4425
        %4440 = vst [vmem:[%s233 + $0x20] sm:$0xff] %v4382
        %4441 = vst [vmem:[%s233 + $0x28] sm:$0xff] %v4428
        %4442 = vst [vmem:[%s233 + $0x30] sm:$0xff] %v4384
        %4443 = vst [vmem:[%s233 + $0x38] sm:$0xff] %v4430
        %4444 = vst [vmem:[%s233 + $0x40] sm:$0xff] %v4387
        %4445 = vst [vmem:[%s233 + $0x48] sm:$0xff] %v4433
        %s4446 = sand.u32 %s130, 1
        %s4447 = scalar_lea.sflag [#allocation3], %s4446
        %s4448 = sand.u32 %s130, 1
        %s4449 = smul.addr %s4448, 80
        %s4450 = scalar_lea.vmem [#allocation2], %s4449
        // Predicated region
        $region37: #{tpu_custom_call.1} parent=35 // pred_check
          %p4451 = pneg %p140
        $region38: #{tpu_custom_call.1} parent=35 // pred_check_branch
          %4453 = sbr.rel (%p4451) target = $region40
        $region39: #{tpu_custom_call.1} parent=35 // pred_region
          %4455 = vsyncadd %s4447, 0
          %s4456 = smul.addr %s18, 10
          %s4457 = smul.addr %s4456, 8
          %s4458 = scalar_lea.hbm %s4, %s4457
          %s4459 = sshll.u32 %s4450, 4
          %s4460 = int_to_ptr.vmem [resolvable:$true] %s4459
          %s4461 = sshll.u32 %s4458, 4
          %s4462 = int_to_ptr.hbm [resolvable:$true] %s4461
          %4467 = dma.vmem_to_hbm [thread:$0]  %s4460, 1280, %s4462, %s4447, 256, 256, 16
        $region40: #{tpu_custom_call.1} parent=35 // pred_fallthru
          _
      $region36: #{tpu_custom_call.1} parent=5 // pred_fallthru
        _
      %p4468 = scmp.le.s32.totalorder 2, %s13
      // Predicated region
      $region41: #{tpu_custom_call.1} parent=5 // pred_check
        %p4469 = pneg %p4468
      $region42: #{tpu_custom_call.1} parent=5 // pred_check_branch
        %4471 = sbr.rel (%p4469) target = $region44
      $region43: #{tpu_custom_call.1} parent=5 // pred_region
        %s4472 = ssub.s32 %s13, 2
        // Predicated region
        $region45: #{tpu_custom_call.1} parent=43 // pred_check
          %p4473 = pneg %p146
        $region46: #{tpu_custom_call.1} parent=43 // pred_check_branch
          %4475 = sbr.rel (%p4473) target = $region48
        $region47: #{tpu_custom_call.1} parent=43 // pred_region
          %s4476 = sand.u32 %s131, 1
          %s4477 = scalar_lea.sflag [#allocation3], %s4476
          %s4478 = sand.u32 %s131, 1
          %s4479 = smul.addr %s4478, 80
          %s4480 = scalar_lea.vmem [#allocation2], %s4479
          %4482 = dma.done %s4477, 1280
        $region48: #{tpu_custom_call.1} parent=43 // pred_fallthru
          _
      $region44: #{tpu_custom_call.1} parent=5 // pred_fallthru
        _
    $region6: #{tpu_custom_call.1} parent=1 // loop_footer
      %s17 = sadd.s32 1, %s13
    $region7: #{tpu_custom_call.1} parent=1 // loop_footer_branch
      %12 = sbr.rel target = $region3
    $region8: #{tpu_custom_call.1} parent=1 // loop_exit
      _
    %4483 = vsyncpa [#allocation3], 1
    %s4484 = scalar_lea.sflag [#allocation3], 1
    %4485 = vsyncpa %s4484, 1

</llo_original>
